<compile_context>
chip_gen: v7x
topology: tpu7x:2x2x1
jax: 0.10.0
libtpu: 0.0.40
codegen_flags: <defaults>
</compile_context>

<pallas_src>
import functools

import jax
import jax.numpy as jnp
from jax import lax
from jax.experimental import pallas as pl
from jax.experimental.pallas import tpu as pltpu

NEG_SLOPE = 0.01  # nn.LeakyReLU default negative_slope


def _leaky(x, slope=NEG_SLOPE):
    return jnp.where(x >= 0, x, x * slope)


def _round_up(x, m):
    return ((x + m - 1) // m) * m


# ------------------------------ Pallas kernel ------------------------------
def _residual_block_kernel(xp_ref, w1_ref, b1_ref, w2_ref, b2_ref, o_ref,
                           h_ref, *, H, W, C_in, C_mid, C_out, slope):
    """Fused Residual_Block for one batch element.

    xp_ref : (Hp, Wpp, C_in)   bf16  spatially padded input (pad=1 for conv1;
                                     W additionally rounded up to a multiple
                                     of 8 with zeros, never read by conv2)
    w1_ref : (C_in, C_mid)     bf16  1x1 conv weights
    b1_ref : (1, C_mid)        f32
    w2_ref : (9, C_mid, C_out) bf16  3x3 conv weights, taps flattened
    b2_ref : (1, C_out)        f32
    o_ref  : (H*W, C_out)      f32   output block
    h_ref  : (Hp, Wpp, C_mid)  bf16  VMEM scratch for the intermediate act.
    """
    Hp, Wpp = xp_ref.shape[0], xp_ref.shape[1]

    # ---- conv1 (1x1). padding=1 is handled by the pre-padded input: padded
    # positions are zero, so their conv1 output is exactly leaky(bias1),
    # matching PyTorch.  bf16 operands, f32 accumulation on the MXU.
    a1 = xp_ref[...].reshape(Hp * Wpp, C_in)
    h = jnp.dot(a1, w1_ref[...], preferred_element_type=jnp.float32)
    h = h + b1_ref[...]
    h = jnp.where(h >= 0, h, h * slope)
    h_ref[...] = h.reshape(Hp, Wpp, C_mid).astype(h_ref.dtype)

    # ---- conv2 (3x3, valid): 9 shifted-window matmuls against w2[kh, kw].
    # Bias is folded into the accumulator init instead of the epilogue.
    acc = jnp.broadcast_to(b2_ref[...], (H * W, C_out))
    for kh in range(3):
        for kw in range(3):
            a2 = h_ref[kh:kh + H, kw:kw + W, :].reshape(H * W, C_mid)
            acc = acc + jnp.dot(a2, w2_ref[kh * 3 + kw],
                                preferred_element_type=jnp.float32)

    # ---- residual add (interior of the padded input) + LeakyReLU epilogue.
    res = xp_ref[1:H + 1, 1:W + 1, :].reshape(H * W, C_in).astype(jnp.float32)
    out = acc + res
    out = jnp.where(out >= 0, out, out * slope)
    o_ref[...] = out.astype(o_ref.dtype)


# ------------------------------ Host wrappers -------------------------------
def residual_block_nhwc(x, params):
    """x: (B, H, W, C_in) NHWC; returns (B, H, W, C_out) float32."""
    (w1, b1), (w2, b2) = params
    B, H, W, C_in = x.shape
    C_mid = w1.shape[-1]
    C_out = w2.shape[-1]
    assert C_out == C_in, "residual add requires out_dim == in_dim"
    assert W % 8 == 0, "W should be a multiple of 8 for clean TPU layouts"
    # TODO(synk): for feature maps too large for VMEM, tile H with a 2-row halo.

    Hp = H + 2
    Wpp = _round_up(W + 2, 8)  # conv pad (1,1) + align W to the sublane tile

    # Single pad of the layer input (this IS the conv's own padding).  bf16
    # operands halve activation HBM traffic and run the MXU at native rate.
    xp = jnp.pad(x.astype(jnp.bfloat16),
                 ((0, 0), (1, 1), (1, Wpp - W - 1), (0, 0)))

    w1b = w1.reshape(C_in, C_mid).astype(jnp.bfloat16)
    b1r = b1.reshape(1, C_mid).astype(jnp.float32)
    w2b = w2.reshape(9, C_mid, C_out).astype(jnp.bfloat16)
    b2r = b2.reshape(1, C_out).astype(jnp.float32)

    kernel = functools.partial(_residual_block_kernel, H=H, W=W, C_in=C_in,
                               C_mid=C_mid, C_out=C_out, slope=NEG_SLOPE)

    out = pl.pallas_call(
        kernel,
        out_shape=jax.ShapeDtypeStruct((B, H * W, C_out), jnp.float32),
        grid_spec=pltpu.PrefetchScalarGridSpec(
            num_scalar_prefetch=0,
            grid=(B,),
            in_specs=[
                pl.BlockSpec((None, Hp, Wpp, C_in), lambda b: (b, 0, 0, 0)),
                pl.BlockSpec((C_in, C_mid), lambda b: (0, 0)),
                pl.BlockSpec((1, C_mid), lambda b: (0, 0)),
                pl.BlockSpec((9, C_mid, C_out), lambda b: (0, 0, 0)),
                pl.BlockSpec((1, C_out), lambda b: (0, 0)),
            ],
            out_specs=pl.BlockSpec((None, H * W, C_out), lambda b: (b, 0, 0)),
            scratch_shapes=[pltpu.VMEM((Hp, Wpp, C_mid), jnp.bfloat16)],
        ),
        compiler_params=pltpu.CompilerParams(
            dimension_semantics=("parallel",),          # shard batch over TCs
            vmem_limit_bytes=48 * 1024 * 1024,          # safe under v7x 64 MiB
        ),
    )(xp, w1b, b1r, w2b, b2r)
    return out.reshape(B, H, W, C_out)


def residual_block_forward(x_nchw, params):
    """Public entry point: NCHW in / NCHW out (PyTorch layout)."""
    x = jnp.transpose(x_nchw, (0, 2, 3, 1))
    out = residual_block_nhwc(x, params)
    return jnp.transpose(out, (0, 3, 1, 2))


# ------------------------------ Reference (JAX) -----------------------------
def residual_block_ref(x_nchw, params):
    """Pure-JAX reference on the same bf16-cast operands, f32 math."""
    (w1, b1), (w2, b2) = params
    x = jnp.transpose(x_nchw, (0, 2, 3, 1)).astype(jnp.bfloat16).astype(jnp.float32)
    w1f = w1.astype(jnp.bfloat16).astype(jnp.float32)
    w2f = w2.astype(jnp.bfloat16).astype(jnp.float32)
    dn = ("NHWC", "HWIO", "NHWC")
    h = lax.conv_general_dilated(x, w1f, (1, 1), ((1, 1), (1, 1)),
                                 dimension_numbers=dn,
                                 precision=lax.Precision.HIGHEST) + b1
    h = _leaky(h)
    h = h.astype(jnp.bfloat16).astype(jnp.float32)  # kernel stages h in bf16
    out = lax.conv_general_dilated(h, w2f, (1, 1), ((0, 0), (0, 0)),
                                   dimension_numbers=dn,
                                   precision=lax.Precision.HIGHEST) + b2
    out = _leaky(out + x)
    return jnp.transpose(out, (0, 3, 1, 2))


# ------------------------------ Parameter init ------------------------------
def _init_conv(key, kh, kw, cin, cout):
    """HWIO layout; PyTorch Conv2d default init range U(-1/sqrt(fan_in), +)."""
    wk, bk = jax.random.split(key)
    bound = (kh * kw * cin) ** -0.5
    w = jax.random.uniform(wk, (kh, kw, cin, cout), jnp.float32, -bound, bound)
    b = jax.random.uniform(bk, (cout,), jnp.float32, -bound, bound)
    return w, b


def init_residual_block_params(key, in_dim, mid_dim, out_dim):
    k1, k2 = jax.random.split(key)
    return (_init_conv(k1, 1, 1, in_dim, mid_dim),
            _init_conv(k2, 3, 3, mid_dim, out_dim))


# ---------------------------------- Main ------------------------------------
if __name__ == "__main__":
    B, C_in, C_mid, H, W = 2, 64, 32, 16, 16   # darknet rb0-sized, kept small

    key = jax.random.PRNGKey(0)
    pkey, xkey = jax.random.split(key)
    params = init_residual_block_params(pkey, C_in, C_mid, C_in)
    x = jax.random.normal(xkey, (B, C_in, H, W), jnp.float32)  # NCHW input

    fwd = jax.jit(residual_block_forward)
    out = jax.block_until_ready(fwd(x, params))
    assert out.shape == (B, C_in, H, W), out.shape

    ref = jax.block_until_ready(jax.jit(residual_block_ref)(x, params))
    max_err = float(jnp.max(jnp.abs(out - ref)))
    if not bool(jnp.allclose(out, ref, rtol=1e-3, atol=1e-3)):
        raise AssertionError(f"kernel/reference mismatch, max abs err = {max_err}")

    print("KERNEL_OK")
</pallas_src>

<mosaic_0001>
module attributes {stable_mosaic.version = 11 : i64} {
  func.func @_residual_block_kernel(%arg0: i32, %arg1: memref<1x18x24x64xbf16, #tpu.memory_space<vmem>>, %arg2: memref<64x32xbf16, #tpu.memory_space<vmem>>, %arg3: memref<1x32xf32, #tpu.memory_space<vmem>>, %arg4: memref<9x32x64xbf16, #tpu.memory_space<vmem>>, %arg5: memref<1x64xf32, #tpu.memory_space<vmem>>, %arg6: memref<1x256x64xf32, #tpu.memory_space<vmem>>, %arg7: memref<18x24x32xbf16, #tpu.memory_space<vmem>>) attributes {dimension_semantics = [#tpu.dimension_semantics<parallel>], iteration_bounds = array<i64: 2>, scalar_prefetch = 0 : i64, scratch_operands = 1 : i64, tpu.core_type = #tpu.core_type<tc>, window_params = [{transform_indices = @transform_0, window_bounds = array<i64: 1, 18, 24, 64>}, {pipeline_mode = #tpu.pipeline_mode<synchronous>, transform_indices = @transform_1, window_bounds = array<i64: 64, 32>}, {pipeline_mode = #tpu.pipeline_mode<synchronous>, transform_indices = @transform_2, window_bounds = array<i64: 1, 32>}, {pipeline_mode = #tpu.pipeline_mode<synchronous>, transform_indices = @transform_3, window_bounds = array<i64: 9, 32, 64>}, {pipeline_mode = #tpu.pipeline_mode<synchronous>, transform_indices = @transform_4, window_bounds = array<i64: 1, 64>}, {transform_indices = @transform_5, window_bounds = array<i64: 1, 256, 64>}]} {
    %c0 = arith.constant 0 : index
    %c0_0 = arith.constant 0 : index
    %c0_1 = arith.constant 0 : index
    %c0_2 = arith.constant 0 : index
    %0 = vector.load %arg1[%c0, %c0_0, %c0_1, %c0_2] : memref<1x18x24x64xbf16, #tpu.memory_space<vmem>>, vector<1x18x24x64xbf16>
    %1 = vector.shape_cast %0 : vector<1x18x24x64xbf16> to vector<18x24x64xbf16>
    %2 = vector.shape_cast %1 : vector<18x24x64xbf16> to vector<432x64xbf16>
    %c0_3 = arith.constant 0 : index
    %c0_4 = arith.constant 0 : index
    %3 = vector.load %arg2[%c0_3, %c0_4] : memref<64x32xbf16, #tpu.memory_space<vmem>>, vector<64x32xbf16>
    %cst = arith.constant dense<0.000000e+00> : vector<432x32xf32>
    %4 = tpu.matmul %2, %3, %cst {dimension_numbers = #tpu.dot_dimension_numbers<[1], [0], [0], [1], [0, 0, 1, 1], [], []>} : vector<432x64xbf16>, vector<64x32xbf16>, vector<432x32xf32> -> vector<432x32xf32>
    %c0_5 = arith.constant 0 : index
    %c0_6 = arith.constant 0 : index
    %5 = vector.load %arg3[%c0_5, %c0_6] : memref<1x32xf32, #tpu.memory_space<vmem>>, vector<1x32xf32>
    %6 = vector.broadcast %5 : vector<1x32xf32> to vector<432x32xf32>
    %7 = arith.addf %4, %6 : vector<432x32xf32>
    %cst_7 = arith.constant 0.000000e+00 : f32
    %8 = vector.broadcast %cst_7 : f32 to vector<432x32xf32>
    %9 = arith.cmpf oge, %7, %8 : vector<432x32xf32>
    %cst_8 = arith.constant 0.00999999977 : f32
    %10 = vector.broadcast %cst_8 : f32 to vector<432x32xf32>
    %11 = arith.mulf %7, %10 : vector<432x32xf32>
    %12 = arith.select %9, %7, %11 : vector<432x32xi1>, vector<432x32xf32>
    %13 = vector.shape_cast %12 : vector<432x32xf32> to vector<18x24x32xf32>
    %14 = arith.truncf %13 : vector<18x24x32xf32> to vector<18x24x32xbf16>
    %c0_9 = arith.constant 0 : index
    %c0_10 = arith.constant 0 : index
    %c0_11 = arith.constant 0 : index
    %15 = vector.load %arg7[%c0_9, %c0_10, %c0_11] : memref<18x24x32xbf16, #tpu.memory_space<vmem>>, vector<18x24x32xbf16>
    tpu.vector_store %arg7[%c0_9, %c0_10, %c0_11], %14 {strides = array<i32>} : memref<18x24x32xbf16, #tpu.memory_space<vmem>>, vector<18x24x32xbf16>,
    %c0_12 = arith.constant 0 : index
    %c0_13 = arith.constant 0 : index
    %16 = vector.load %arg5[%c0_12, %c0_13] : memref<1x64xf32, #tpu.memory_space<vmem>>, vector<1x64xf32>
    %17 = vector.shape_cast %16 : vector<1x64xf32> to vector<1x64xf32>
    %18 = vector.broadcast %17 : vector<1x64xf32> to vector<256x64xf32>
    %c0_14 = arith.constant 0 : index
    %c0_15 = arith.constant 0 : index
    %c0_16 = arith.constant 0 : index
    %19 = vector.load %arg7[%c0_14, %c0_15, %c0_16] : memref<18x24x32xbf16, #tpu.memory_space<vmem>>, vector<16x16x32xbf16>
    %20 = vector.shape_cast %19 : vector<16x16x32xbf16> to vector<256x32xbf16>
    %c0_17 = arith.constant 0 : index
    %c0_18 = arith.constant 0 : index
    %c0_19 = arith.constant 0 : index
    %21 = vector.load %arg4[%c0_17, %c0_18, %c0_19] : memref<9x32x64xbf16, #tpu.memory_space<vmem>>, vector<1x32x64xbf16>
    %22 = vector.shape_cast %21 : vector<1x32x64xbf16> to vector<32x64xbf16>
    %cst_20 = arith.constant dense<0.000000e+00> : vector<256x64xf32>
    %23 = tpu.matmul %20, %22, %cst_20 {dimension_numbers = #tpu.dot_dimension_numbers<[1], [0], [0], [1], [0, 0, 1, 1], [], []>} : vector<256x32xbf16>, vector<32x64xbf16>, vector<256x64xf32> -> vector<256x64xf32>
    %24 = arith.addf %18, %23 : vector<256x64xf32>
    %c0_21 = arith.constant 0 : index
    %c1 = arith.constant 1 : index
    %c0_22 = arith.constant 0 : index
    %25 = vector.load %arg7[%c0_21, %c1, %c0_22] : memref<18x24x32xbf16, #tpu.memory_space<vmem>>, vector<16x16x32xbf16>
    %26 = vector.shape_cast %25 : vector<16x16x32xbf16> to vector<256x32xbf16>
    %c1_23 = arith.constant 1 : index
    %c0_24 = arith.constant 0 : index
    %c0_25 = arith.constant 0 : index
    %27 = vector.load %arg4[%c1_23, %c0_24, %c0_25] : memref<9x32x64xbf16, #tpu.memory_space<vmem>>, vector<1x32x64xbf16>
    %28 = vector.shape_cast %27 : vector<1x32x64xbf16> to vector<32x64xbf16>
    %cst_26 = arith.constant dense<0.000000e+00> : vector<256x64xf32>
    %29 = tpu.matmul %26, %28, %cst_26 {dimension_numbers = #tpu.dot_dimension_numbers<[1], [0], [0], [1], [0, 0, 1, 1], [], []>} : vector<256x32xbf16>, vector<32x64xbf16>, vector<256x64xf32> -> vector<256x64xf32>
    %30 = arith.addf %24, %29 : vector<256x64xf32>
    %c0_27 = arith.constant 0 : index
    %c2 = arith.constant 2 : index
    %c0_28 = arith.constant 0 : index
    %31 = vector.load %arg7[%c0_27, %c2, %c0_28] : memref<18x24x32xbf16, #tpu.memory_space<vmem>>, vector<16x16x32xbf16>
    %32 = vector.shape_cast %31 : vector<16x16x32xbf16> to vector<256x32xbf16>
    %c2_29 = arith.constant 2 : index
    %c0_30 = arith.constant 0 : index
    %c0_31 = arith.constant 0 : index
    %33 = vector.load %arg4[%c2_29, %c0_30, %c0_31] : memref<9x32x64xbf16, #tpu.memory_space<vmem>>, vector<1x32x64xbf16>
    %34 = vector.shape_cast %33 : vector<1x32x64xbf16> to vector<32x64xbf16>
    %cst_32 = arith.constant dense<0.000000e+00> : vector<256x64xf32>
    %35 = tpu.matmul %32, %34, %cst_32 {dimension_numbers = #tpu.dot_dimension_numbers<[1], [0], [0], [1], [0, 0, 1, 1], [], []>} : vector<256x32xbf16>, vector<32x64xbf16>, vector<256x64xf32> -> vector<256x64xf32>
    %36 = arith.addf %30, %35 : vector<256x64xf32>
    %c1_33 = arith.constant 1 : index
    %c0_34 = arith.constant 0 : index
    %c0_35 = arith.constant 0 : index
    %37 = vector.load %arg7[%c1_33, %c0_34, %c0_35] : memref<18x24x32xbf16, #tpu.memory_space<vmem>>, vector<16x16x32xbf16>
    %38 = vector.shape_cast %37 : vector<16x16x32xbf16> to vector<256x32xbf16>
    %c3 = arith.constant 3 : index
    %c0_36 = arith.constant 0 : index
    %c0_37 = arith.constant 0 : index
    %39 = vector.load %arg4[%c3, %c0_36, %c0_37] : memref<9x32x64xbf16, #tpu.memory_space<vmem>>, vector<1x32x64xbf16>
    %40 = vector.shape_cast %39 : vector<1x32x64xbf16> to vector<32x64xbf16>
    %cst_38 = arith.constant dense<0.000000e+00> : vector<256x64xf32>
    %41 = tpu.matmul %38, %40, %cst_38 {dimension_numbers = #tpu.dot_dimension_numbers<[1], [0], [0], [1], [0, 0, 1, 1], [], []>} : vector<256x32xbf16>, vector<32x64xbf16>, vector<256x64xf32> -> vector<256x64xf32>
    %42 = arith.addf %36, %41 : vector<256x64xf32>
    %c1_39 = arith.constant 1 : index
    %c1_40 = arith.constant 1 : index
    %c0_41 = arith.constant 0 : index
    %43 = vector.load %arg7[%c1_39, %c1_40, %c0_41] : memref<18x24x32xbf16, #tpu.memory_space<vmem>>, vector<16x16x32xbf16>
    %44 = vector.shape_cast %43 : vector<16x16x32xbf16> to vector<256x32xbf16>
    %c4 = arith.constant 4 : index
    %c0_42 = arith.constant 0 : index
    %c0_43 = arith.constant 0 : index
    %45 = vector.load %arg4[%c4, %c0_42, %c0_43] : memref<9x32x64xbf16, #tpu.memory_space<vmem>>, vector<1x32x64xbf16>
    %46 = vector.shape_cast %45 : vector<1x32x64xbf16> to vector<32x64xbf16>
    %cst_44 = arith.constant dense<0.000000e+00> : vector<256x64xf32>
    %47 = tpu.matmul %44, %46, %cst_44 {dimension_numbers = #tpu.dot_dimension_numbers<[1], [0], [0], [1], [0, 0, 1, 1], [], []>} : vector<256x32xbf16>, vector<32x64xbf16>, vector<256x64xf32> -> vector<256x64xf32>
    %48 = arith.addf %42, %47 : vector<256x64xf32>
    %c1_45 = arith.constant 1 : index
    %c2_46 = arith.constant 2 : index
    %c0_47 = arith.constant 0 : index
    %49 = vector.load %arg7[%c1_45, %c2_46, %c0_47] : memref<18x24x32xbf16, #tpu.memory_space<vmem>>, vector<16x16x32xbf16>
    %50 = vector.shape_cast %49 : vector<16x16x32xbf16> to vector<256x32xbf16>
    %c5 = arith.constant 5 : index
    %c0_48 = arith.constant 0 : index
    %c0_49 = arith.constant 0 : index
    %51 = vector.load %arg4[%c5, %c0_48, %c0_49] : memref<9x32x64xbf16, #tpu.memory_space<vmem>>, vector<1x32x64xbf16>
    %52 = vector.shape_cast %51 : vector<1x32x64xbf16> to vector<32x64xbf16>
    %cst_50 = arith.constant dense<0.000000e+00> : vector<256x64xf32>
    %53 = tpu.matmul %50, %52, %cst_50 {dimension_numbers = #tpu.dot_dimension_numbers<[1], [0], [0], [1], [0, 0, 1, 1], [], []>} : vector<256x32xbf16>, vector<32x64xbf16>, vector<256x64xf32> -> vector<256x64xf32>
    %54 = arith.addf %48, %53 : vector<256x64xf32>
    %c2_51 = arith.constant 2 : index
    %c0_52 = arith.constant 0 : index
    %c0_53 = arith.constant 0 : index
    %55 = vector.load %arg7[%c2_51, %c0_52, %c0_53] : memref<18x24x32xbf16, #tpu.memory_space<vmem>>, vector<16x16x32xbf16>
    %56 = vector.shape_cast %55 : vector<16x16x32xbf16> to vector<256x32xbf16>
    %c6 = arith.constant 6 : index
    %c0_54 = arith.constant 0 : index
    %c0_55 = arith.constant 0 : index
    %57 = vector.load %arg4[%c6, %c0_54, %c0_55] : memref<9x32x64xbf16, #tpu.memory_space<vmem>>, vector<1x32x64xbf16>
    %58 = vector.shape_cast %57 : vector<1x32x64xbf16> to vector<32x64xbf16>
    %cst_56 = arith.constant dense<0.000000e+00> : vector<256x64xf32>
    %59 = tpu.matmul %56, %58, %cst_56 {dimension_numbers = #tpu.dot_dimension_numbers<[1], [0], [0], [1], [0, 0, 1, 1], [], []>} : vector<256x32xbf16>, vector<32x64xbf16>, vector<256x64xf32> -> vector<256x64xf32>
    %60 = arith.addf %54, %59 : vector<256x64xf32>
    %c2_57 = arith.constant 2 : index
    %c1_58 = arith.constant 1 : index
    %c0_59 = arith.constant 0 : index
    %61 = vector.load %arg7[%c2_57, %c1_58, %c0_59] : memref<18x24x32xbf16, #tpu.memory_space<vmem>>, vector<16x16x32xbf16>
    %62 = vector.shape_cast %61 : vector<16x16x32xbf16> to vector<256x32xbf16>
    %c7 = arith.constant 7 : index
    %c0_60 = arith.constant 0 : index
    %c0_61 = arith.constant 0 : index
    %63 = vector.load %arg4[%c7, %c0_60, %c0_61] : memref<9x32x64xbf16, #tpu.memory_space<vmem>>, vector<1x32x64xbf16>
    %64 = vector.shape_cast %63 : vector<1x32x64xbf16> to vector<32x64xbf16>
    %cst_62 = arith.constant dense<0.000000e+00> : vector<256x64xf32>
    %65 = tpu.matmul %62, %64, %cst_62 {dimension_numbers = #tpu.dot_dimension_numbers<[1], [0], [0], [1], [0, 0, 1, 1], [], []>} : vector<256x32xbf16>, vector<32x64xbf16>, vector<256x64xf32> -> vector<256x64xf32>
    %66 = arith.addf %60, %65 : vector<256x64xf32>
    %c2_63 = arith.constant 2 : index
    %c2_64 = arith.constant 2 : index
    %c0_65 = arith.constant 0 : index
    %67 = vector.load %arg7[%c2_63, %c2_64, %c0_65] : memref<18x24x32xbf16, #tpu.memory_space<vmem>>, vector<16x16x32xbf16>
    %68 = vector.shape_cast %67 : vector<16x16x32xbf16> to vector<256x32xbf16>
    %c8 = arith.constant 8 : index
    %c0_66 = arith.constant 0 : index
    %c0_67 = arith.constant 0 : index
    %69 = vector.load %arg4[%c8, %c0_66, %c0_67] : memref<9x32x64xbf16, #tpu.memory_space<vmem>>, vector<1x32x64xbf16>
    %70 = vector.shape_cast %69 : vector<1x32x64xbf16> to vector<32x64xbf16>
    %cst_68 = arith.constant dense<0.000000e+00> : vector<256x64xf32>
    %71 = tpu.matmul %68, %70, %cst_68 {dimension_numbers = #tpu.dot_dimension_numbers<[1], [0], [0], [1], [0, 0, 1, 1], [], []>} : vector<256x32xbf16>, vector<32x64xbf16>, vector<256x64xf32> -> vector<256x64xf32>
    %72 = arith.addf %66, %71 : vector<256x64xf32>
    %c0_69 = arith.constant 0 : index
    %c1_70 = arith.constant 1 : index
    %c1_71 = arith.constant 1 : index
    %c0_72 = arith.constant 0 : index
    %73 = vector.load %arg1[%c0_69, %c1_70, %c1_71, %c0_72] : memref<1x18x24x64xbf16, #tpu.memory_space<vmem>>, vector<1x16x16x64xbf16>
    %74 = vector.shape_cast %73 : vector<1x16x16x64xbf16> to vector<16x16x64xbf16>
    %75 = vector.shape_cast %74 : vector<16x16x64xbf16> to vector<256x64xbf16>
    %76 = arith.extf %75 : vector<256x64xbf16> to vector<256x64xf32>
    %77 = arith.addf %72, %76 : vector<256x64xf32>
    %cst_73 = arith.constant 0.000000e+00 : f32
    %78 = vector.broadcast %cst_73 : f32 to vector<256x64xf32>
    %79 = arith.cmpf oge, %77, %78 : vector<256x64xf32>
    %cst_74 = arith.constant 0.00999999977 : f32
    %80 = vector.broadcast %cst_74 : f32 to vector<256x64xf32>
    %81 = arith.mulf %77, %80 : vector<256x64xf32>
    %82 = arith.select %79, %77, %81 : vector<256x64xi1>, vector<256x64xf32>
    %c0_75 = arith.constant 0 : index
    %c0_76 = arith.constant 0 : index
    %c0_77 = arith.constant 0 : index
    %83 = vector.load %arg6[%c0_75, %c0_76, %c0_77] : memref<1x256x64xf32, #tpu.memory_space<vmem>>, vector<1x256x64xf32>
    %84 = vector.shape_cast %83 : vector<1x256x64xf32> to vector<256x64xf32>
    %85 = vector.shape_cast %82 : vector<256x64xf32> to vector<1x256x64xf32>
    tpu.vector_store %arg6[%c0_75, %c0_76, %c0_77], %85 {strides = array<i32>} : memref<1x256x64xf32, #tpu.memory_space<vmem>>, vector<1x256x64xf32>,
    return
  }
  func.func @transform_0(%arg0: i32) -> (i32, i32, i32, i32) {
    %c0_i32 = arith.constant 0 : i32
    %c0_i32_0 = arith.constant 0 : i32
    %c0_i32_1 = arith.constant 0 : i32
    %c0_i32_2 = arith.constant 0 : i32
    return %arg0, %c0_i32, %c0_i32_0, %c0_i32_1 : i32, i32, i32, i32
  }
  func.func @transform_1(%arg0: i32) -> (i32, i32) {
    %c0_i32 = arith.constant 0 : i32
    %c0_i32_0 = arith.constant 0 : i32
    %c0_i32_1 = arith.constant 0 : i32
    return %c0_i32, %c0_i32_0 : i32, i32
  }
  func.func @transform_2(%arg0: i32) -> (i32, i32) {
    %c0_i32 = arith.constant 0 : i32
    %c0_i32_0 = arith.constant 0 : i32
    %c0_i32_1 = arith.constant 0 : i32
    return %c0_i32, %c0_i32_0 : i32, i32
  }
  func.func @transform_3(%arg0: i32) -> (i32, i32, i32) {
    %c0_i32 = arith.constant 0 : i32
    %c0_i32_0 = arith.constant 0 : i32
    %c0_i32_1 = arith.constant 0 : i32
    %c0_i32_2 = arith.constant 0 : i32
    return %c0_i32, %c0_i32_0, %c0_i32_1 : i32, i32, i32
  }
  func.func @transform_4(%arg0: i32) -> (i32, i32) {
    %c0_i32 = arith.constant 0 : i32
    %c0_i32_0 = arith.constant 0 : i32
    %c0_i32_1 = arith.constant 0 : i32
    return %c0_i32, %c0_i32_0 : i32, i32
  }
  func.func @transform_5(%arg0: i32) -> (i32, i32, i32) {
    %c0_i32 = arith.constant 0 : i32
    %c0_i32_0 = arith.constant 0 : i32
    %c0_i32_1 = arith.constant 0 : i32
    return %arg0, %c0_i32, %c0_i32_0 : i32, i32, i32
  }
}

</mosaic_0001>

<llo_original>
// kernel: residual_block_forward.1
$region0: #{residual_block_forward.1}
  #allocation0 [shape = 'u32[]', space=smem, size = 0x4, offset = 0x4, fixed_abs, tag = 'smem constant byte address 0x4 - core index']
  #allocation1 [shape = 'u32[144,128]{1,0:T(1,128)}', space=vmem, size = 0x12000, scoped, tag = 'internal scratch']
  #allocation2 [shape = 'bf16[18,24,32]{2,1,0:T(8,128)(2,1)}', space=vmem, size = 0x1b000, scoped, tag = 'scratch operand']
  %s0 = inlined_call_operand.vmem [shape: bf16[2,18,24,64], index: 0, kind: input, shape index: {}]
  %s1 = inlined_call_operand.vmem [shape: bf16[64,32], index: 1, kind: input, shape index: {}]
  %s2 = inlined_call_operand.vmem [shape: f32[1,32], index: 2, kind: input, shape index: {}]
  %s3 = inlined_call_operand.vmem [shape: bf16[9,32,64], index: 3, kind: input, shape index: {}]
  %s4 = inlined_call_operand.vmem [shape: f32[1,64], index: 4, kind: input, shape index: {}]
  %s5 = inlined_call_operand.hbm [shape: f32[2,256,64], index: 5, kind: output, shape index: {}]
  %s6 = sld [smem:[#allocation0]]
  $region53: #{residual_block_forward.1} parent=0
    _
  %s8 = ssub.s32 1, %s6
  %s9 = scalar_select 0, %s8, %s6
  $region1: #{residual_block_forward.1} parent=0
    #allocation3 [shape = 'u8[262144]{0}', space=vmem, size = 0x40000, scoped, tag = 'output window, operand 0']
    #allocation4 [shape = 's32[2]{0}', space=sflag, size = 0x8, scoped, tag = 'scoped memory for residual_block_forward.1']
    %10 = vsyncpa [#allocation4], 0
    %s11 = scalar_lea.sflag [#allocation4], 1
    %12 = vsyncpa %s11, 0
    loop: start=0, step=1, limit=4
    $region2: #{residual_block_forward.1} parent=1 // loop_pre_header
      _
    $region3: #{residual_block_forward.1} parent=1 // loop_header
      %s14 = sphi 0, %s18
      %p15 = scmp.ge.s32.totalorder %s14, 4
      %s24 = sphi 0, %s26
      %s27 = sphi 0, %s24
      %s28 = sphi 0, %s27
      %s44 = sphi 0, %s28
      %s48 = sphi 0, %s48
      %s50 = sphi 0, %s48
      %s51 = sphi 0, %s50
      %s65 = sphi 0, %s51
      %s69 = sphi 0, %s69
      %s71 = sphi 0, %s69
      %s72 = sphi 0, %s71
      %s86 = sphi 0, %s72
      %s90 = sphi 0, %s90
      %s92 = sphi 0, %s90
      %s93 = sphi 0, %s92
      %s107 = sphi 0, %s93
      %s111 = sphi 0, %s111
      %s113 = sphi 0, %s111
      %s114 = sphi 0, %s113
      %s128 = sphi 0, %s114
      %s134 = sphi 0, %s136
      %s137 = sphi 0, %s134
      %s138 = sphi 0, %s137
      %s154 = sphi 0, %s138
    $region4: #{residual_block_forward.1} parent=1 // loop_header_branch
      %17 = sbr.rel (%p15) target = $region8
    $region5: #{residual_block_forward.1} parent=1 // loop_body
      %s19 = ssub.s32 %s14, 1
      %s20 = ssub.s32 %s14, 2
      %s21 = sadd.s32 %s14, 1
      %s22 = ssub.s32 %s14, %s21
      %p23 = scmp.eq.s32.totalorder %s22, 0
      %s25 = sadd.s32 %s24, 1
      %s26 = scalar_select %p23, %s24, %s25
      %p29 = pneg %p23
      %p30 = scmp.eq.s32.totalorder %s14, 1
      %p31 = por %p29, %p30
      %p32 = scmp.ne.s32.totalorder %s24, %s27
      %p33 = scmp.eq.s32.totalorder %s14, 0
      %p34 = por %p32, %p33
      %p35 = scmp.ne.s32.totalorder %s24, %s27
      %p36 = scmp.eq.s32.totalorder %s19, 1
      %p37 = por %p35, %p36
      %p38 = scmp.ne.s32.totalorder %s27, %s28
      %p39 = scmp.eq.s32.totalorder %s19, 0
      %p40 = por %p38, %p39
      %p41 = scmp.ne.s32.totalorder %s27, %s28
      %p42 = scmp.eq.s32.totalorder %s20, 1
      %p43 = por %p41, %p42
      %p45 = scmp.ne.s32.totalorder %s28, %s44
      %p46 = scmp.eq.s32.totalorder %s20, 0
      %p47 = por %p45, %p46
      %s49 = sadd.s32 %s48, 1
      %p52 = scmp.eq.s32.totalorder %s14, 1
      %p53 = scmp.ne.s32.totalorder %s48, %s50
      %p54 = scmp.eq.s32.totalorder %s14, 0
      %p55 = por %p53, %p54
      %p56 = scmp.ne.s32.totalorder %s48, %s50
      %p57 = scmp.eq.s32.totalorder %s19, 1
      %p58 = por %p56, %p57
      %p59 = scmp.ne.s32.totalorder %s50, %s51
      %p60 = scmp.eq.s32.totalorder %s19, 0
      %p61 = por %p59, %p60
      %p62 = scmp.ne.s32.totalorder %s50, %s51
      %p63 = scmp.eq.s32.totalorder %s20, 1
      %p64 = por %p62, %p63
      %p66 = scmp.ne.s32.totalorder %s51, %s65
      %p67 = scmp.eq.s32.totalorder %s20, 0
      %p68 = por %p66, %p67
      %s70 = sadd.s32 %s69, 1
      %p73 = scmp.eq.s32.totalorder %s14, 1
      %p74 = scmp.ne.s32.totalorder %s69, %s71
      %p75 = scmp.eq.s32.totalorder %s14, 0
      %p76 = por %p74, %p75
      %p77 = scmp.ne.s32.totalorder %s69, %s71
      %p78 = scmp.eq.s32.totalorder %s19, 1
      %p79 = por %p77, %p78
      %p80 = scmp.ne.s32.totalorder %s71, %s72
      %p81 = scmp.eq.s32.totalorder %s19, 0
      %p82 = por %p80, %p81
      %p83 = scmp.ne.s32.totalorder %s71, %s72
      %p84 = scmp.eq.s32.totalorder %s20, 1
      %p85 = por %p83, %p84
      %p87 = scmp.ne.s32.totalorder %s72, %s86
      %p88 = scmp.eq.s32.totalorder %s20, 0
      %p89 = por %p87, %p88
      %s91 = sadd.s32 %s90, 1
      %p94 = scmp.eq.s32.totalorder %s14, 1
      %p95 = scmp.ne.s32.totalorder %s90, %s92
      %p96 = scmp.eq.s32.totalorder %s14, 0
      %p97 = por %p95, %p96
      %p98 = scmp.ne.s32.totalorder %s90, %s92
      %p99 = scmp.eq.s32.totalorder %s19, 1
      %p100 = por %p98, %p99
      %p101 = scmp.ne.s32.totalorder %s92, %s93
      %p102 = scmp.eq.s32.totalorder %s19, 0
      %p103 = por %p101, %p102
      %p104 = scmp.ne.s32.totalorder %s92, %s93
      %p105 = scmp.eq.s32.totalorder %s20, 1
      %p106 = por %p104, %p105
      %p108 = scmp.ne.s32.totalorder %s93, %s107
      %p109 = scmp.eq.s32.totalorder %s20, 0
      %p110 = por %p108, %p109
      %s112 = sadd.s32 %s111, 1
      %p115 = scmp.eq.s32.totalorder %s14, 1
      %p116 = scmp.ne.s32.totalorder %s111, %s113
      %p117 = scmp.eq.s32.totalorder %s14, 0
      %p118 = por %p116, %p117
      %p119 = scmp.ne.s32.totalorder %s111, %s113
      %p120 = scmp.eq.s32.totalorder %s19, 1
      %p121 = por %p119, %p120
      %p122 = scmp.ne.s32.totalorder %s113, %s114
      %p123 = scmp.eq.s32.totalorder %s19, 0
      %p124 = por %p122, %p123
      %p125 = scmp.ne.s32.totalorder %s113, %s114
      %p126 = scmp.eq.s32.totalorder %s20, 1
      %p127 = por %p125, %p126
      %p129 = scmp.ne.s32.totalorder %s114, %s128
      %p130 = scmp.eq.s32.totalorder %s20, 0
      %p131 = por %p129, %p130
      %s132 = ssub.s32 %s14, %s21
      %p133 = scmp.eq.s32.totalorder %s132, 0
      %s135 = sadd.s32 %s134, 1
      %s136 = scalar_select %p133, %s134, %s135
      %p139 = pneg %p133
      %p140 = scmp.eq.s32.totalorder %s14, 1
      %p141 = por %p139, %p140
      %p142 = scmp.ne.s32.totalorder %s134, %s137
      %p143 = scmp.eq.s32.totalorder %s14, 0
      %p144 = por %p142, %p143
      %p145 = scmp.ne.s32.totalorder %s134, %s137
      %p146 = scmp.eq.s32.totalorder %s19, 1
      %p147 = por %p145, %p146
      %p148 = scmp.ne.s32.totalorder %s137, %s138
      %p149 = scmp.eq.s32.totalorder %s19, 0
      %p150 = por %p148, %p149
      %p151 = scmp.ne.s32.totalorder %s137, %s138
      %p152 = scmp.eq.s32.totalorder %s20, 1
      %p153 = por %p151, %p152
      %p155 = scmp.ne.s32.totalorder %s138, %s154
      %p156 = scmp.eq.s32.totalorder %s20, 0
      %p157 = por %p155, %p156
      %p158 = scmp.le.s32.totalorder 1, %s14
      %p159 = scmp.lt.s32.totalorder %s14, 3
      %p160 = pnand %p158, %p159
      %p161 = pneg %p160
      // Predicated region
      $region9: #{residual_block_forward.1} parent=5 // pred_check
        _
      $region10: #{residual_block_forward.1} parent=5 // pred_check_branch
        %163 = sbr.rel (%p160) target = $region12
      $region11: #{residual_block_forward.1} parent=5 // pred_region
        %s164 = ssub.s32 %s14, 1
        // Predicated region
        $region13: #{residual_block_forward.1} parent=11 // pred_check
          %p165 = pneg %p61
        $region14: #{residual_block_forward.1} parent=11 // pred_check_branch
          %167 = sbr.rel (%p165) target = $region16
        $region15: #{residual_block_forward.1} parent=11 // pred_region
          _
        $region16: #{residual_block_forward.1} parent=11 // pred_fallthru
          _
        // Predicated region
        $region17: #{residual_block_forward.1} parent=11 // pred_check
          %p168 = pneg %p82
        $region18: #{residual_block_forward.1} parent=11 // pred_check_branch
          %170 = sbr.rel (%p168) target = $region20
        $region19: #{residual_block_forward.1} parent=11 // pred_region
          _
        $region20: #{residual_block_forward.1} parent=11 // pred_fallthru
          _
        // Predicated region
        $region21: #{residual_block_forward.1} parent=11 // pred_check
          %p171 = pneg %p103
        $region22: #{residual_block_forward.1} parent=11 // pred_check_branch
          %173 = sbr.rel (%p171) target = $region24
        $region23: #{residual_block_forward.1} parent=11 // pred_region
          _
        $region24: #{residual_block_forward.1} parent=11 // pred_fallthru
          _
        // Predicated region
        $region25: #{residual_block_forward.1} parent=11 // pred_check
          %p174 = pneg %p124
        $region26: #{residual_block_forward.1} parent=11 // pred_check_branch
          %176 = sbr.rel (%p174) target = $region28
        $region27: #{residual_block_forward.1} parent=11 // pred_region
          _
        $region28: #{residual_block_forward.1} parent=11 // pred_fallthru
          _
      $region12: #{residual_block_forward.1} parent=5 // pred_fallthru
        _
      %p177 = scmp.lt.s32.totalorder %s14, 2
      // Predicated region
      $region29: #{residual_block_forward.1} parent=5 // pred_check
        %p178 = pneg %p177
      $region30: #{residual_block_forward.1} parent=5 // pred_check_branch
        %180 = sbr.rel (%p178) target = $region32
      $region31: #{residual_block_forward.1} parent=5 // pred_region
        // Predicated region
        $region33: #{residual_block_forward.1} parent=31 // pred_check
          %p181 = pneg %p34
        $region34: #{residual_block_forward.1} parent=31 // pred_check_branch
          %183 = sbr.rel (%p181) target = $region36
        $region35: #{residual_block_forward.1} parent=31 // pred_region
          %p184 = scmp.lt.s32.totalorder %s14, 1
          %s185 = scalar_select %p184, %s14, 1
          %s186 = smul.addr %s185, 54
          %s187 = smul.addr %s186, 4
          %s188 = scalar_lea.vmem %s0, %s187
        $region36: #{residual_block_forward.1} parent=31 // pred_fallthru
          _
      $region32: #{residual_block_forward.1} parent=5 // pred_fallthru
        _
      %p189 = scmp.le.s32.totalorder 1, %s14
      %p190 = scmp.lt.s32.totalorder %s14, 3
      %p191 = pnand %p189, %p190
      %p192 = pneg %p191
      // Predicated region
      $region37: #{residual_block_forward.1} parent=5 // pred_check
        _
      $region38: #{residual_block_forward.1} parent=5 // pred_check_branch
        %194 = sbr.rel (%p191) target = $region40
      $region39: #{residual_block_forward.1} parent=5 // pred_region
        %s195 = ssub.s32 %s14, 1
        %p196 = scmp.lt.s32.totalorder %s19, 1
        %s197 = scalar_select %p196, %s19, 1
        %s198 = smul.addr %s197, 54
        %s199 = smul.addr %s198, 4
        %s200 = scalar_lea.vmem %s0, %s199
        %p201 = pneg %p40
        %p202 = pneg %p37
        %p203 = pneg %p61
        %p204 = pneg %p58
        %p205 = pneg %p82
        %p206 = pneg %p79
        %p207 = pneg %p103
        %p208 = pneg %p100
        %p209 = pneg %p124
        %p210 = pneg %p121
        %p211 = pneg %p150
        %p212 = pneg %p147
        %s213 = sand.u32 %s137, 1
        %s214 = scalar_lea.sflag [#allocation4], %s213
        %s215 = sand.u32 %s137, 1
        %s216 = smul.addr %s215, 256
        %s217 = scalar_lea.vmem [#allocation3], %s216
        %p218 = scmp.lt.s32.totalorder %s19, 1
        %s219 = scalar_select %p218, %s19, 1
        %s220 = smul.addr %s219, 54
        %s221 = smul.addr %s220, 4
        %s222 = scalar_lea.vmem %s0, %s221
        %v224 = vld [vmem:[%s222] sm:$0xf]
        %v225 = vld [vmem:[%s222 + $0x4] sm:$0xf]
        %v226 = vld [vmem:[%s222 + $0x8] sm:$0xf]
        %v227 = vld [vmem:[%s222 + $0xc] sm:$0xf]
        %v228 = vld [vmem:[%s222 + $0x10] sm:$0xf]
        %v229 = vld [vmem:[%s222 + $0x14] sm:$0xf]
        %v230 = vld [vmem:[%s222 + $0x18] sm:$0xf]
        %v231 = vld [vmem:[%s222 + $0x1c] sm:$0xf]
        %v232 = vld [vmem:[%s222 + $0x20] sm:$0xf]
        %v233 = vld [vmem:[%s222 + $0x24] sm:$0xf]
        %v234 = vld [vmem:[%s222 + $0x28] sm:$0xf]
        %v235 = vld [vmem:[%s222 + $0x2c] sm:$0xf]
        %v236 = vld [vmem:[%s222 + $0x30] sm:$0xf]
        %v237 = vld [vmem:[%s222 + $0x34] sm:$0xf]
        %v238 = vld [vmem:[%s222 + $0x38] sm:$0xf]
        %v239 = vld [vmem:[%s222 + $0x3c] sm:$0xf]
        %v240 = vld [vmem:[%s222 + $0x40] sm:$0xf]
        %v241 = vld [vmem:[%s222 + $0x44] sm:$0xf]
        %v242 = vld [vmem:[%s222 + $0x48] sm:$0xf]
        %v243 = vld [vmem:[%s222 + $0x4c] sm:$0xf]
        %v244 = vld [vmem:[%s222 + $0x50] sm:$0xf]
        %v245 = vld [vmem:[%s222 + $0x54] sm:$0xf]
        %v246 = vld [vmem:[%s222 + $0x58] sm:$0xf]
        %v247 = vld [vmem:[%s222 + $0x5c] sm:$0xf]
        %v248 = vld [vmem:[%s222 + $0x60] sm:$0xf]
        %v249 = vld [vmem:[%s222 + $0x64] sm:$0xf]
        %v250 = vld [vmem:[%s222 + $0x68] sm:$0xf]
        %v251 = vld [vmem:[%s222 + $0x6c] sm:$0xf]
        %v252 = vld [vmem:[%s222 + $0x70] sm:$0xf]
        %v253 = vld [vmem:[%s222 + $0x74] sm:$0xf]
        %v254 = vld [vmem:[%s222 + $0x78] sm:$0xf]
        %v255 = vld [vmem:[%s222 + $0x7c] sm:$0xf]
        %v256 = vld [vmem:[%s222 + $0x80] sm:$0xf]
        %v257 = vld [vmem:[%s222 + $0x84] sm:$0xf]
        %v258 = vld [vmem:[%s222 + $0x88] sm:$0xf]
        %v259 = vld [vmem:[%s222 + $0x8c] sm:$0xf]
        %v260 = vld [vmem:[%s222 + $0x90] sm:$0xf]
        %v261 = vld [vmem:[%s222 + $0x94] sm:$0xf]
        %v262 = vld [vmem:[%s222 + $0x98] sm:$0xf]
        %v263 = vld [vmem:[%s222 + $0x9c] sm:$0xf]
        %v264 = vld [vmem:[%s222 + $0xa0] sm:$0xf]
        %v265 = vld [vmem:[%s222 + $0xa4] sm:$0xf]
        %v266 = vld [vmem:[%s222 + $0xa8] sm:$0xf]
        %v267 = vld [vmem:[%s222 + $0xac] sm:$0xf]
        %v268 = vld [vmem:[%s222 + $0xb0] sm:$0xf]
        %v269 = vld [vmem:[%s222 + $0xb4] sm:$0xf]
        %v270 = vld [vmem:[%s222 + $0xb8] sm:$0xf]
        %v271 = vld [vmem:[%s222 + $0xbc] sm:$0xf]
        %v272 = vld [vmem:[%s222 + $0xc0] sm:$0xf]
        %v273 = vld [vmem:[%s222 + $0xc4] sm:$0xf]
        %v274 = vld [vmem:[%s222 + $0xc8] sm:$0xf]
        %v275 = vld [vmem:[%s222 + $0xcc] sm:$0xf]
        %v276 = vld [vmem:[%s222 + $0xd0] sm:$0xf]
        %v277 = vld [vmem:[%s222 + $0xd4] sm:$0xf]
        %v278 = vld [vmem:[%s1] sm:$0xf]
        %v279 = vld [vmem:[%s1 + $0x4] sm:$0xf]
        %v280 = vld [vmem:[%s1 + $0x8] sm:$0xf]
        %v281 = vld [vmem:[%s1 + $0xc] sm:$0xf]
        %v282 = vld [vmem:[%s1 + $0x10] sm:$0xf]
        %v283 = vld [vmem:[%s1 + $0x14] sm:$0xf]
        %v284 = vld [vmem:[%s1 + $0x18] sm:$0xf]
        %v285 = vld [vmem:[%s1 + $0x1c] sm:$0xf]
        %v286 = vld [vmem:[%s2] sm:$0x1]
        %v288 = vlaneseq
        %v289 = vshrl.u32 %v288, 7
        %v290 = vsub.s32 0, %v289
        %v291 = vrot.slane %v286, %v290
        %v347 = vunpack.c.l.b16 %v224
        %v348 = vunpack.c.l.b16 %v225
        %v349 = vunpack.c.l.b16 %v226
        %v350 = vunpack.c.l.b16 %v227
        %v351 = vunpack.c.l.b16 %v228
        %v352 = vunpack.c.l.b16 %v229
        %v353 = vunpack.c.l.b16 %v230
        %v354 = vunpack.c.l.b16 %v231
        %v355 = vunpack.c.l.b16 %v232
        %v356 = vunpack.c.l.b16 %v233
        %v357 = vunpack.c.l.b16 %v234
        %v358 = vunpack.c.l.b16 %v235
        %v359 = vunpack.c.l.b16 %v236
        %v360 = vunpack.c.l.b16 %v237
        %v361 = vunpack.c.l.b16 %v238
        %v362 = vunpack.c.l.b16 %v239
        %v363 = vunpack.c.l.b16 %v240
        %v364 = vunpack.c.l.b16 %v241
        %v365 = vunpack.c.l.b16 %v242
        %v366 = vunpack.c.l.b16 %v243
        %v367 = vunpack.c.l.b16 %v244
        %v368 = vunpack.c.l.b16 %v245
        %v369 = vunpack.c.l.b16 %v246
        %v370 = vunpack.c.l.b16 %v247
        %v371 = vunpack.c.l.b16 %v248
        %v372 = vunpack.c.l.b16 %v249
        %v373 = vunpack.c.l.b16 %v250
        %v374 = vunpack.c.l.b16 %v251
        %v375 = vunpack.c.l.b16 %v252
        %v376 = vunpack.c.l.b16 %v253
        %v377 = vunpack.c.l.b16 %v254
        %v378 = vunpack.c.l.b16 %v255
        %v379 = vunpack.c.l.b16 %v256
        %v380 = vunpack.c.l.b16 %v257
        %v381 = vunpack.c.l.b16 %v258
        %v382 = vunpack.c.l.b16 %v259
        %v383 = vunpack.c.l.b16 %v260
        %v384 = vunpack.c.l.b16 %v261
        %v385 = vunpack.c.l.b16 %v262
        %v386 = vunpack.c.l.b16 %v263
        %v387 = vunpack.c.l.b16 %v264
        %v388 = vunpack.c.l.b16 %v265
        %v389 = vunpack.c.l.b16 %v266
        %v390 = vunpack.c.l.b16 %v267
        %v391 = vunpack.c.l.b16 %v268
        %v392 = vunpack.c.l.b16 %v269
        %v393 = vunpack.c.l.b16 %v270
        %v394 = vunpack.c.l.b16 %v271
        %v395 = vunpack.c.l.b16 %v272
        %v396 = vunpack.c.l.b16 %v273
        %v397 = vunpack.c.l.b16 %v274
        %v398 = vunpack.c.l.b16 %v275
        %v399 = vunpack.c.l.b16 %v276
        %v400 = vunpack.c.l.b16 %v277
        %v401 = vpack.c.b16 %v348, %v347
        %v402 = vpack.c.b16 %v350, %v349
        %v403 = vpack.c.b16 %v352, %v351
        %v404 = vpack.c.b16 %v354, %v353
        %v405 = vpack.c.b16 %v356, %v355
        %v406 = vpack.c.b16 %v358, %v357
        %v407 = vpack.c.b16 %v360, %v359
        %v408 = vpack.c.b16 %v362, %v361
        %v409 = vpack.c.b16 %v364, %v363
        %v410 = vpack.c.b16 %v366, %v365
        %v411 = vpack.c.b16 %v368, %v367
        %v412 = vpack.c.b16 %v370, %v369
        %v413 = vpack.c.b16 %v372, %v371
        %v414 = vpack.c.b16 %v374, %v373
        %v415 = vpack.c.b16 %v376, %v375
        %v416 = vpack.c.b16 %v378, %v377
        %v417 = vpack.c.b16 %v380, %v379
        %v418 = vpack.c.b16 %v382, %v381
        %v419 = vpack.c.b16 %v384, %v383
        %v420 = vpack.c.b16 %v386, %v385
        %v421 = vpack.c.b16 %v388, %v387
        %v422 = vpack.c.b16 %v390, %v389
        %v423 = vpack.c.b16 %v392, %v391
        %v424 = vpack.c.b16 %v394, %v393
        %v425 = vpack.c.b16 %v396, %v395
        %v426 = vpack.c.b16 %v398, %v397
        %v427 = vpack.c.b16 %v400, %v399
        %v436 = vunpack.c.l.b16 %v278
        %v437 = vunpack.c.l.b16 %v279
        %v438 = vunpack.c.l.b16 %v280
        %v439 = vunpack.c.l.b16 %v281
        %v440 = vunpack.c.l.b16 %v282
        %v441 = vunpack.c.l.b16 %v283
        %v442 = vunpack.c.l.b16 %v284
        %v443 = vunpack.c.l.b16 %v285
        %v444 = vpack.c.b16 %v437, %v436
        %v445 = vpack.c.b16 %v439, %v438
        %v446 = vpack.c.b16 %v441, %v440
        %v447 = vpack.c.b16 %v443, %v442
        %vm452 = vcmask 523264
        %v454 = vsel %vm452, %v401, 0
        %v457 = vsel %vm452, %v402, 0
        %v460 = vsel %vm452, %v403, 0
        %v463 = vsel %vm452, %v404, 0
        %v466 = vsel %vm452, %v405, 0
        %v469 = vsel %vm452, %v406, 0
        %v472 = vsel %vm452, %v407, 0
        %v475 = vsel %vm452, %v408, 0
        %v478 = vsel %vm452, %v409, 0
        %v481 = vsel %vm452, %v410, 0
        %v484 = vsel %vm452, %v411, 0
        %v487 = vsel %vm452, %v412, 0
        %v490 = vsel %vm452, %v413, 0
        %v493 = vsel %vm452, %v414, 0
        %v496 = vsel %vm452, %v415, 0
        %v499 = vsel %vm452, %v416, 0
        %v502 = vsel %vm452, %v417, 0
        %v505 = vsel %vm452, %v418, 0
        %v508 = vsel %vm452, %v419, 0
        %v511 = vsel %vm452, %v420, 0
        %v514 = vsel %vm452, %v421, 0
        %v517 = vsel %vm452, %v422, 0
        %v520 = vsel %vm452, %v423, 0
        %v523 = vsel %vm452, %v424, 0
        %v526 = vsel %vm452, %v425, 0
        %v529 = vsel %vm452, %v426, 0
        %v532 = vsel %vm452, %v427, 0
        %534 = vmatprep.subr.bf16.mxu0 0
        %535 = vmatpush1.bf16.msra.mxu0 %v444
        %536 = vmatprep.subr.bf16.mxu0 0
        %537 = vmatpush1.bf16.msra.mxu0 %v445
        %538 = vmatprep.subr.bf16.mxu0 0
        %539 = vmatpush1.bf16.msra.mxu0 %v446
        %540 = vmatprep.subr.bf16.mxu0 0
        %541 = vmatpush1.bf16.msra.mxu0 %v447
        %542 = vmatprep.subr.bf16.mxu0 0
        %543 = vmatpush1.bf16.msra.mxu0 0
        %544 = vmatprep.subr.bf16.mxu0 0
        %545 = vmatpush1.bf16.msra.mxu0 0
        %546 = vmatprep.subr.bf16.mxu0 0
        %547 = vmatpush1.bf16.msra.mxu0 0
        %548 = vmatprep.subr.bf16.mxu0 0
        %549 = vmatpush1.bf16.msra.mxu0 0
        %550 = vmatprep.subr.bf16.mxu0 0
        %551 = vmatpush1.bf16.msra.mxu0 0
        %552 = vmatprep.subr.bf16.mxu0 0
        %553 = vmatpush1.bf16.msra.mxu0 0
        %554 = vmatprep.subr.bf16.mxu0 0
        %555 = vmatpush1.bf16.msra.mxu0 0
        %556 = vmatprep.subr.bf16.mxu0 0
        %557 = vmatpush1.bf16.msra.mxu0 0
        %558 = vmatprep.subr.bf16.mxu0 0
        %559 = vmatpush1.bf16.msra.mxu0 0
        %560 = vmatprep.subr.bf16.mxu0 0
        %561 = vmatpush1.bf16.msra.mxu0 0
        %562 = vmatprep.subr.bf16.mxu0 0
        %563 = vmatpush1.bf16.msra.mxu0 0
        %564 = vmatprep.subr.bf16.mxu0 0
        %565 = vmatpush1.bf16.msra.mxu0 0
        %566 = vmatprep.mubr.bf16.mxu0 0
        %567 = vmatmul.mubr.bf16.gmra.mrb[0].mxu0 %v454
        %v568 = vpop.f32.mrb[0].mxu0
        %v569 = vadd.f32 %v291, %v568
        %v570 = vpop.f32.mrb[0].mxu0
        %v571 = vpop.f32.mrb[0].mxu0
        %v572 = vadd.f32 %v291, %v571
        %v573 = vpop.f32.mrb[0].mxu0
        %574 = vmatprep.mubr.bf16.mxu0 0
        %575 = vmatmul.mubr.bf16.gmra.mrb[0].mxu0 %v457
        %v576 = vpop.f32.mrb[0].mxu0
        %v577 = vadd.f32 %v291, %v576
        %v578 = vpop.f32.mrb[0].mxu0
        %v579 = vpop.f32.mrb[0].mxu0
        %v580 = vadd.f32 %v291, %v579
        %v581 = vpop.f32.mrb[0].mxu0
        %582 = vmatprep.mubr.bf16.mxu0 0
        %583 = vmatmul.mubr.bf16.gmra.mrb[0].mxu0 %v460
        %v584 = vpop.f32.mrb[0].mxu0
        %v585 = vadd.f32 %v291, %v584
        %v586 = vpop.f32.mrb[0].mxu0
        %v587 = vpop.f32.mrb[0].mxu0
        %v588 = vadd.f32 %v291, %v587
        %v589 = vpop.f32.mrb[0].mxu0
        %590 = vmatprep.mubr.bf16.mxu0 0
        %591 = vmatmul.mubr.bf16.gmra.mrb[0].mxu0 %v463
        %v592 = vpop.f32.mrb[0].mxu0
        %v593 = vadd.f32 %v291, %v592
        %v594 = vpop.f32.mrb[0].mxu0
        %v595 = vpop.f32.mrb[0].mxu0
        %v596 = vadd.f32 %v291, %v595
        %v597 = vpop.f32.mrb[0].mxu0
        %598 = vmatprep.mubr.bf16.mxu0 0
        %599 = vmatmul.mubr.bf16.gmra.mrb[0].mxu0 %v466
        %v600 = vpop.f32.mrb[0].mxu0
        %v601 = vadd.f32 %v291, %v600
        %v602 = vpop.f32.mrb[0].mxu0
        %v603 = vpop.f32.mrb[0].mxu0
        %v604 = vadd.f32 %v291, %v603
        %v605 = vpop.f32.mrb[0].mxu0
        %606 = vmatprep.mubr.bf16.mxu0 0
        %607 = vmatmul.mubr.bf16.gmra.mrb[0].mxu0 %v469
        %v608 = vpop.f32.mrb[0].mxu0
        %v609 = vadd.f32 %v291, %v608
        %v610 = vpop.f32.mrb[0].mxu0
        %v611 = vpop.f32.mrb[0].mxu0
        %v612 = vadd.f32 %v291, %v611
        %v613 = vpop.f32.mrb[0].mxu0
        %614 = vmatprep.mubr.bf16.mxu0 0
        %615 = vmatmul.mubr.bf16.gmra.mrb[0].mxu0 %v472
        %v616 = vpop.f32.mrb[0].mxu0
        %v617 = vadd.f32 %v291, %v616
        %v618 = vpop.f32.mrb[0].mxu0
        %v619 = vpop.f32.mrb[0].mxu0
        %v620 = vadd.f32 %v291, %v619
        %v621 = vpop.f32.mrb[0].mxu0
        %622 = vmatprep.mubr.bf16.mxu0 0
        %623 = vmatmul.mubr.bf16.gmra.mrb[0].mxu0 %v475
        %v624 = vpop.f32.mrb[0].mxu0
        %v625 = vadd.f32 %v291, %v624
        %v626 = vpop.f32.mrb[0].mxu0
        %v627 = vpop.f32.mrb[0].mxu0
        %v628 = vadd.f32 %v291, %v627
        %v629 = vpop.f32.mrb[0].mxu0
        %630 = vmatprep.mubr.bf16.mxu0 0
        %631 = vmatmul.mubr.bf16.gmra.mrb[0].mxu0 %v478
        %v632 = vpop.f32.mrb[0].mxu0
        %v633 = vadd.f32 %v291, %v632
        %v634 = vpop.f32.mrb[0].mxu0
        %v635 = vpop.f32.mrb[0].mxu0
        %v636 = vadd.f32 %v291, %v635
        %v637 = vpop.f32.mrb[0].mxu0
        %638 = vmatprep.mubr.bf16.mxu0 0
        %639 = vmatmul.mubr.bf16.gmra.mrb[0].mxu0 %v481
        %v640 = vpop.f32.mrb[0].mxu0
        %v641 = vadd.f32 %v291, %v640
        %v642 = vpop.f32.mrb[0].mxu0
        %v643 = vpop.f32.mrb[0].mxu0
        %v644 = vadd.f32 %v291, %v643
        %v645 = vpop.f32.mrb[0].mxu0
        %646 = vmatprep.mubr.bf16.mxu0 0
        %647 = vmatmul.mubr.bf16.gmra.mrb[0].mxu0 %v484
        %v648 = vpop.f32.mrb[0].mxu0
        %v649 = vadd.f32 %v291, %v648
        %v650 = vpop.f32.mrb[0].mxu0
        %v651 = vpop.f32.mrb[0].mxu0
        %v652 = vadd.f32 %v291, %v651
        %v653 = vpop.f32.mrb[0].mxu0
        %654 = vmatprep.mubr.bf16.mxu0 0
        %655 = vmatmul.mubr.bf16.gmra.mrb[0].mxu0 %v487
        %v656 = vpop.f32.mrb[0].mxu0
        %v657 = vadd.f32 %v291, %v656
        %v658 = vpop.f32.mrb[0].mxu0
        %v659 = vpop.f32.mrb[0].mxu0
        %v660 = vadd.f32 %v291, %v659
        %v661 = vpop.f32.mrb[0].mxu0
        %662 = vmatprep.mubr.bf16.mxu0 0
        %663 = vmatmul.mubr.bf16.gmra.mrb[0].mxu0 %v490
        %v664 = vpop.f32.mrb[0].mxu0
        %v665 = vadd.f32 %v291, %v664
        %v666 = vpop.f32.mrb[0].mxu0
        %v667 = vpop.f32.mrb[0].mxu0
        %v668 = vadd.f32 %v291, %v667
        %v669 = vpop.f32.mrb[0].mxu0
        %670 = vmatprep.mubr.bf16.mxu0 0
        %671 = vmatmul.mubr.bf16.gmra.mrb[0].mxu0 %v493
        %v672 = vpop.f32.mrb[0].mxu0
        %v673 = vadd.f32 %v291, %v672
        %v674 = vpop.f32.mrb[0].mxu0
        %v675 = vpop.f32.mrb[0].mxu0
        %v676 = vadd.f32 %v291, %v675
        %v677 = vpop.f32.mrb[0].mxu0
        %678 = vmatprep.mubr.bf16.mxu0 0
        %679 = vmatmul.mubr.bf16.gmra.mrb[0].mxu0 %v496
        %v680 = vpop.f32.mrb[0].mxu0
        %v681 = vadd.f32 %v291, %v680
        %v682 = vpop.f32.mrb[0].mxu0
        %v683 = vpop.f32.mrb[0].mxu0
        %v684 = vadd.f32 %v291, %v683
        %v685 = vpop.f32.mrb[0].mxu0
        %686 = vmatprep.mubr.bf16.mxu0 0
        %687 = vmatmul.mubr.bf16.gmra.mrb[0].mxu0 %v499
        %v688 = vpop.f32.mrb[0].mxu0
        %v689 = vadd.f32 %v291, %v688
        %v690 = vpop.f32.mrb[0].mxu0
        %v691 = vpop.f32.mrb[0].mxu0
        %v692 = vadd.f32 %v291, %v691
        %v693 = vpop.f32.mrb[0].mxu0
        %694 = vmatprep.mubr.bf16.mxu0 0
        %695 = vmatmul.mubr.bf16.gmra.mrb[0].mxu0 %v502
        %v696 = vpop.f32.mrb[0].mxu0
        %v697 = vadd.f32 %v291, %v696
        %v698 = vpop.f32.mrb[0].mxu0
        %v699 = vpop.f32.mrb[0].mxu0
        %v700 = vadd.f32 %v291, %v699
        %v701 = vpop.f32.mrb[0].mxu0
        %702 = vmatprep.mubr.bf16.mxu0 0
        %703 = vmatmul.mubr.bf16.gmra.mrb[0].mxu0 %v505
        %v704 = vpop.f32.mrb[0].mxu0
        %v705 = vadd.f32 %v291, %v704
        %v706 = vpop.f32.mrb[0].mxu0
        %v707 = vpop.f32.mrb[0].mxu0
        %v708 = vadd.f32 %v291, %v707
        %v709 = vpop.f32.mrb[0].mxu0
        %710 = vmatprep.mubr.bf16.mxu0 0
        %711 = vmatmul.mubr.bf16.gmra.mrb[0].mxu0 %v508
        %v712 = vpop.f32.mrb[0].mxu0
        %v713 = vadd.f32 %v291, %v712
        %v714 = vpop.f32.mrb[0].mxu0
        %v715 = vpop.f32.mrb[0].mxu0
        %v716 = vadd.f32 %v291, %v715
        %v717 = vpop.f32.mrb[0].mxu0
        %718 = vmatprep.mubr.bf16.mxu0 0
        %719 = vmatmul.mubr.bf16.gmra.mrb[0].mxu0 %v511
        %v720 = vpop.f32.mrb[0].mxu0
        %v721 = vadd.f32 %v291, %v720
        %v722 = vpop.f32.mrb[0].mxu0
        %v723 = vpop.f32.mrb[0].mxu0
        %v724 = vadd.f32 %v291, %v723
        %v725 = vpop.f32.mrb[0].mxu0
        %726 = vmatprep.mubr.bf16.mxu0 0
        %727 = vmatmul.mubr.bf16.gmra.mrb[0].mxu0 %v514
        %v728 = vpop.f32.mrb[0].mxu0
        %v729 = vadd.f32 %v291, %v728
        %v730 = vpop.f32.mrb[0].mxu0
        %v731 = vpop.f32.mrb[0].mxu0
        %v732 = vadd.f32 %v291, %v731
        %v733 = vpop.f32.mrb[0].mxu0
        %734 = vmatprep.mubr.bf16.mxu0 0
        %735 = vmatmul.mubr.bf16.gmra.mrb[0].mxu0 %v517
        %v736 = vpop.f32.mrb[0].mxu0
        %v737 = vadd.f32 %v291, %v736
        %v738 = vpop.f32.mrb[0].mxu0
        %v739 = vpop.f32.mrb[0].mxu0
        %v740 = vadd.f32 %v291, %v739
        %v741 = vpop.f32.mrb[0].mxu0
        %742 = vmatprep.mubr.bf16.mxu0 0
        %743 = vmatmul.mubr.bf16.gmra.mrb[0].mxu0 %v520
        %v744 = vpop.f32.mrb[0].mxu0
        %v745 = vadd.f32 %v291, %v744
        %v746 = vpop.f32.mrb[0].mxu0
        %v747 = vpop.f32.mrb[0].mxu0
        %v748 = vadd.f32 %v291, %v747
        %v749 = vpop.f32.mrb[0].mxu0
        %750 = vmatprep.mubr.bf16.mxu0 0
        %751 = vmatmul.mubr.bf16.gmra.mrb[0].mxu0 %v523
        %v752 = vpop.f32.mrb[0].mxu0
        %v753 = vadd.f32 %v291, %v752
        %v754 = vpop.f32.mrb[0].mxu0
        %v755 = vpop.f32.mrb[0].mxu0
        %v756 = vadd.f32 %v291, %v755
        %v757 = vpop.f32.mrb[0].mxu0
        %758 = vmatprep.mubr.bf16.mxu0 0
        %759 = vmatmul.mubr.bf16.gmra.mrb[0].mxu0 %v526
        %v760 = vpop.f32.mrb[0].mxu0
        %v761 = vadd.f32 %v291, %v760
        %v762 = vpop.f32.mrb[0].mxu0
        %v763 = vpop.f32.mrb[0].mxu0
        %v764 = vadd.f32 %v291, %v763
        %v765 = vpop.f32.mrb[0].mxu0
        %766 = vmatprep.mubr.bf16.mxu0 0
        %767 = vmatmul.mubr.bf16.gmra.mrb[0].mxu0 %v529
        %v768 = vpop.f32.mrb[0].mxu0
        %v769 = vadd.f32 %v291, %v768
        %v770 = vpop.f32.mrb[0].mxu0
        %v771 = vpop.f32.mrb[0].mxu0
        %v772 = vadd.f32 %v291, %v771
        %v773 = vpop.f32.mrb[0].mxu0
        %774 = vmatprep.mubr.bf16.mxu0 0
        %775 = vmatmul.mubr.bf16.gmra.mrb[0].mxu0 %v532
        %v776 = vpop.f32.mrb[0].mxu0
        %v777 = vadd.f32 %v291, %v776
        %v778 = vpop.f32.mrb[0].mxu0
        %v779 = vpop.f32.mrb[0].mxu0
        %v780 = vadd.f32 %v291, %v779
        %v781 = vpop.f32.mrb[0].mxu0
        %782 = vdwg.mxu0
        %vm783 = vcmp.ge.f32.partialorder %v569, 0.0
        %vm784 = vcmp.ge.f32.partialorder %v572, 0.0
        %vm785 = vcmp.ge.f32.partialorder %v577, 0.0
        %vm786 = vcmp.ge.f32.partialorder %v580, 0.0
        %vm787 = vcmp.ge.f32.partialorder %v585, 0.0
        %vm788 = vcmp.ge.f32.partialorder %v588, 0.0
        %vm789 = vcmp.ge.f32.partialorder %v593, 0.0
        %vm790 = vcmp.ge.f32.partialorder %v596, 0.0
        %vm791 = vcmp.ge.f32.partialorder %v601, 0.0
        %vm792 = vcmp.ge.f32.partialorder %v604, 0.0
        %vm793 = vcmp.ge.f32.partialorder %v609, 0.0
        %vm794 = vcmp.ge.f32.partialorder %v612, 0.0
        %vm795 = vcmp.ge.f32.partialorder %v617, 0.0
        %vm796 = vcmp.ge.f32.partialorder %v620, 0.0
        %vm797 = vcmp.ge.f32.partialorder %v625, 0.0
        %vm798 = vcmp.ge.f32.partialorder %v628, 0.0
        %vm799 = vcmp.ge.f32.partialorder %v633, 0.0
        %vm800 = vcmp.ge.f32.partialorder %v636, 0.0
        %vm801 = vcmp.ge.f32.partialorder %v641, 0.0
        %vm802 = vcmp.ge.f32.partialorder %v644, 0.0
        %vm803 = vcmp.ge.f32.partialorder %v649, 0.0
        %vm804 = vcmp.ge.f32.partialorder %v652, 0.0
        %vm805 = vcmp.ge.f32.partialorder %v657, 0.0
        %vm806 = vcmp.ge.f32.partialorder %v660, 0.0
        %vm807 = vcmp.ge.f32.partialorder %v665, 0.0
        %vm808 = vcmp.ge.f32.partialorder %v668, 0.0
        %vm809 = vcmp.ge.f32.partialorder %v673, 0.0
        %vm810 = vcmp.ge.f32.partialorder %v676, 0.0
        %vm811 = vcmp.ge.f32.partialorder %v681, 0.0
        %vm812 = vcmp.ge.f32.partialorder %v684, 0.0
        %vm813 = vcmp.ge.f32.partialorder %v689, 0.0
        %vm814 = vcmp.ge.f32.partialorder %v692, 0.0
        %vm815 = vcmp.ge.f32.partialorder %v697, 0.0
        %vm816 = vcmp.ge.f32.partialorder %v700, 0.0
        %vm817 = vcmp.ge.f32.partialorder %v705, 0.0
        %vm818 = vcmp.ge.f32.partialorder %v708, 0.0
        %vm819 = vcmp.ge.f32.partialorder %v713, 0.0
        %vm820 = vcmp.ge.f32.partialorder %v716, 0.0
        %vm821 = vcmp.ge.f32.partialorder %v721, 0.0
        %vm822 = vcmp.ge.f32.partialorder %v724, 0.0
        %vm823 = vcmp.ge.f32.partialorder %v729, 0.0
        %vm824 = vcmp.ge.f32.partialorder %v732, 0.0
        %vm825 = vcmp.ge.f32.partialorder %v737, 0.0
        %vm826 = vcmp.ge.f32.partialorder %v740, 0.0
        %vm827 = vcmp.ge.f32.partialorder %v745, 0.0
        %vm828 = vcmp.ge.f32.partialorder %v748, 0.0
        %vm829 = vcmp.ge.f32.partialorder %v753, 0.0
        %vm830 = vcmp.ge.f32.partialorder %v756, 0.0
        %vm831 = vcmp.ge.f32.partialorder %v761, 0.0
        %vm832 = vcmp.ge.f32.partialorder %v764, 0.0
        %vm833 = vcmp.ge.f32.partialorder %v769, 0.0
        %vm834 = vcmp.ge.f32.partialorder %v772, 0.0
        %vm835 = vcmp.ge.f32.partialorder %v777, 0.0
        %vm836 = vcmp.ge.f32.partialorder %v780, 0.0
        %v837 = vmul.f32 %v569, 0.01
        %v838 = vmul.f32 %v572, 0.01
        %v839 = vmul.f32 %v577, 0.01
        %v840 = vmul.f32 %v580, 0.01
        %v841 = vmul.f32 %v585, 0.01
        %v842 = vmul.f32 %v588, 0.01
        %v843 = vmul.f32 %v593, 0.01
        %v844 = vmul.f32 %v596, 0.01
        %v845 = vmul.f32 %v601, 0.01
        %v846 = vmul.f32 %v604, 0.01
        %v847 = vmul.f32 %v609, 0.01
        %v848 = vmul.f32 %v612, 0.01
        %v849 = vmul.f32 %v617, 0.01
        %v850 = vmul.f32 %v620, 0.01
        %v851 = vmul.f32 %v625, 0.01
        %v852 = vmul.f32 %v628, 0.01
        %v853 = vmul.f32 %v633, 0.01
        %v854 = vmul.f32 %v636, 0.01
        %v855 = vmul.f32 %v641, 0.01
        %v856 = vmul.f32 %v644, 0.01
        %v857 = vmul.f32 %v649, 0.01
        %v858 = vmul.f32 %v652, 0.01
        %v859 = vmul.f32 %v657, 0.01
        %v860 = vmul.f32 %v660, 0.01
        %v861 = vmul.f32 %v665, 0.01
        %v862 = vmul.f32 %v668, 0.01
        %v863 = vmul.f32 %v673, 0.01
        %v864 = vmul.f32 %v676, 0.01
        %v865 = vmul.f32 %v681, 0.01
        %v866 = vmul.f32 %v684, 0.01
        %v867 = vmul.f32 %v689, 0.01
        %v868 = vmul.f32 %v692, 0.01
        %v869 = vmul.f32 %v697, 0.01
        %v870 = vmul.f32 %v700, 0.01
        %v871 = vmul.f32 %v705, 0.01
        %v872 = vmul.f32 %v708, 0.01
        %v873 = vmul.f32 %v713, 0.01
        %v874 = vmul.f32 %v716, 0.01
        %v875 = vmul.f32 %v721, 0.01
        %v876 = vmul.f32 %v724, 0.01
        %v877 = vmul.f32 %v729, 0.01
        %v878 = vmul.f32 %v732, 0.01
        %v879 = vmul.f32 %v737, 0.01
        %v880 = vmul.f32 %v740, 0.01
        %v881 = vmul.f32 %v745, 0.01
        %v882 = vmul.f32 %v748, 0.01
        %v883 = vmul.f32 %v753, 0.01
        %v884 = vmul.f32 %v756, 0.01
        %v885 = vmul.f32 %v761, 0.01
        %v886 = vmul.f32 %v764, 0.01
        %v887 = vmul.f32 %v769, 0.01
        %v888 = vmul.f32 %v772, 0.01
        %v889 = vmul.f32 %v777, 0.01
        %v890 = vmul.f32 %v780, 0.01
        %v891 = vsel %vm783, %v569, %v837
        %v892 = vsel %vm784, %v572, %v838
        %v893 = vsel %vm785, %v577, %v839
        %v894 = vsel %vm786, %v580, %v840
        %v895 = vsel %vm787, %v585, %v841
        %v896 = vsel %vm788, %v588, %v842
        %v897 = vsel %vm789, %v593, %v843
        %v898 = vsel %vm790, %v596, %v844
        %v899 = vsel %vm791, %v601, %v845
        %v900 = vsel %vm792, %v604, %v846
        %v901 = vsel %vm793, %v609, %v847
        %v902 = vsel %vm794, %v612, %v848
        %v903 = vsel %vm795, %v617, %v849
        %v904 = vsel %vm796, %v620, %v850
        %v905 = vsel %vm797, %v625, %v851
        %v906 = vsel %vm798, %v628, %v852
        %v907 = vsel %vm799, %v633, %v853
        %v908 = vsel %vm800, %v636, %v854
        %v909 = vsel %vm801, %v641, %v855
        %v910 = vsel %vm802, %v644, %v856
        %v911 = vsel %vm803, %v649, %v857
        %v912 = vsel %vm804, %v652, %v858
        %v913 = vsel %vm805, %v657, %v859
        %v914 = vsel %vm806, %v660, %v860
        %v915 = vsel %vm807, %v665, %v861
        %v916 = vsel %vm808, %v668, %v862
        %v917 = vsel %vm809, %v673, %v863
        %v918 = vsel %vm810, %v676, %v864
        %v919 = vsel %vm811, %v681, %v865
        %v920 = vsel %vm812, %v684, %v866
        %v921 = vsel %vm813, %v689, %v867
        %v922 = vsel %vm814, %v692, %v868
        %v923 = vsel %vm815, %v697, %v869
        %v924 = vsel %vm816, %v700, %v870
        %v925 = vsel %vm817, %v705, %v871
        %v926 = vsel %vm818, %v708, %v872
        %v927 = vsel %vm819, %v713, %v873
        %v928 = vsel %vm820, %v716, %v874
        %v929 = vsel %vm821, %v721, %v875
        %v930 = vsel %vm822, %v724, %v876
        %v931 = vsel %vm823, %v729, %v877
        %v932 = vsel %vm824, %v732, %v878
        %v933 = vsel %vm825, %v737, %v879
        %v934 = vsel %vm826, %v740, %v880
        %v935 = vsel %vm827, %v745, %v881
        %v936 = vsel %vm828, %v748, %v882
        %v937 = vsel %vm829, %v753, %v883
        %v938 = vsel %vm830, %v756, %v884
        %v939 = vsel %vm831, %v761, %v885
        %v940 = vsel %vm832, %v764, %v886
        %v941 = vsel %vm833, %v769, %v887
        %v942 = vsel %vm834, %v772, %v888
        %v943 = vsel %vm835, %v777, %v889
        %v944 = vsel %vm836, %v780, %v890
        %v945 = vpack.c.bf16 %v892, %v891
        %v946 = vpack.c.bf16 %v893, %v893
        %v947 = vpack.c.bf16 %v895, %v894
        %v948 = vpack.c.bf16 %v896, %v896
        %v949 = vpack.c.bf16 %v898, %v897
        %v950 = vpack.c.bf16 %v899, %v899
        %v951 = vpack.c.bf16 %v901, %v900
        %v952 = vpack.c.bf16 %v902, %v902
        %v953 = vpack.c.bf16 %v904, %v903
        %v954 = vpack.c.bf16 %v905, %v905
        %v955 = vpack.c.bf16 %v907, %v906
        %v956 = vpack.c.bf16 %v908, %v908
        %v957 = vpack.c.bf16 %v910, %v909
        %v958 = vpack.c.bf16 %v911, %v911
        %v959 = vpack.c.bf16 %v913, %v912
        %v960 = vpack.c.bf16 %v914, %v914
        %v961 = vpack.c.bf16 %v916, %v915
        %v962 = vpack.c.bf16 %v917, %v917
        %v963 = vpack.c.bf16 %v919, %v918
        %v964 = vpack.c.bf16 %v920, %v920
        %v965 = vpack.c.bf16 %v922, %v921
        %v966 = vpack.c.bf16 %v923, %v923
        %v967 = vpack.c.bf16 %v925, %v924
        %v968 = vpack.c.bf16 %v926, %v926
        %v969 = vpack.c.bf16 %v928, %v927
        %v970 = vpack.c.bf16 %v929, %v929
        %v971 = vpack.c.bf16 %v931, %v930
        %v972 = vpack.c.bf16 %v932, %v932
        %v973 = vpack.c.bf16 %v934, %v933
        %v974 = vpack.c.bf16 %v935, %v935
        %v975 = vpack.c.bf16 %v937, %v936
        %v976 = vpack.c.bf16 %v938, %v938
        %v977 = vpack.c.bf16 %v940, %v939
        %v978 = vpack.c.bf16 %v941, %v941
        %v979 = vpack.c.bf16 %v943, %v942
        %v980 = vpack.c.bf16 %v944, %v944
        %v1017 = vunpack.c.l.b16 %v945
        %v1018 = vunpack.c.h.b16 %v945
        %v1019 = vunpack.c.l.b16 %v946
        %v1020 = vunpack.c.l.b16 %v947
        %v1021 = vunpack.c.h.b16 %v947
        %v1022 = vunpack.c.l.b16 %v948
        %v1023 = vunpack.c.l.b16 %v949
        %v1024 = vunpack.c.h.b16 %v949
        %v1025 = vunpack.c.l.b16 %v950
        %v1026 = vunpack.c.l.b16 %v951
        %v1027 = vunpack.c.h.b16 %v951
        %v1028 = vunpack.c.l.b16 %v952
        %v1029 = vunpack.c.l.b16 %v953
        %v1030 = vunpack.c.h.b16 %v953
        %v1031 = vunpack.c.l.b16 %v954
        %v1032 = vunpack.c.l.b16 %v955
        %v1033 = vunpack.c.h.b16 %v955
        %v1034 = vunpack.c.l.b16 %v956
        %v1035 = vunpack.c.l.b16 %v957
        %v1036 = vunpack.c.h.b16 %v957
        %v1037 = vunpack.c.l.b16 %v958
        %v1038 = vunpack.c.l.b16 %v959
        %v1039 = vunpack.c.h.b16 %v959
        %v1040 = vunpack.c.l.b16 %v960
        %v1041 = vunpack.c.l.b16 %v961
        %v1042 = vunpack.c.h.b16 %v961
        %v1043 = vunpack.c.l.b16 %v962
        %v1044 = vunpack.c.l.b16 %v963
        %v1045 = vunpack.c.h.b16 %v963
        %v1046 = vunpack.c.l.b16 %v964
        %v1047 = vunpack.c.l.b16 %v965
        %v1048 = vunpack.c.h.b16 %v965
        %v1049 = vunpack.c.l.b16 %v966
        %v1050 = vunpack.c.l.b16 %v967
        %v1051 = vunpack.c.h.b16 %v967
        %v1052 = vunpack.c.l.b16 %v968
        %v1053 = vunpack.c.l.b16 %v969
        %v1054 = vunpack.c.h.b16 %v969
        %v1055 = vunpack.c.l.b16 %v970
        %v1056 = vunpack.c.l.b16 %v971
        %v1057 = vunpack.c.h.b16 %v971
        %v1058 = vunpack.c.l.b16 %v972
        %v1059 = vunpack.c.l.b16 %v973
        %v1060 = vunpack.c.h.b16 %v973
        %v1061 = vunpack.c.l.b16 %v974
        %v1062 = vunpack.c.l.b16 %v975
        %v1063 = vunpack.c.h.b16 %v975
        %v1064 = vunpack.c.l.b16 %v976
        %v1065 = vunpack.c.l.b16 %v977
        %v1066 = vunpack.c.h.b16 %v977
        %v1067 = vunpack.c.l.b16 %v978
        %v1068 = vunpack.c.l.b16 %v979
        %v1069 = vunpack.c.h.b16 %v979
        %v1070 = vunpack.c.l.b16 %v980
        %v1071 = vpack.c.b16 %v1017, %v1017
        %v1072 = vpack.c.b16 %v1018, %v1018
        %v1073 = vpack.c.b16 %v1019, %v1019
        %v1074 = vpack.c.b16 %v1020, %v1020
        %v1075 = vpack.c.b16 %v1021, %v1021
        %v1076 = vpack.c.b16 %v1022, %v1022
        %v1077 = vpack.c.b16 %v1023, %v1023
        %v1078 = vpack.c.b16 %v1024, %v1024
        %v1079 = vpack.c.b16 %v1025, %v1025
        %v1080 = vpack.c.b16 %v1026, %v1026
        %v1081 = vpack.c.b16 %v1027, %v1027
        %v1082 = vpack.c.b16 %v1028, %v1028
        %v1083 = vpack.c.b16 %v1029, %v1029
        %v1084 = vpack.c.b16 %v1030, %v1030
        %v1085 = vpack.c.b16 %v1031, %v1031
        %v1086 = vpack.c.b16 %v1032, %v1032
        %v1087 = vpack.c.b16 %v1033, %v1033
        %v1088 = vpack.c.b16 %v1034, %v1034
        %v1089 = vpack.c.b16 %v1035, %v1035
        %v1090 = vpack.c.b16 %v1036, %v1036
        %v1091 = vpack.c.b16 %v1037, %v1037
        %v1092 = vpack.c.b16 %v1038, %v1038
        %v1093 = vpack.c.b16 %v1039, %v1039
        %v1094 = vpack.c.b16 %v1040, %v1040
        %v1095 = vpack.c.b16 %v1041, %v1041
        %v1096 = vpack.c.b16 %v1042, %v1042
        %v1097 = vpack.c.b16 %v1043, %v1043
        %v1098 = vpack.c.b16 %v1044, %v1044
        %v1099 = vpack.c.b16 %v1045, %v1045
        %v1100 = vpack.c.b16 %v1046, %v1046
        %v1101 = vpack.c.b16 %v1047, %v1047
        %v1102 = vpack.c.b16 %v1048, %v1048
        %v1103 = vpack.c.b16 %v1049, %v1049
        %v1104 = vpack.c.b16 %v1050, %v1050
        %v1105 = vpack.c.b16 %v1051, %v1051
        %v1106 = vpack.c.b16 %v1052, %v1052
        %v1107 = vpack.c.b16 %v1053, %v1053
        %v1108 = vpack.c.b16 %v1054, %v1054
        %v1109 = vpack.c.b16 %v1055, %v1055
        %v1110 = vpack.c.b16 %v1056, %v1056
        %v1111 = vpack.c.b16 %v1057, %v1057
        %v1112 = vpack.c.b16 %v1058, %v1058
        %v1113 = vpack.c.b16 %v1059, %v1059
        %v1114 = vpack.c.b16 %v1060, %v1060
        %v1115 = vpack.c.b16 %v1061, %v1061
        %v1116 = vpack.c.b16 %v1062, %v1062
        %v1117 = vpack.c.b16 %v1063, %v1063
        %v1118 = vpack.c.b16 %v1064, %v1064
        %v1119 = vpack.c.b16 %v1065, %v1065
        %v1120 = vpack.c.b16 %v1066, %v1066
        %v1121 = vpack.c.b16 %v1067, %v1067
        %v1122 = vpack.c.b16 %v1068, %v1068
        %v1123 = vpack.c.b16 %v1069, %v1069
        %v1124 = vpack.c.b16 %v1070, %v1070
        %vm1179 = vcmask 257024
        %1180 = vst.msk [vmem:[#allocation2] sm:$0xf] %vm1179, %v1071
        %1181 = vst.msk [vmem:[#allocation2 + $0x4] sm:$0xf] %vm1179, %v1072
        %1182 = vst.msk [vmem:[#allocation2 + $0x8] sm:$0xf] %vm1179, %v1073
        %1183 = vst.msk [vmem:[#allocation2 + $0xc] sm:$0xf] %vm1179, %v1074
        %1184 = vst.msk [vmem:[#allocation2 + $0x10] sm:$0xf] %vm1179, %v1075
        %1185 = vst.msk [vmem:[#allocation2 + $0x14] sm:$0xf] %vm1179, %v1076
        %1186 = vst.msk [vmem:[#allocation2 + $0x18] sm:$0xf] %vm1179, %v1077
        %1187 = vst.msk [vmem:[#allocation2 + $0x1c] sm:$0xf] %vm1179, %v1078
        %1188 = vst.msk [vmem:[#allocation2 + $0x20] sm:$0xf] %vm1179, %v1079
        %1189 = vst.msk [vmem:[#allocation2 + $0x24] sm:$0xf] %vm1179, %v1080
        %1190 = vst.msk [vmem:[#allocation2 + $0x28] sm:$0xf] %vm1179, %v1081
        %1191 = vst.msk [vmem:[#allocation2 + $0x2c] sm:$0xf] %vm1179, %v1082
        %1192 = vst.msk [vmem:[#allocation2 + $0x30] sm:$0xf] %vm1179, %v1083
        %1193 = vst.msk [vmem:[#allocation2 + $0x34] sm:$0xf] %vm1179, %v1084
        %1194 = vst.msk [vmem:[#allocation2 + $0x38] sm:$0xf] %vm1179, %v1085
        %1195 = vst.msk [vmem:[#allocation2 + $0x3c] sm:$0xf] %vm1179, %v1086
        %1196 = vst.msk [vmem:[#allocation2 + $0x40] sm:$0xf] %vm1179, %v1087
        %1197 = vst.msk [vmem:[#allocation2 + $0x44] sm:$0xf] %vm1179, %v1088
        %1198 = vst.msk [vmem:[#allocation2 + $0x48] sm:$0xf] %vm1179, %v1089
        %1199 = vst.msk [vmem:[#allocation2 + $0x4c] sm:$0xf] %vm1179, %v1090
        %1200 = vst.msk [vmem:[#allocation2 + $0x50] sm:$0xf] %vm1179, %v1091
        %1201 = vst.msk [vmem:[#allocation2 + $0x54] sm:$0xf] %vm1179, %v1092
        %1202 = vst.msk [vmem:[#allocation2 + $0x58] sm:$0xf] %vm1179, %v1093
        %1203 = vst.msk [vmem:[#allocation2 + $0x5c] sm:$0xf] %vm1179, %v1094
        %1204 = vst.msk [vmem:[#allocation2 + $0x60] sm:$0xf] %vm1179, %v1095
        %1205 = vst.msk [vmem:[#allocation2 + $0x64] sm:$0xf] %vm1179, %v1096
        %1206 = vst.msk [vmem:[#allocation2 + $0x68] sm:$0xf] %vm1179, %v1097
        %1207 = vst.msk [vmem:[#allocation2 + $0x6c] sm:$0xf] %vm1179, %v1098
        %1208 = vst.msk [vmem:[#allocation2 + $0x70] sm:$0xf] %vm1179, %v1099
        %1209 = vst.msk [vmem:[#allocation2 + $0x74] sm:$0xf] %vm1179, %v1100
        %1210 = vst.msk [vmem:[#allocation2 + $0x78] sm:$0xf] %vm1179, %v1101
        %1211 = vst.msk [vmem:[#allocation2 + $0x7c] sm:$0xf] %vm1179, %v1102
        %1212 = vst.msk [vmem:[#allocation2 + $0x80] sm:$0xf] %vm1179, %v1103
        %1213 = vst.msk [vmem:[#allocation2 + $0x84] sm:$0xf] %vm1179, %v1104
        %1214 = vst.msk [vmem:[#allocation2 + $0x88] sm:$0xf] %vm1179, %v1105
        %1215 = vst.msk [vmem:[#allocation2 + $0x8c] sm:$0xf] %vm1179, %v1106
        %1216 = vst.msk [vmem:[#allocation2 + $0x90] sm:$0xf] %vm1179, %v1107
        %1217 = vst.msk [vmem:[#allocation2 + $0x94] sm:$0xf] %vm1179, %v1108
        %1218 = vst.msk [vmem:[#allocation2 + $0x98] sm:$0xf] %vm1179, %v1109
        %1219 = vst.msk [vmem:[#allocation2 + $0x9c] sm:$0xf] %vm1179, %v1110
        %1220 = vst.msk [vmem:[#allocation2 + $0xa0] sm:$0xf] %vm1179, %v1111
        %1221 = vst.msk [vmem:[#allocation2 + $0xa4] sm:$0xf] %vm1179, %v1112
        %1222 = vst.msk [vmem:[#allocation2 + $0xa8] sm:$0xf] %vm1179, %v1113
        %1223 = vst.msk [vmem:[#allocation2 + $0xac] sm:$0xf] %vm1179, %v1114
        %1224 = vst.msk [vmem:[#allocation2 + $0xb0] sm:$0xf] %vm1179, %v1115
        %1225 = vst.msk [vmem:[#allocation2 + $0xb4] sm:$0xf] %vm1179, %v1116
        %1226 = vst.msk [vmem:[#allocation2 + $0xb8] sm:$0xf] %vm1179, %v1117
        %1227 = vst.msk [vmem:[#allocation2 + $0xbc] sm:$0xf] %vm1179, %v1118
        %1228 = vst.msk [vmem:[#allocation2 + $0xc0] sm:$0xf] %vm1179, %v1119
        %1229 = vst.msk [vmem:[#allocation2 + $0xc4] sm:$0xf] %vm1179, %v1120
        %1230 = vst.msk [vmem:[#allocation2 + $0xc8] sm:$0xf] %vm1179, %v1121
        %1231 = vst.msk [vmem:[#allocation2 + $0xcc] sm:$0xf] %vm1179, %v1122
        %1232 = vst.msk [vmem:[#allocation2 + $0xd0] sm:$0xf] %vm1179, %v1123
        %1233 = vst.msk [vmem:[#allocation2 + $0xd4] sm:$0xf] %vm1179, %v1124
        %v1234 = vld [vmem:[%s4] sm:$0x1]
        %v1236 = vlaneseq
        %v1237 = vshrl.u32 %v1236, 7
        %v1238 = vsub.s32 0, %v1237
        %v1239 = vrot.slane %v1234, %v1238
        %v1241 = vld [vmem:[#allocation2] sm:$0xf]
        %v1242 = vld [vmem:[#allocation2 + $0x4] sm:$0xf]
        %v1243 = vld [vmem:[#allocation2 + $0xc] sm:$0xf]
        %v1244 = vld [vmem:[#allocation2 + $0x10] sm:$0xf]
        %v1245 = vld [vmem:[#allocation2 + $0x18] sm:$0xf]
        %v1246 = vld [vmem:[#allocation2 + $0x1c] sm:$0xf]
        %v1247 = vld [vmem:[#allocation2 + $0x24] sm:$0xf]
        %v1248 = vld [vmem:[#allocation2 + $0x28] sm:$0xf]
        %v1249 = vld [vmem:[#allocation2 + $0x30] sm:$0xf]
        %v1250 = vld [vmem:[#allocation2 + $0x34] sm:$0xf]
        %v1251 = vld [vmem:[#allocation2 + $0x3c] sm:$0xf]
        %v1252 = vld [vmem:[#allocation2 + $0x40] sm:$0xf]
        %v1253 = vld [vmem:[#allocation2 + $0x48] sm:$0xf]
        %v1254 = vld [vmem:[#allocation2 + $0x4c] sm:$0xf]
        %v1255 = vld [vmem:[#allocation2 + $0x54] sm:$0xf]
        %v1256 = vld [vmem:[#allocation2 + $0x58] sm:$0xf]
        %v1257 = vld [vmem:[#allocation2 + $0x60] sm:$0xf]
        %v1258 = vld [vmem:[#allocation2 + $0x64] sm:$0xf]
        %v1259 = vld [vmem:[#allocation2 + $0x6c] sm:$0xf]
        %v1260 = vld [vmem:[#allocation2 + $0x70] sm:$0xf]
        %v1261 = vld [vmem:[#allocation2 + $0x78] sm:$0xf]
        %v1262 = vld [vmem:[#allocation2 + $0x7c] sm:$0xf]
        %v1263 = vld [vmem:[#allocation2 + $0x84] sm:$0xf]
        %v1264 = vld [vmem:[#allocation2 + $0x88] sm:$0xf]
        %v1265 = vld [vmem:[#allocation2 + $0x90] sm:$0xf]
        %v1266 = vld [vmem:[#allocation2 + $0x94] sm:$0xf]
        %v1267 = vld [vmem:[#allocation2 + $0x9c] sm:$0xf]
        %v1268 = vld [vmem:[#allocation2 + $0xa0] sm:$0xf]
        %v1269 = vld [vmem:[#allocation2 + $0xa8] sm:$0xf]
        %v1270 = vld [vmem:[#allocation2 + $0xac] sm:$0xf]
        %v1271 = vld [vmem:[#allocation2 + $0xb4] sm:$0xf]
        %v1272 = vld [vmem:[#allocation2 + $0xb8] sm:$0xf]
        %v1273 = vld [vmem:[%s3] sm:$0xf]
        %v1274 = vld [vmem:[%s3 + $0x4] sm:$0xf]
        %v1275 = vld [vmem:[%s3 + $0x8] sm:$0xf]
        %v1276 = vld [vmem:[%s3 + $0xc] sm:$0xf]
        %v1309 = vunpack.c.l.b16 %v1241
        %v1310 = vunpack.c.l.b16 %v1242
        %v1311 = vunpack.c.l.b16 %v1243
        %v1312 = vunpack.c.l.b16 %v1244
        %v1313 = vunpack.c.l.b16 %v1245
        %v1314 = vunpack.c.l.b16 %v1246
        %v1315 = vunpack.c.l.b16 %v1247
        %v1316 = vunpack.c.l.b16 %v1248
        %v1317 = vunpack.c.l.b16 %v1249
        %v1318 = vunpack.c.l.b16 %v1250
        %v1319 = vunpack.c.l.b16 %v1251
        %v1320 = vunpack.c.l.b16 %v1252
        %v1321 = vunpack.c.l.b16 %v1253
        %v1322 = vunpack.c.l.b16 %v1254
        %v1323 = vunpack.c.l.b16 %v1255
        %v1324 = vunpack.c.l.b16 %v1256
        %v1325 = vunpack.c.l.b16 %v1257
        %v1326 = vunpack.c.l.b16 %v1258
        %v1327 = vunpack.c.l.b16 %v1259
        %v1328 = vunpack.c.l.b16 %v1260
        %v1329 = vunpack.c.l.b16 %v1261
        %v1330 = vunpack.c.l.b16 %v1262
        %v1331 = vunpack.c.l.b16 %v1263
        %v1332 = vunpack.c.l.b16 %v1264
        %v1333 = vunpack.c.l.b16 %v1265
        %v1334 = vunpack.c.l.b16 %v1266
        %v1335 = vunpack.c.l.b16 %v1267
        %v1336 = vunpack.c.l.b16 %v1268
        %v1337 = vunpack.c.l.b16 %v1269
        %v1338 = vunpack.c.l.b16 %v1270
        %v1339 = vunpack.c.l.b16 %v1271
        %v1340 = vunpack.c.l.b16 %v1272
        %v1341 = vpack.c.b16 %v1310, %v1309
        %v1342 = vpack.c.b16 %v1312, %v1311
        %v1343 = vpack.c.b16 %v1314, %v1313
        %v1344 = vpack.c.b16 %v1316, %v1315
        %v1345 = vpack.c.b16 %v1318, %v1317
        %v1346 = vpack.c.b16 %v1320, %v1319
        %v1347 = vpack.c.b16 %v1322, %v1321
        %v1348 = vpack.c.b16 %v1324, %v1323
        %v1349 = vpack.c.b16 %v1326, %v1325
        %v1350 = vpack.c.b16 %v1328, %v1327
        %v1351 = vpack.c.b16 %v1330, %v1329
        %v1352 = vpack.c.b16 %v1332, %v1331
        %v1353 = vpack.c.b16 %v1334, %v1333
        %v1354 = vpack.c.b16 %v1336, %v1335
        %v1355 = vpack.c.b16 %v1338, %v1337
        %v1356 = vpack.c.b16 %v1340, %v1339
        %v1361 = vunpack.c.l.b16 %v1273
        %v1362 = vunpack.c.l.b16 %v1274
        %v1363 = vunpack.c.l.b16 %v1275
        %v1364 = vunpack.c.l.b16 %v1276
        %v1365 = vpack.c.b16 %v1362, %v1361
        %v1366 = vpack.c.b16 %v1364, %v1363
        %vm1369 = vcmask 261120
        %v1371 = vsel %vm1369, %v1341, 0
        %v1374 = vsel %vm1369, %v1342, 0
        %v1377 = vsel %vm1369, %v1343, 0
        %v1380 = vsel %vm1369, %v1344, 0
        %v1383 = vsel %vm1369, %v1345, 0
        %v1386 = vsel %vm1369, %v1346, 0
        %v1389 = vsel %vm1369, %v1347, 0
        %v1392 = vsel %vm1369, %v1348, 0
        %v1395 = vsel %vm1369, %v1349, 0
        %v1398 = vsel %vm1369, %v1350, 0
        %v1401 = vsel %vm1369, %v1351, 0
        %v1404 = vsel %vm1369, %v1352, 0
        %v1407 = vsel %vm1369, %v1353, 0
        %v1410 = vsel %vm1369, %v1354, 0
        %v1413 = vsel %vm1369, %v1355, 0
        %v1416 = vsel %vm1369, %v1356, 0
        %1418 = vmatprep.subr.bf16.mxu0 0
        %1419 = vmatpush1.bf16.msra.mxu0 %v1365
        %1420 = vmatprep.subr.bf16.mxu0 0
        %1421 = vmatpush1.bf16.msra.mxu0 %v1366
        %1422 = vmatprep.subr.bf16.mxu0 0
        %1423 = vmatpush1.bf16.msra.mxu0 0
        %1424 = vmatprep.subr.bf16.mxu0 0
        %1425 = vmatpush1.bf16.msra.mxu0 0
        %1426 = vmatprep.subr.bf16.mxu0 0
        %1427 = vmatpush1.bf16.msra.mxu0 0
        %1428 = vmatprep.subr.bf16.mxu0 0
        %1429 = vmatpush1.bf16.msra.mxu0 0
        %1430 = vmatprep.subr.bf16.mxu0 0
        %1431 = vmatpush1.bf16.msra.mxu0 0
        %1432 = vmatprep.subr.bf16.mxu0 0
        %1433 = vmatpush1.bf16.msra.mxu0 0
        %1434 = vmatprep.subr.bf16.mxu0 0
        %1435 = vmatpush1.bf16.msra.mxu0 0
        %1436 = vmatprep.subr.bf16.mxu0 0
        %1437 = vmatpush1.bf16.msra.mxu0 0
        %1438 = vmatprep.subr.bf16.mxu0 0
        %1439 = vmatpush1.bf16.msra.mxu0 0
        %1440 = vmatprep.subr.bf16.mxu0 0
        %1441 = vmatpush1.bf16.msra.mxu0 0
        %1442 = vmatprep.subr.bf16.mxu0 0
        %1443 = vmatpush1.bf16.msra.mxu0 0
        %1444 = vmatprep.subr.bf16.mxu0 0
        %1445 = vmatpush1.bf16.msra.mxu0 0
        %1446 = vmatprep.subr.bf16.mxu0 0
        %1447 = vmatpush1.bf16.msra.mxu0 0
        %1448 = vmatprep.subr.bf16.mxu0 0
        %1449 = vmatpush1.bf16.msra.mxu0 0
        %1450 = vmatprep.mubr.bf16.mxu0 0
        %1451 = vmatmul.mubr.bf16.gmra.mrb[0].mxu0 %v1371
        %v1452 = vpop.f32.mrb[0].mxu0
        %v1453 = vadd.f32 0.0, %v1452
        %v1454 = vpop.f32.mrb[0].mxu0
        %v1455 = vpop.f32.mrb[0].mxu0
        %v1456 = vadd.f32 0.0, %v1455
        %v1457 = vpop.f32.mrb[0].mxu0
        %1458 = vmatprep.mubr.bf16.mxu0 0
        %1459 = vmatmul.mubr.bf16.gmra.mrb[0].mxu0 %v1374
        %v1460 = vpop.f32.mrb[0].mxu0
        %v1461 = vadd.f32 0.0, %v1460
        %v1462 = vpop.f32.mrb[0].mxu0
        %v1463 = vpop.f32.mrb[0].mxu0
        %v1464 = vadd.f32 0.0, %v1463
        %v1465 = vpop.f32.mrb[0].mxu0
        %1466 = vmatprep.mubr.bf16.mxu0 0
        %1467 = vmatmul.mubr.bf16.gmra.mrb[0].mxu0 %v1377
        %v1468 = vpop.f32.mrb[0].mxu0
        %v1469 = vadd.f32 0.0, %v1468
        %v1470 = vpop.f32.mrb[0].mxu0
        %v1471 = vpop.f32.mrb[0].mxu0
        %v1472 = vadd.f32 0.0, %v1471
        %v1473 = vpop.f32.mrb[0].mxu0
        %1474 = vmatprep.mubr.bf16.mxu0 0
        %1475 = vmatmul.mubr.bf16.gmra.mrb[0].mxu0 %v1380
        %v1476 = vpop.f32.mrb[0].mxu0
        %v1477 = vadd.f32 0.0, %v1476
        %v1478 = vpop.f32.mrb[0].mxu0
        %v1479 = vpop.f32.mrb[0].mxu0
        %v1480 = vadd.f32 0.0, %v1479
        %v1481 = vpop.f32.mrb[0].mxu0
        %1482 = vmatprep.mubr.bf16.mxu0 0
        %1483 = vmatmul.mubr.bf16.gmra.mrb[0].mxu0 %v1383
        %v1484 = vpop.f32.mrb[0].mxu0
        %v1485 = vadd.f32 0.0, %v1484
        %v1486 = vpop.f32.mrb[0].mxu0
        %v1487 = vpop.f32.mrb[0].mxu0
        %v1488 = vadd.f32 0.0, %v1487
        %v1489 = vpop.f32.mrb[0].mxu0
        %1490 = vmatprep.mubr.bf16.mxu0 0
        %1491 = vmatmul.mubr.bf16.gmra.mrb[0].mxu0 %v1386
        %v1492 = vpop.f32.mrb[0].mxu0
        %v1493 = vadd.f32 0.0, %v1492
        %v1494 = vpop.f32.mrb[0].mxu0
        %v1495 = vpop.f32.mrb[0].mxu0
        %v1496 = vadd.f32 0.0, %v1495
        %v1497 = vpop.f32.mrb[0].mxu0
        %1498 = vmatprep.mubr.bf16.mxu0 0
        %1499 = vmatmul.mubr.bf16.gmra.mrb[0].mxu0 %v1389
        %v1500 = vpop.f32.mrb[0].mxu0
        %v1501 = vadd.f32 0.0, %v1500
        %v1502 = vpop.f32.mrb[0].mxu0
        %v1503 = vpop.f32.mrb[0].mxu0
        %v1504 = vadd.f32 0.0, %v1503
        %v1505 = vpop.f32.mrb[0].mxu0
        %1506 = vmatprep.mubr.bf16.mxu0 0
        %1507 = vmatmul.mubr.bf16.gmra.mrb[0].mxu0 %v1392
        %v1508 = vpop.f32.mrb[0].mxu0
        %v1509 = vadd.f32 0.0, %v1508
        %v1510 = vpop.f32.mrb[0].mxu0
        %v1511 = vpop.f32.mrb[0].mxu0
        %v1512 = vadd.f32 0.0, %v1511
        %v1513 = vpop.f32.mrb[0].mxu0
        %1514 = vmatprep.mubr.bf16.mxu0 0
        %1515 = vmatmul.mubr.bf16.gmra.mrb[0].mxu0 %v1395
        %v1516 = vpop.f32.mrb[0].mxu0
        %v1517 = vadd.f32 0.0, %v1516
        %v1518 = vpop.f32.mrb[0].mxu0
        %v1519 = vpop.f32.mrb[0].mxu0
        %v1520 = vadd.f32 0.0, %v1519
        %v1521 = vpop.f32.mrb[0].mxu0
        %1522 = vmatprep.mubr.bf16.mxu0 0
        %1523 = vmatmul.mubr.bf16.gmra.mrb[0].mxu0 %v1398
        %v1524 = vpop.f32.mrb[0].mxu0
        %v1525 = vadd.f32 0.0, %v1524
        %v1526 = vpop.f32.mrb[0].mxu0
        %v1527 = vpop.f32.mrb[0].mxu0
        %v1528 = vadd.f32 0.0, %v1527
        %v1529 = vpop.f32.mrb[0].mxu0
        %1530 = vmatprep.mubr.bf16.mxu0 0
        %1531 = vmatmul.mubr.bf16.gmra.mrb[0].mxu0 %v1401
        %v1532 = vpop.f32.mrb[0].mxu0
        %v1533 = vadd.f32 0.0, %v1532
        %v1534 = vpop.f32.mrb[0].mxu0
        %v1535 = vpop.f32.mrb[0].mxu0
        %v1536 = vadd.f32 0.0, %v1535
        %v1537 = vpop.f32.mrb[0].mxu0
        %1538 = vmatprep.mubr.bf16.mxu0 0
        %1539 = vmatmul.mubr.bf16.gmra.mrb[0].mxu0 %v1404
        %v1540 = vpop.f32.mrb[0].mxu0
        %v1541 = vadd.f32 0.0, %v1540
        %v1542 = vpop.f32.mrb[0].mxu0
        %v1543 = vpop.f32.mrb[0].mxu0
        %v1544 = vadd.f32 0.0, %v1543
        %v1545 = vpop.f32.mrb[0].mxu0
        %1546 = vmatprep.mubr.bf16.mxu0 0
        %1547 = vmatmul.mubr.bf16.gmra.mrb[0].mxu0 %v1407
        %v1548 = vpop.f32.mrb[0].mxu0
        %v1549 = vadd.f32 0.0, %v1548
        %v1550 = vpop.f32.mrb[0].mxu0
        %v1551 = vpop.f32.mrb[0].mxu0
        %v1552 = vadd.f32 0.0, %v1551
        %v1553 = vpop.f32.mrb[0].mxu0
        %1554 = vmatprep.mubr.bf16.mxu0 0
        %1555 = vmatmul.mubr.bf16.gmra.mrb[0].mxu0 %v1410
        %v1556 = vpop.f32.mrb[0].mxu0
        %v1557 = vadd.f32 0.0, %v1556
        %v1558 = vpop.f32.mrb[0].mxu0
        %v1559 = vpop.f32.mrb[0].mxu0
        %v1560 = vadd.f32 0.0, %v1559
        %v1561 = vpop.f32.mrb[0].mxu0
        %1562 = vmatprep.mubr.bf16.mxu0 0
        %1563 = vmatmul.mubr.bf16.gmra.mrb[0].mxu0 %v1413
        %v1564 = vpop.f32.mrb[0].mxu0
        %v1565 = vadd.f32 0.0, %v1564
        %v1566 = vpop.f32.mrb[0].mxu0
        %v1567 = vpop.f32.mrb[0].mxu0
        %v1568 = vadd.f32 0.0, %v1567
        %v1569 = vpop.f32.mrb[0].mxu0
        %1570 = vmatprep.mubr.bf16.mxu0 0
        %1571 = vmatmul.mubr.bf16.gmra.mrb[0].mxu0 %v1416
        %v1572 = vpop.f32.mrb[0].mxu0
        %v1573 = vadd.f32 0.0, %v1572
        %v1574 = vpop.f32.mrb[0].mxu0
        %v1575 = vpop.f32.mrb[0].mxu0
        %v1576 = vadd.f32 0.0, %v1575
        %v1577 = vpop.f32.mrb[0].mxu0
        %1578 = vdwg.mxu0
        %v1579 = vadd.f32 %v1239, %v1453
        %v1580 = vadd.f32 %v1239, %v1456
        %v1581 = vadd.f32 %v1239, %v1461
        %v1582 = vadd.f32 %v1239, %v1464
        %v1583 = vadd.f32 %v1239, %v1469
        %v1584 = vadd.f32 %v1239, %v1472
        %v1585 = vadd.f32 %v1239, %v1477
        %v1586 = vadd.f32 %v1239, %v1480
        %v1587 = vadd.f32 %v1239, %v1485
        %v1588 = vadd.f32 %v1239, %v1488
        %v1589 = vadd.f32 %v1239, %v1493
        %v1590 = vadd.f32 %v1239, %v1496
        %v1591 = vadd.f32 %v1239, %v1501
        %v1592 = vadd.f32 %v1239, %v1504
        %v1593 = vadd.f32 %v1239, %v1509
        %v1594 = vadd.f32 %v1239, %v1512
        %v1595 = vadd.f32 %v1239, %v1517
        %v1596 = vadd.f32 %v1239, %v1520
        %v1597 = vadd.f32 %v1239, %v1525
        %v1598 = vadd.f32 %v1239, %v1528
        %v1599 = vadd.f32 %v1239, %v1533
        %v1600 = vadd.f32 %v1239, %v1536
        %v1601 = vadd.f32 %v1239, %v1541
        %v1602 = vadd.f32 %v1239, %v1544
        %v1603 = vadd.f32 %v1239, %v1549
        %v1604 = vadd.f32 %v1239, %v1552
        %v1605 = vadd.f32 %v1239, %v1557
        %v1606 = vadd.f32 %v1239, %v1560
        %v1607 = vadd.f32 %v1239, %v1565
        %v1608 = vadd.f32 %v1239, %v1568
        %v1609 = vadd.f32 %v1239, %v1573
        %v1610 = vadd.f32 %v1239, %v1576
        %v1611 = vld [vmem:[#allocation2] sm:$0xf]
        %v1612 = vld [vmem:[#allocation2 + $0x4] sm:$0xf]
        %v1613 = vld [vmem:[#allocation2 + $0x8] sm:$0x1]
        %v1614 = vld [vmem:[#allocation2 + $0xc] sm:$0xf]
        %v1615 = vld [vmem:[#allocation2 + $0x10] sm:$0xf]
        %v1616 = vld [vmem:[#allocation2 + $0x14] sm:$0x1]
        %v1617 = vld [vmem:[#allocation2 + $0x18] sm:$0xf]
        %v1618 = vld [vmem:[#allocation2 + $0x1c] sm:$0xf]
        %v1619 = vld [vmem:[#allocation2 + $0x20] sm:$0x1]
        %v1620 = vld [vmem:[#allocation2 + $0x24] sm:$0xf]
        %v1621 = vld [vmem:[#allocation2 + $0x28] sm:$0xf]
        %v1622 = vld [vmem:[#allocation2 + $0x2c] sm:$0x1]
        %v1623 = vld [vmem:[#allocation2 + $0x30] sm:$0xf]
        %v1624 = vld [vmem:[#allocation2 + $0x34] sm:$0xf]
        %v1625 = vld [vmem:[#allocation2 + $0x38] sm:$0x1]
        %v1626 = vld [vmem:[#allocation2 + $0x3c] sm:$0xf]
        %v1627 = vld [vmem:[#allocation2 + $0x40] sm:$0xf]
        %v1628 = vld [vmem:[#allocation2 + $0x44] sm:$0x1]
        %v1629 = vld [vmem:[#allocation2 + $0x48] sm:$0xf]
        %v1630 = vld [vmem:[#allocation2 + $0x4c] sm:$0xf]
        %v1631 = vld [vmem:[#allocation2 + $0x50] sm:$0x1]
        %v1632 = vld [vmem:[#allocation2 + $0x54] sm:$0xf]
        %v1633 = vld [vmem:[#allocation2 + $0x58] sm:$0xf]
        %v1634 = vld [vmem:[#allocation2 + $0x5c] sm:$0x1]
        %v1635 = vld [vmem:[#allocation2 + $0x60] sm:$0xf]
        %v1636 = vld [vmem:[#allocation2 + $0x64] sm:$0xf]
        %v1637 = vld [vmem:[#allocation2 + $0x68] sm:$0x1]
        %v1638 = vld [vmem:[#allocation2 + $0x6c] sm:$0xf]
        %v1639 = vld [vmem:[#allocation2 + $0x70] sm:$0xf]
        %v1640 = vld [vmem:[#allocation2 + $0x74] sm:$0x1]
        %v1641 = vld [vmem:[#allocation2 + $0x78] sm:$0xf]
        %v1642 = vld [vmem:[#allocation2 + $0x7c] sm:$0xf]
        %v1643 = vld [vmem:[#allocation2 + $0x80] sm:$0x1]
        %v1644 = vld [vmem:[#allocation2 + $0x84] sm:$0xf]
        %v1645 = vld [vmem:[#allocation2 + $0x88] sm:$0xf]
        %v1646 = vld [vmem:[#allocation2 + $0x8c] sm:$0x1]
        %v1647 = vld [vmem:[#allocation2 + $0x90] sm:$0xf]
        %v1648 = vld [vmem:[#allocation2 + $0x94] sm:$0xf]
        %v1649 = vld [vmem:[#allocation2 + $0x98] sm:$0x1]
        %v1650 = vld [vmem:[#allocation2 + $0x9c] sm:$0xf]
        %v1651 = vld [vmem:[#allocation2 + $0xa0] sm:$0xf]
        %v1652 = vld [vmem:[#allocation2 + $0xa4] sm:$0x1]
        %v1653 = vld [vmem:[#allocation2 + $0xa8] sm:$0xf]
        %v1654 = vld [vmem:[#allocation2 + $0xac] sm:$0xf]
        %v1655 = vld [vmem:[#allocation2 + $0xb0] sm:$0x1]
        %v1656 = vld [vmem:[#allocation2 + $0xb4] sm:$0xf]
        %v1657 = vld [vmem:[#allocation2 + $0xb8] sm:$0xf]
        %v1658 = vld [vmem:[#allocation2 + $0xbc] sm:$0x1]
        %vm1659 = vsmask.f32 3328
        %vm1660 = vsmask.f32 7440
        %vm1661 = vmor %vm1659, %vm1660
        %v1663 = vshrl.u32 %v1611, 16
        %v1665 = vrot.slane %v1663, 4
        %v1666 = vshll.u32 %v1611, 16
        %v1668 = vrot.slane %v1666, 5
        %v1669 = vor.u32 %v1665, %v1668
        %v1670 = vrot.slane %v1669, 4
        %v1672 = vshll.u32 %v1612, 16
        %v1674 = vrot.slane %v1672, 5
        %v1675 = vsel %vm1661, %v1670, %v1674
        %v1676 = vshrl.u32 %v1612, 16
        %v1678 = vrot.slane %v1676, 4
        %v1679 = vor.u32 %v1678, %v1674
        %v1680 = vrot.slane %v1679, 4
        %v1682 = vshll.u32 %v1613, 16
        %v1684 = vrot.slane %v1682, 5
        %v1685 = vsel %vm1661, %v1680, %v1684
        %v1687 = vshrl.u32 %v1614, 16
        %v1689 = vrot.slane %v1687, 4
        %v1690 = vshll.u32 %v1614, 16
        %v1692 = vrot.slane %v1690, 5
        %v1693 = vor.u32 %v1689, %v1692
        %v1694 = vrot.slane %v1693, 4
        %v1696 = vshll.u32 %v1615, 16
        %v1698 = vrot.slane %v1696, 5
        %v1699 = vsel %vm1661, %v1694, %v1698
        %v1700 = vshrl.u32 %v1615, 16
        %v1702 = vrot.slane %v1700, 4
        %v1703 = vor.u32 %v1702, %v1698
        %v1704 = vrot.slane %v1703, 4
        %v1706 = vshll.u32 %v1616, 16
        %v1708 = vrot.slane %v1706, 5
        %v1709 = vsel %vm1661, %v1704, %v1708
        %v1711 = vshrl.u32 %v1617, 16
        %v1713 = vrot.slane %v1711, 4
        %v1714 = vshll.u32 %v1617, 16
        %v1716 = vrot.slane %v1714, 5
        %v1717 = vor.u32 %v1713, %v1716
        %v1718 = vrot.slane %v1717, 4
        %v1720 = vshll.u32 %v1618, 16
        %v1722 = vrot.slane %v1720, 5
        %v1723 = vsel %vm1661, %v1718, %v1722
        %v1724 = vshrl.u32 %v1618, 16
        %v1726 = vrot.slane %v1724, 4
        %v1727 = vor.u32 %v1726, %v1722
        %v1728 = vrot.slane %v1727, 4
        %v1730 = vshll.u32 %v1619, 16
        %v1732 = vrot.slane %v1730, 5
        %v1733 = vsel %vm1661, %v1728, %v1732
        %v1735 = vshrl.u32 %v1620, 16
        %v1737 = vrot.slane %v1735, 4
        %v1738 = vshll.u32 %v1620, 16
        %v1740 = vrot.slane %v1738, 5
        %v1741 = vor.u32 %v1737, %v1740
        %v1742 = vrot.slane %v1741, 4
        %v1744 = vshll.u32 %v1621, 16
        %v1746 = vrot.slane %v1744, 5
        %v1747 = vsel %vm1661, %v1742, %v1746
        %v1748 = vshrl.u32 %v1621, 16
        %v1750 = vrot.slane %v1748, 4
        %v1751 = vor.u32 %v1750, %v1746
        %v1752 = vrot.slane %v1751, 4
        %v1754 = vshll.u32 %v1622, 16
        %v1756 = vrot.slane %v1754, 5
        %v1757 = vsel %vm1661, %v1752, %v1756
        %v1759 = vshrl.u32 %v1623, 16
        %v1761 = vrot.slane %v1759, 4
        %v1762 = vshll.u32 %v1623, 16
        %v1764 = vrot.slane %v1762, 5
        %v1765 = vor.u32 %v1761, %v1764
        %v1766 = vrot.slane %v1765, 4
        %v1768 = vshll.u32 %v1624, 16
        %v1770 = vrot.slane %v1768, 5
        %v1771 = vsel %vm1661, %v1766, %v1770
        %v1772 = vshrl.u32 %v1624, 16
        %v1774 = vrot.slane %v1772, 4
        %v1775 = vor.u32 %v1774, %v1770
        %v1776 = vrot.slane %v1775, 4
        %v1778 = vshll.u32 %v1625, 16
        %v1780 = vrot.slane %v1778, 5
        %v1781 = vsel %vm1661, %v1776, %v1780
        %v1783 = vshrl.u32 %v1626, 16
        %v1785 = vrot.slane %v1783, 4
        %v1786 = vshll.u32 %v1626, 16
        %v1788 = vrot.slane %v1786, 5
        %v1789 = vor.u32 %v1785, %v1788
        %v1790 = vrot.slane %v1789, 4
        %v1792 = vshll.u32 %v1627, 16
        %v1794 = vrot.slane %v1792, 5
        %v1795 = vsel %vm1661, %v1790, %v1794
        %v1796 = vshrl.u32 %v1627, 16
        %v1798 = vrot.slane %v1796, 4
        %v1799 = vor.u32 %v1798, %v1794
        %v1800 = vrot.slane %v1799, 4
        %v1802 = vshll.u32 %v1628, 16
        %v1804 = vrot.slane %v1802, 5
        %v1805 = vsel %vm1661, %v1800, %v1804
        %v1807 = vshrl.u32 %v1629, 16
        %v1809 = vrot.slane %v1807, 4
        %v1810 = vshll.u32 %v1629, 16
        %v1812 = vrot.slane %v1810, 5
        %v1813 = vor.u32 %v1809, %v1812
        %v1814 = vrot.slane %v1813, 4
        %v1816 = vshll.u32 %v1630, 16
        %v1818 = vrot.slane %v1816, 5
        %v1819 = vsel %vm1661, %v1814, %v1818
        %v1820 = vshrl.u32 %v1630, 16
        %v1822 = vrot.slane %v1820, 4
        %v1823 = vor.u32 %v1822, %v1818
        %v1824 = vrot.slane %v1823, 4
        %v1826 = vshll.u32 %v1631, 16
        %v1828 = vrot.slane %v1826, 5
        %v1829 = vsel %vm1661, %v1824, %v1828
        %v1831 = vshrl.u32 %v1632, 16
        %v1833 = vrot.slane %v1831, 4
        %v1834 = vshll.u32 %v1632, 16
        %v1836 = vrot.slane %v1834, 5
        %v1837 = vor.u32 %v1833, %v1836
        %v1838 = vrot.slane %v1837, 4
        %v1840 = vshll.u32 %v1633, 16
        %v1842 = vrot.slane %v1840, 5
        %v1843 = vsel %vm1661, %v1838, %v1842
        %v1844 = vshrl.u32 %v1633, 16
        %v1846 = vrot.slane %v1844, 4
        %v1847 = vor.u32 %v1846, %v1842
        %v1848 = vrot.slane %v1847, 4
        %v1850 = vshll.u32 %v1634, 16
        %v1852 = vrot.slane %v1850, 5
        %v1853 = vsel %vm1661, %v1848, %v1852
        %v1855 = vshrl.u32 %v1635, 16
        %v1857 = vrot.slane %v1855, 4
        %v1858 = vshll.u32 %v1635, 16
        %v1860 = vrot.slane %v1858, 5
        %v1861 = vor.u32 %v1857, %v1860
        %v1862 = vrot.slane %v1861, 4
        %v1864 = vshll.u32 %v1636, 16
        %v1866 = vrot.slane %v1864, 5
        %v1867 = vsel %vm1661, %v1862, %v1866
        %v1868 = vshrl.u32 %v1636, 16
        %v1870 = vrot.slane %v1868, 4
        %v1871 = vor.u32 %v1870, %v1866
        %v1872 = vrot.slane %v1871, 4
        %v1874 = vshll.u32 %v1637, 16
        %v1876 = vrot.slane %v1874, 5
        %v1877 = vsel %vm1661, %v1872, %v1876
        %v1879 = vshrl.u32 %v1638, 16
        %v1881 = vrot.slane %v1879, 4
        %v1882 = vshll.u32 %v1638, 16
        %v1884 = vrot.slane %v1882, 5
        %v1885 = vor.u32 %v1881, %v1884
        %v1886 = vrot.slane %v1885, 4
        %v1888 = vshll.u32 %v1639, 16
        %v1890 = vrot.slane %v1888, 5
        %v1891 = vsel %vm1661, %v1886, %v1890
        %v1892 = vshrl.u32 %v1639, 16
        %v1894 = vrot.slane %v1892, 4
        %v1895 = vor.u32 %v1894, %v1890
        %v1896 = vrot.slane %v1895, 4
        %v1898 = vshll.u32 %v1640, 16
        %v1900 = vrot.slane %v1898, 5
        %v1901 = vsel %vm1661, %v1896, %v1900
        %v1903 = vshrl.u32 %v1641, 16
        %v1905 = vrot.slane %v1903, 4
        %v1906 = vshll.u32 %v1641, 16
        %v1908 = vrot.slane %v1906, 5
        %v1909 = vor.u32 %v1905, %v1908
        %v1910 = vrot.slane %v1909, 4
        %v1912 = vshll.u32 %v1642, 16
        %v1914 = vrot.slane %v1912, 5
        %v1915 = vsel %vm1661, %v1910, %v1914
        %v1916 = vshrl.u32 %v1642, 16
        %v1918 = vrot.slane %v1916, 4
        %v1919 = vor.u32 %v1918, %v1914
        %v1920 = vrot.slane %v1919, 4
        %v1922 = vshll.u32 %v1643, 16
        %v1924 = vrot.slane %v1922, 5
        %v1925 = vsel %vm1661, %v1920, %v1924
        %v1927 = vshrl.u32 %v1644, 16
        %v1929 = vrot.slane %v1927, 4
        %v1930 = vshll.u32 %v1644, 16
        %v1932 = vrot.slane %v1930, 5
        %v1933 = vor.u32 %v1929, %v1932
        %v1934 = vrot.slane %v1933, 4
        %v1936 = vshll.u32 %v1645, 16
        %v1938 = vrot.slane %v1936, 5
        %v1939 = vsel %vm1661, %v1934, %v1938
        %v1940 = vshrl.u32 %v1645, 16
        %v1942 = vrot.slane %v1940, 4
        %v1943 = vor.u32 %v1942, %v1938
        %v1944 = vrot.slane %v1943, 4
        %v1946 = vshll.u32 %v1646, 16
        %v1948 = vrot.slane %v1946, 5
        %v1949 = vsel %vm1661, %v1944, %v1948
        %v1951 = vshrl.u32 %v1647, 16
        %v1953 = vrot.slane %v1951, 4
        %v1954 = vshll.u32 %v1647, 16
        %v1956 = vrot.slane %v1954, 5
        %v1957 = vor.u32 %v1953, %v1956
        %v1958 = vrot.slane %v1957, 4
        %v1960 = vshll.u32 %v1648, 16
        %v1962 = vrot.slane %v1960, 5
        %v1963 = vsel %vm1661, %v1958, %v1962
        %v1964 = vshrl.u32 %v1648, 16
        %v1966 = vrot.slane %v1964, 4
        %v1967 = vor.u32 %v1966, %v1962
        %v1968 = vrot.slane %v1967, 4
        %v1970 = vshll.u32 %v1649, 16
        %v1972 = vrot.slane %v1970, 5
        %v1973 = vsel %vm1661, %v1968, %v1972
        %v1975 = vshrl.u32 %v1650, 16
        %v1977 = vrot.slane %v1975, 4
        %v1978 = vshll.u32 %v1650, 16
        %v1980 = vrot.slane %v1978, 5
        %v1981 = vor.u32 %v1977, %v1980
        %v1982 = vrot.slane %v1981, 4
        %v1984 = vshll.u32 %v1651, 16
        %v1986 = vrot.slane %v1984, 5
        %v1987 = vsel %vm1661, %v1982, %v1986
        %v1988 = vshrl.u32 %v1651, 16
        %v1990 = vrot.slane %v1988, 4
        %v1991 = vor.u32 %v1990, %v1986
        %v1992 = vrot.slane %v1991, 4
        %v1994 = vshll.u32 %v1652, 16
        %v1996 = vrot.slane %v1994, 5
        %v1997 = vsel %vm1661, %v1992, %v1996
        %v1999 = vshrl.u32 %v1653, 16
        %v2001 = vrot.slane %v1999, 4
        %v2002 = vshll.u32 %v1653, 16
        %v2004 = vrot.slane %v2002, 5
        %v2005 = vor.u32 %v2001, %v2004
        %v2006 = vrot.slane %v2005, 4
        %v2008 = vshll.u32 %v1654, 16
        %v2010 = vrot.slane %v2008, 5
        %v2011 = vsel %vm1661, %v2006, %v2010
        %v2012 = vshrl.u32 %v1654, 16
        %v2014 = vrot.slane %v2012, 4
        %v2015 = vor.u32 %v2014, %v2010
        %v2016 = vrot.slane %v2015, 4
        %v2018 = vshll.u32 %v1655, 16
        %v2020 = vrot.slane %v2018, 5
        %v2021 = vsel %vm1661, %v2016, %v2020
        %v2023 = vshrl.u32 %v1656, 16
        %v2025 = vrot.slane %v2023, 4
        %v2026 = vshll.u32 %v1656, 16
        %v2028 = vrot.slane %v2026, 5
        %v2029 = vor.u32 %v2025, %v2028
        %v2030 = vrot.slane %v2029, 4
        %v2032 = vshll.u32 %v1657, 16
        %v2034 = vrot.slane %v2032, 5
        %v2035 = vsel %vm1661, %v2030, %v2034
        %v2036 = vshrl.u32 %v1657, 16
        %v2038 = vrot.slane %v2036, 4
        %v2039 = vor.u32 %v2038, %v2034
        %v2040 = vrot.slane %v2039, 4
        %v2042 = vshll.u32 %v1658, 16
        %v2044 = vrot.slane %v2042, 5
        %v2045 = vsel %vm1661, %v2040, %v2044
        %s2046 = scalar_lea.vmem %s3, 16
        %v2047 = vld [vmem:[%s2046] sm:$0xf]
        %v2048 = vld [vmem:[%s2046 + $0x4] sm:$0xf]
        %v2049 = vld [vmem:[%s2046 + $0x8] sm:$0xf]
        %v2050 = vld [vmem:[%s2046 + $0xc] sm:$0xf]
        %v2051 = vunpack.c.l.b16 %v1675
        %v2052 = vunpack.c.l.b16 %v1685
        %v2053 = vunpack.c.l.b16 %v1699
        %v2054 = vunpack.c.l.b16 %v1709
        %v2055 = vunpack.c.l.b16 %v1723
        %v2056 = vunpack.c.l.b16 %v1733
        %v2057 = vunpack.c.l.b16 %v1747
        %v2058 = vunpack.c.l.b16 %v1757
        %v2059 = vunpack.c.l.b16 %v1771
        %v2060 = vunpack.c.l.b16 %v1781
        %v2061 = vunpack.c.l.b16 %v1795
        %v2062 = vunpack.c.l.b16 %v1805
        %v2063 = vunpack.c.l.b16 %v1819
        %v2064 = vunpack.c.l.b16 %v1829
        %v2065 = vunpack.c.l.b16 %v1843
        %v2066 = vunpack.c.l.b16 %v1853
        %v2067 = vunpack.c.l.b16 %v1867
        %v2068 = vunpack.c.l.b16 %v1877
        %v2069 = vunpack.c.l.b16 %v1891
        %v2070 = vunpack.c.l.b16 %v1901
        %v2071 = vunpack.c.l.b16 %v1915
        %v2072 = vunpack.c.l.b16 %v1925
        %v2073 = vunpack.c.l.b16 %v1939
        %v2074 = vunpack.c.l.b16 %v1949
        %v2075 = vunpack.c.l.b16 %v1963
        %v2076 = vunpack.c.l.b16 %v1973
        %v2077 = vunpack.c.l.b16 %v1987
        %v2078 = vunpack.c.l.b16 %v1997
        %v2079 = vunpack.c.l.b16 %v2011
        %v2080 = vunpack.c.l.b16 %v2021
        %v2081 = vunpack.c.l.b16 %v2035
        %v2082 = vunpack.c.l.b16 %v2045
        %v2083 = vpack.c.b16 %v2052, %v2051
        %v2084 = vpack.c.b16 %v2054, %v2053
        %v2085 = vpack.c.b16 %v2056, %v2055
        %v2086 = vpack.c.b16 %v2058, %v2057
        %v2087 = vpack.c.b16 %v2060, %v2059
        %v2088 = vpack.c.b16 %v2062, %v2061
        %v2089 = vpack.c.b16 %v2064, %v2063
        %v2090 = vpack.c.b16 %v2066, %v2065
        %v2091 = vpack.c.b16 %v2068, %v2067
        %v2092 = vpack.c.b16 %v2070, %v2069
        %v2093 = vpack.c.b16 %v2072, %v2071
        %v2094 = vpack.c.b16 %v2074, %v2073
        %v2095 = vpack.c.b16 %v2076, %v2075
        %v2096 = vpack.c.b16 %v2078, %v2077
        %v2097 = vpack.c.b16 %v2080, %v2079
        %v2098 = vpack.c.b16 %v2082, %v2081
        %v2103 = vunpack.c.l.b16 %v2047
        %v2104 = vunpack.c.l.b16 %v2048
        %v2105 = vunpack.c.l.b16 %v2049
        %v2106 = vunpack.c.l.b16 %v2050
        %v2107 = vpack.c.b16 %v2104, %v2103
        %v2108 = vpack.c.b16 %v2106, %v2105
        %v2112 = vsel %vm1369, %v2083, 0
        %v2115 = vsel %vm1369, %v2084, 0
        %v2118 = vsel %vm1369, %v2085, 0
        %v2121 = vsel %vm1369, %v2086, 0
        %v2124 = vsel %vm1369, %v2087, 0
        %v2127 = vsel %vm1369, %v2088, 0
        %v2130 = vsel %vm1369, %v2089, 0
        %v2133 = vsel %vm1369, %v2090, 0
        %v2136 = vsel %vm1369, %v2091, 0
        %v2139 = vsel %vm1369, %v2092, 0
        %v2142 = vsel %vm1369, %v2093, 0
        %v2145 = vsel %vm1369, %v2094, 0
        %v2148 = vsel %vm1369, %v2095, 0
        %v2151 = vsel %vm1369, %v2096, 0
        %v2154 = vsel %vm1369, %v2097, 0
        %v2157 = vsel %vm1369, %v2098, 0
        %2159 = vmatprep.subr.bf16.mxu0 0
        %2160 = vmatpush1.bf16.msra.mxu0 %v2107
        %2161 = vmatprep.subr.bf16.mxu0 0
        %2162 = vmatpush1.bf16.msra.mxu0 %v2108
        %2163 = vmatprep.subr.bf16.mxu0 0
        %2164 = vmatpush1.bf16.msra.mxu0 0
        %2165 = vmatprep.subr.bf16.mxu0 0
        %2166 = vmatpush1.bf16.msra.mxu0 0
        %2167 = vmatprep.subr.bf16.mxu0 0
        %2168 = vmatpush1.bf16.msra.mxu0 0
        %2169 = vmatprep.subr.bf16.mxu0 0
        %2170 = vmatpush1.bf16.msra.mxu0 0
        %2171 = vmatprep.subr.bf16.mxu0 0
        %2172 = vmatpush1.bf16.msra.mxu0 0
        %2173 = vmatprep.subr.bf16.mxu0 0
        %2174 = vmatpush1.bf16.msra.mxu0 0
        %2175 = vmatprep.subr.bf16.mxu0 0
        %2176 = vmatpush1.bf16.msra.mxu0 0
        %2177 = vmatprep.subr.bf16.mxu0 0
        %2178 = vmatpush1.bf16.msra.mxu0 0
        %2179 = vmatprep.subr.bf16.mxu0 0
        %2180 = vmatpush1.bf16.msra.mxu0 0
        %2181 = vmatprep.subr.bf16.mxu0 0
        %2182 = vmatpush1.bf16.msra.mxu0 0
        %2183 = vmatprep.subr.bf16.mxu0 0
        %2184 = vmatpush1.bf16.msra.mxu0 0
        %2185 = vmatprep.subr.bf16.mxu0 0
        %2186 = vmatpush1.bf16.msra.mxu0 0
        %2187 = vmatprep.subr.bf16.mxu0 0
        %2188 = vmatpush1.bf16.msra.mxu0 0
        %2189 = vmatprep.subr.bf16.mxu0 0
        %2190 = vmatpush1.bf16.msra.mxu0 0
        %2191 = vmatprep.mubr.bf16.mxu0 0
        %2192 = vmatmul.mubr.bf16.gmra.mrb[0].mxu0 %v2112
        %v2193 = vpop.f32.mrb[0].mxu0
        %v2194 = vadd.f32 0.0, %v2193
        %v2195 = vpop.f32.mrb[0].mxu0
        %v2196 = vpop.f32.mrb[0].mxu0
        %v2197 = vadd.f32 0.0, %v2196
        %v2198 = vpop.f32.mrb[0].mxu0
        %2199 = vmatprep.mubr.bf16.mxu0 0
        %2200 = vmatmul.mubr.bf16.gmra.mrb[0].mxu0 %v2115
        %v2201 = vpop.f32.mrb[0].mxu0
        %v2202 = vadd.f32 0.0, %v2201
        %v2203 = vpop.f32.mrb[0].mxu0
        %v2204 = vpop.f32.mrb[0].mxu0
        %v2205 = vadd.f32 0.0, %v2204
        %v2206 = vpop.f32.mrb[0].mxu0
        %2207 = vmatprep.mubr.bf16.mxu0 0
        %2208 = vmatmul.mubr.bf16.gmra.mrb[0].mxu0 %v2118
        %v2209 = vpop.f32.mrb[0].mxu0
        %v2210 = vadd.f32 0.0, %v2209
        %v2211 = vpop.f32.mrb[0].mxu0
        %v2212 = vpop.f32.mrb[0].mxu0
        %v2213 = vadd.f32 0.0, %v2212
        %v2214 = vpop.f32.mrb[0].mxu0
        %2215 = vmatprep.mubr.bf16.mxu0 0
        %2216 = vmatmul.mubr.bf16.gmra.mrb[0].mxu0 %v2121
        %v2217 = vpop.f32.mrb[0].mxu0
        %v2218 = vadd.f32 0.0, %v2217
        %v2219 = vpop.f32.mrb[0].mxu0
        %v2220 = vpop.f32.mrb[0].mxu0
        %v2221 = vadd.f32 0.0, %v2220
        %v2222 = vpop.f32.mrb[0].mxu0
        %2223 = vmatprep.mubr.bf16.mxu0 0
        %2224 = vmatmul.mubr.bf16.gmra.mrb[0].mxu0 %v2124
        %v2225 = vpop.f32.mrb[0].mxu0
        %v2226 = vadd.f32 0.0, %v2225
        %v2227 = vpop.f32.mrb[0].mxu0
        %v2228 = vpop.f32.mrb[0].mxu0
        %v2229 = vadd.f32 0.0, %v2228
        %v2230 = vpop.f32.mrb[0].mxu0
        %2231 = vmatprep.mubr.bf16.mxu0 0
        %2232 = vmatmul.mubr.bf16.gmra.mrb[0].mxu0 %v2127
        %v2233 = vpop.f32.mrb[0].mxu0
        %v2234 = vadd.f32 0.0, %v2233
        %v2235 = vpop.f32.mrb[0].mxu0
        %v2236 = vpop.f32.mrb[0].mxu0
        %v2237 = vadd.f32 0.0, %v2236
        %v2238 = vpop.f32.mrb[0].mxu0
        %2239 = vmatprep.mubr.bf16.mxu0 0
        %2240 = vmatmul.mubr.bf16.gmra.mrb[0].mxu0 %v2130
        %v2241 = vpop.f32.mrb[0].mxu0
        %v2242 = vadd.f32 0.0, %v2241
        %v2243 = vpop.f32.mrb[0].mxu0
        %v2244 = vpop.f32.mrb[0].mxu0
        %v2245 = vadd.f32 0.0, %v2244
        %v2246 = vpop.f32.mrb[0].mxu0
        %2247 = vmatprep.mubr.bf16.mxu0 0
        %2248 = vmatmul.mubr.bf16.gmra.mrb[0].mxu0 %v2133
        %v2249 = vpop.f32.mrb[0].mxu0
        %v2250 = vadd.f32 0.0, %v2249
        %v2251 = vpop.f32.mrb[0].mxu0
        %v2252 = vpop.f32.mrb[0].mxu0
        %v2253 = vadd.f32 0.0, %v2252
        %v2254 = vpop.f32.mrb[0].mxu0
        %2255 = vmatprep.mubr.bf16.mxu0 0
        %2256 = vmatmul.mubr.bf16.gmra.mrb[0].mxu0 %v2136
        %v2257 = vpop.f32.mrb[0].mxu0
        %v2258 = vadd.f32 0.0, %v2257
        %v2259 = vpop.f32.mrb[0].mxu0
        %v2260 = vpop.f32.mrb[0].mxu0
        %v2261 = vadd.f32 0.0, %v2260
        %v2262 = vpop.f32.mrb[0].mxu0
        %2263 = vmatprep.mubr.bf16.mxu0 0
        %2264 = vmatmul.mubr.bf16.gmra.mrb[0].mxu0 %v2139
        %v2265 = vpop.f32.mrb[0].mxu0
        %v2266 = vadd.f32 0.0, %v2265
        %v2267 = vpop.f32.mrb[0].mxu0
        %v2268 = vpop.f32.mrb[0].mxu0
        %v2269 = vadd.f32 0.0, %v2268
        %v2270 = vpop.f32.mrb[0].mxu0
        %2271 = vmatprep.mubr.bf16.mxu0 0
        %2272 = vmatmul.mubr.bf16.gmra.mrb[0].mxu0 %v2142
        %v2273 = vpop.f32.mrb[0].mxu0
        %v2274 = vadd.f32 0.0, %v2273
        %v2275 = vpop.f32.mrb[0].mxu0
        %v2276 = vpop.f32.mrb[0].mxu0
        %v2277 = vadd.f32 0.0, %v2276
        %v2278 = vpop.f32.mrb[0].mxu0
        %2279 = vmatprep.mubr.bf16.mxu0 0
        %2280 = vmatmul.mubr.bf16.gmra.mrb[0].mxu0 %v2145
        %v2281 = vpop.f32.mrb[0].mxu0
        %v2282 = vadd.f32 0.0, %v2281
        %v2283 = vpop.f32.mrb[0].mxu0
        %v2284 = vpop.f32.mrb[0].mxu0
        %v2285 = vadd.f32 0.0, %v2284
        %v2286 = vpop.f32.mrb[0].mxu0
        %2287 = vmatprep.mubr.bf16.mxu0 0
        %2288 = vmatmul.mubr.bf16.gmra.mrb[0].mxu0 %v2148
        %v2289 = vpop.f32.mrb[0].mxu0
        %v2290 = vadd.f32 0.0, %v2289
        %v2291 = vpop.f32.mrb[0].mxu0
        %v2292 = vpop.f32.mrb[0].mxu0
        %v2293 = vadd.f32 0.0, %v2292
        %v2294 = vpop.f32.mrb[0].mxu0
        %2295 = vmatprep.mubr.bf16.mxu0 0
        %2296 = vmatmul.mubr.bf16.gmra.mrb[0].mxu0 %v2151
        %v2297 = vpop.f32.mrb[0].mxu0
        %v2298 = vadd.f32 0.0, %v2297
        %v2299 = vpop.f32.mrb[0].mxu0
        %v2300 = vpop.f32.mrb[0].mxu0
        %v2301 = vadd.f32 0.0, %v2300
        %v2302 = vpop.f32.mrb[0].mxu0
        %2303 = vmatprep.mubr.bf16.mxu0 0
        %2304 = vmatmul.mubr.bf16.gmra.mrb[0].mxu0 %v2154
        %v2305 = vpop.f32.mrb[0].mxu0
        %v2306 = vadd.f32 0.0, %v2305
        %v2307 = vpop.f32.mrb[0].mxu0
        %v2308 = vpop.f32.mrb[0].mxu0
        %v2309 = vadd.f32 0.0, %v2308
        %v2310 = vpop.f32.mrb[0].mxu0
        %2311 = vmatprep.mubr.bf16.mxu0 0
        %2312 = vmatmul.mubr.bf16.gmra.mrb[0].mxu0 %v2157
        %v2313 = vpop.f32.mrb[0].mxu0
        %v2314 = vadd.f32 0.0, %v2313
        %v2315 = vpop.f32.mrb[0].mxu0
        %v2316 = vpop.f32.mrb[0].mxu0
        %v2317 = vadd.f32 0.0, %v2316
        %v2318 = vpop.f32.mrb[0].mxu0
        %2319 = vdwg.mxu0
        %v2320 = vadd.f32 %v1579, %v2194
        %v2321 = vadd.f32 %v1580, %v2197
        %v2322 = vadd.f32 %v1581, %v2202
        %v2323 = vadd.f32 %v1582, %v2205
        %v2324 = vadd.f32 %v1583, %v2210
        %v2325 = vadd.f32 %v1584, %v2213
        %v2326 = vadd.f32 %v1585, %v2218
        %v2327 = vadd.f32 %v1586, %v2221
        %v2328 = vadd.f32 %v1587, %v2226
        %v2329 = vadd.f32 %v1588, %v2229
        %v2330 = vadd.f32 %v1589, %v2234
        %v2331 = vadd.f32 %v1590, %v2237
        %v2332 = vadd.f32 %v1591, %v2242
        %v2333 = vadd.f32 %v1592, %v2245
        %v2334 = vadd.f32 %v1593, %v2250
        %v2335 = vadd.f32 %v1594, %v2253
        %v2336 = vadd.f32 %v1595, %v2258
        %v2337 = vadd.f32 %v1596, %v2261
        %v2338 = vadd.f32 %v1597, %v2266
        %v2339 = vadd.f32 %v1598, %v2269
        %v2340 = vadd.f32 %v1599, %v2274
        %v2341 = vadd.f32 %v1600, %v2277
        %v2342 = vadd.f32 %v1601, %v2282
        %v2343 = vadd.f32 %v1602, %v2285
        %v2344 = vadd.f32 %v1603, %v2290
        %v2345 = vadd.f32 %v1604, %v2293
        %v2346 = vadd.f32 %v1605, %v2298
        %v2347 = vadd.f32 %v1606, %v2301
        %v2348 = vadd.f32 %v1607, %v2306
        %v2349 = vadd.f32 %v1608, %v2309
        %v2350 = vadd.f32 %v1609, %v2314
        %v2351 = vadd.f32 %v1610, %v2317
        %v2352 = vld [vmem:[#allocation2] sm:$0xe]
        %v2353 = vld [vmem:[#allocation2 + $0xc] sm:$0xe]
        %v2354 = vld [vmem:[#allocation2 + $0x18] sm:$0xe]
        %v2355 = vld [vmem:[#allocation2 + $0x24] sm:$0xe]
        %v2356 = vld [vmem:[#allocation2 + $0x30] sm:$0xe]
        %v2357 = vld [vmem:[#allocation2 + $0x3c] sm:$0xe]
        %v2358 = vld [vmem:[#allocation2 + $0x48] sm:$0xe]
        %v2359 = vld [vmem:[#allocation2 + $0x54] sm:$0xe]
        %v2360 = vld [vmem:[#allocation2 + $0x60] sm:$0xe]
        %v2361 = vld [vmem:[#allocation2 + $0x6c] sm:$0xe]
        %v2362 = vld [vmem:[#allocation2 + $0x78] sm:$0xe]
        %v2363 = vld [vmem:[#allocation2 + $0x84] sm:$0xe]
        %v2364 = vld [vmem:[#allocation2 + $0x90] sm:$0xe]
        %v2365 = vld [vmem:[#allocation2 + $0x9c] sm:$0xe]
        %v2366 = vld [vmem:[#allocation2 + $0xa8] sm:$0xe]
        %v2367 = vld [vmem:[#allocation2 + $0xb4] sm:$0xe]
        %vm2416 = vcmask 1042432
        %vm2417 = vcmask 1046532
        %vm2418 = vmor %vm2416, %vm2417
        %v2419 = vrot.slane %v2352, 5
        %v2420 = vrot.slane %v2419, 4
        %v2421 = vrot.slane %v1612, 5
        %v2422 = vsel %vm2418, %v2420, %v2421
        %v2423 = vrot.slane %v2421, 4
        %v2424 = vrot.slane %v1613, 5
        %v2425 = vsel %vm2418, %v2423, %v2424
        %v2426 = vrot.slane %v2353, 5
        %v2427 = vrot.slane %v2426, 4
        %v2428 = vrot.slane %v1615, 5
        %v2429 = vsel %vm2418, %v2427, %v2428
        %v2430 = vrot.slane %v2428, 4
        %v2431 = vrot.slane %v1616, 5
        %v2432 = vsel %vm2418, %v2430, %v2431
        %v2433 = vrot.slane %v2354, 5
        %v2434 = vrot.slane %v2433, 4
        %v2435 = vrot.slane %v1618, 5
        %v2436 = vsel %vm2418, %v2434, %v2435
        %v2437 = vrot.slane %v2435, 4
        %v2438 = vrot.slane %v1619, 5
        %v2439 = vsel %vm2418, %v2437, %v2438
        %v2440 = vrot.slane %v2355, 5
        %v2441 = vrot.slane %v2440, 4
        %v2442 = vrot.slane %v1621, 5
        %v2443 = vsel %vm2418, %v2441, %v2442
        %v2444 = vrot.slane %v2442, 4
        %v2445 = vrot.slane %v1622, 5
        %v2446 = vsel %vm2418, %v2444, %v2445
        %v2447 = vrot.slane %v2356, 5
        %v2448 = vrot.slane %v2447, 4
        %v2449 = vrot.slane %v1624, 5
        %v2450 = vsel %vm2418, %v2448, %v2449
        %v2451 = vrot.slane %v2449, 4
        %v2452 = vrot.slane %v1625, 5
        %v2453 = vsel %vm2418, %v2451, %v2452
        %v2454 = vrot.slane %v2357, 5
        %v2455 = vrot.slane %v2454, 4
        %v2456 = vrot.slane %v1627, 5
        %v2457 = vsel %vm2418, %v2455, %v2456
        %v2458 = vrot.slane %v2456, 4
        %v2459 = vrot.slane %v1628, 5
        %v2460 = vsel %vm2418, %v2458, %v2459
        %v2461 = vrot.slane %v2358, 5
        %v2462 = vrot.slane %v2461, 4
        %v2463 = vrot.slane %v1630, 5
        %v2464 = vsel %vm2418, %v2462, %v2463
        %v2465 = vrot.slane %v2463, 4
        %v2466 = vrot.slane %v1631, 5
        %v2467 = vsel %vm2418, %v2465, %v2466
        %v2468 = vrot.slane %v2359, 5
        %v2469 = vrot.slane %v2468, 4
        %v2470 = vrot.slane %v1633, 5
        %v2471 = vsel %vm2418, %v2469, %v2470
        %v2472 = vrot.slane %v2470, 4
        %v2473 = vrot.slane %v1634, 5
        %v2474 = vsel %vm2418, %v2472, %v2473
        %v2475 = vrot.slane %v2360, 5
        %v2476 = vrot.slane %v2475, 4
        %v2477 = vrot.slane %v1636, 5
        %v2478 = vsel %vm2418, %v2476, %v2477
        %v2479 = vrot.slane %v2477, 4
        %v2480 = vrot.slane %v1637, 5
        %v2481 = vsel %vm2418, %v2479, %v2480
        %v2482 = vrot.slane %v2361, 5
        %v2483 = vrot.slane %v2482, 4
        %v2484 = vrot.slane %v1639, 5
        %v2485 = vsel %vm2418, %v2483, %v2484
        %v2486 = vrot.slane %v2484, 4
        %v2487 = vrot.slane %v1640, 5
        %v2488 = vsel %vm2418, %v2486, %v2487
        %v2489 = vrot.slane %v2362, 5
        %v2490 = vrot.slane %v2489, 4
        %v2491 = vrot.slane %v1642, 5
        %v2492 = vsel %vm2418, %v2490, %v2491
        %v2493 = vrot.slane %v2491, 4
        %v2494 = vrot.slane %v1643, 5
        %v2495 = vsel %vm2418, %v2493, %v2494
        %v2496 = vrot.slane %v2363, 5
        %v2497 = vrot.slane %v2496, 4
        %v2498 = vrot.slane %v1645, 5
        %v2499 = vsel %vm2418, %v2497, %v2498
        %v2500 = vrot.slane %v2498, 4
        %v2501 = vrot.slane %v1646, 5
        %v2502 = vsel %vm2418, %v2500, %v2501
        %v2503 = vrot.slane %v2364, 5
        %v2504 = vrot.slane %v2503, 4
        %v2505 = vrot.slane %v1648, 5
        %v2506 = vsel %vm2418, %v2504, %v2505
        %v2507 = vrot.slane %v2505, 4
        %v2508 = vrot.slane %v1649, 5
        %v2509 = vsel %vm2418, %v2507, %v2508
        %v2510 = vrot.slane %v2365, 5
        %v2511 = vrot.slane %v2510, 4
        %v2512 = vrot.slane %v1651, 5
        %v2513 = vsel %vm2418, %v2511, %v2512
        %v2514 = vrot.slane %v2512, 4
        %v2515 = vrot.slane %v1652, 5
        %v2516 = vsel %vm2418, %v2514, %v2515
        %v2517 = vrot.slane %v2366, 5
        %v2518 = vrot.slane %v2517, 4
        %v2519 = vrot.slane %v1654, 5
        %v2520 = vsel %vm2418, %v2518, %v2519
        %v2521 = vrot.slane %v2519, 4
        %v2522 = vrot.slane %v1655, 5
        %v2523 = vsel %vm2418, %v2521, %v2522
        %v2524 = vrot.slane %v2367, 5
        %v2525 = vrot.slane %v2524, 4
        %v2526 = vrot.slane %v1657, 5
        %v2527 = vsel %vm2418, %v2525, %v2526
        %v2528 = vrot.slane %v2526, 4
        %v2529 = vrot.slane %v1658, 5
        %v2530 = vsel %vm2418, %v2528, %v2529
        %s2531 = scalar_lea.vmem %s3, 32
        %v2532 = vld [vmem:[%s2531] sm:$0xf]
        %v2533 = vld [vmem:[%s2531 + $0x4] sm:$0xf]
        %v2534 = vld [vmem:[%s2531 + $0x8] sm:$0xf]
        %v2535 = vld [vmem:[%s2531 + $0xc] sm:$0xf]
        %v2536 = vunpack.c.l.b16 %v2422
        %v2537 = vunpack.c.l.b16 %v2425
        %v2538 = vunpack.c.l.b16 %v2429
        %v2539 = vunpack.c.l.b16 %v2432
        %v2540 = vunpack.c.l.b16 %v2436
        %v2541 = vunpack.c.l.b16 %v2439
        %v2542 = vunpack.c.l.b16 %v2443
        %v2543 = vunpack.c.l.b16 %v2446
        %v2544 = vunpack.c.l.b16 %v2450
        %v2545 = vunpack.c.l.b16 %v2453
        %v2546 = vunpack.c.l.b16 %v2457
        %v2547 = vunpack.c.l.b16 %v2460
        %v2548 = vunpack.c.l.b16 %v2464
        %v2549 = vunpack.c.l.b16 %v2467
        %v2550 = vunpack.c.l.b16 %v2471
        %v2551 = vunpack.c.l.b16 %v2474
        %v2552 = vunpack.c.l.b16 %v2478
        %v2553 = vunpack.c.l.b16 %v2481
        %v2554 = vunpack.c.l.b16 %v2485
        %v2555 = vunpack.c.l.b16 %v2488
        %v2556 = vunpack.c.l.b16 %v2492
        %v2557 = vunpack.c.l.b16 %v2495
        %v2558 = vunpack.c.l.b16 %v2499
        %v2559 = vunpack.c.l.b16 %v2502
        %v2560 = vunpack.c.l.b16 %v2506
        %v2561 = vunpack.c.l.b16 %v2509
        %v2562 = vunpack.c.l.b16 %v2513
        %v2563 = vunpack.c.l.b16 %v2516
        %v2564 = vunpack.c.l.b16 %v2520
        %v2565 = vunpack.c.l.b16 %v2523
        %v2566 = vunpack.c.l.b16 %v2527
        %v2567 = vunpack.c.l.b16 %v2530
        %v2568 = vpack.c.b16 %v2537, %v2536
        %v2569 = vpack.c.b16 %v2539, %v2538
        %v2570 = vpack.c.b16 %v2541, %v2540
        %v2571 = vpack.c.b16 %v2543, %v2542
        %v2572 = vpack.c.b16 %v2545, %v2544
        %v2573 = vpack.c.b16 %v2547, %v2546
        %v2574 = vpack.c.b16 %v2549, %v2548
        %v2575 = vpack.c.b16 %v2551, %v2550
        %v2576 = vpack.c.b16 %v2553, %v2552
        %v2577 = vpack.c.b16 %v2555, %v2554
        %v2578 = vpack.c.b16 %v2557, %v2556
        %v2579 = vpack.c.b16 %v2559, %v2558
        %v2580 = vpack.c.b16 %v2561, %v2560
        %v2581 = vpack.c.b16 %v2563, %v2562
        %v2582 = vpack.c.b16 %v2565, %v2564
        %v2583 = vpack.c.b16 %v2567, %v2566
        %v2588 = vunpack.c.l.b16 %v2532
        %v2589 = vunpack.c.l.b16 %v2533
        %v2590 = vunpack.c.l.b16 %v2534
        %v2591 = vunpack.c.l.b16 %v2535
        %v2592 = vpack.c.b16 %v2589, %v2588
        %v2593 = vpack.c.b16 %v2591, %v2590
        %v2597 = vsel %vm1369, %v2568, 0
        %v2600 = vsel %vm1369, %v2569, 0
        %v2603 = vsel %vm1369, %v2570, 0
        %v2606 = vsel %vm1369, %v2571, 0
        %v2609 = vsel %vm1369, %v2572, 0
        %v2612 = vsel %vm1369, %v2573, 0
        %v2615 = vsel %vm1369, %v2574, 0
        %v2618 = vsel %vm1369, %v2575, 0
        %v2621 = vsel %vm1369, %v2576, 0
        %v2624 = vsel %vm1369, %v2577, 0
        %v2627 = vsel %vm1369, %v2578, 0
        %v2630 = vsel %vm1369, %v2579, 0
        %v2633 = vsel %vm1369, %v2580, 0
        %v2636 = vsel %vm1369, %v2581, 0
        %v2639 = vsel %vm1369, %v2582, 0
        %v2642 = vsel %vm1369, %v2583, 0
        %2644 = vmatprep.subr.bf16.mxu0 0
        %2645 = vmatpush1.bf16.msra.mxu0 %v2592
        %2646 = vmatprep.subr.bf16.mxu0 0
        %2647 = vmatpush1.bf16.msra.mxu0 %v2593
        %2648 = vmatprep.subr.bf16.mxu0 0
        %2649 = vmatpush1.bf16.msra.mxu0 0
        %2650 = vmatprep.subr.bf16.mxu0 0
        %2651 = vmatpush1.bf16.msra.mxu0 0
        %2652 = vmatprep.subr.bf16.mxu0 0
        %2653 = vmatpush1.bf16.msra.mxu0 0
        %2654 = vmatprep.subr.bf16.mxu0 0
        %2655 = vmatpush1.bf16.msra.mxu0 0
        %2656 = vmatprep.subr.bf16.mxu0 0
        %2657 = vmatpush1.bf16.msra.mxu0 0
        %2658 = vmatprep.subr.bf16.mxu0 0
        %2659 = vmatpush1.bf16.msra.mxu0 0
        %2660 = vmatprep.subr.bf16.mxu0 0
        %2661 = vmatpush1.bf16.msra.mxu0 0
        %2662 = vmatprep.subr.bf16.mxu0 0
        %2663 = vmatpush1.bf16.msra.mxu0 0
        %2664 = vmatprep.subr.bf16.mxu0 0
        %2665 = vmatpush1.bf16.msra.mxu0 0
        %2666 = vmatprep.subr.bf16.mxu0 0
        %2667 = vmatpush1.bf16.msra.mxu0 0
        %2668 = vmatprep.subr.bf16.mxu0 0
        %2669 = vmatpush1.bf16.msra.mxu0 0
        %2670 = vmatprep.subr.bf16.mxu0 0
        %2671 = vmatpush1.bf16.msra.mxu0 0
        %2672 = vmatprep.subr.bf16.mxu0 0
        %2673 = vmatpush1.bf16.msra.mxu0 0
        %2674 = vmatprep.subr.bf16.mxu0 0
        %2675 = vmatpush1.bf16.msra.mxu0 0
        %2676 = vmatprep.mubr.bf16.mxu0 0
        %2677 = vmatmul.mubr.bf16.gmra.mrb[0].mxu0 %v2597
        %v2678 = vpop.f32.mrb[0].mxu0
        %v2679 = vadd.f32 0.0, %v2678
        %v2680 = vpop.f32.mrb[0].mxu0
        %v2681 = vpop.f32.mrb[0].mxu0
        %v2682 = vadd.f32 0.0, %v2681
        %v2683 = vpop.f32.mrb[0].mxu0
        %2684 = vmatprep.mubr.bf16.mxu0 0
        %2685 = vmatmul.mubr.bf16.gmra.mrb[0].mxu0 %v2600
        %v2686 = vpop.f32.mrb[0].mxu0
        %v2687 = vadd.f32 0.0, %v2686
        %v2688 = vpop.f32.mrb[0].mxu0
        %v2689 = vpop.f32.mrb[0].mxu0
        %v2690 = vadd.f32 0.0, %v2689
        %v2691 = vpop.f32.mrb[0].mxu0
        %2692 = vmatprep.mubr.bf16.mxu0 0
        %2693 = vmatmul.mubr.bf16.gmra.mrb[0].mxu0 %v2603
        %v2694 = vpop.f32.mrb[0].mxu0
        %v2695 = vadd.f32 0.0, %v2694
        %v2696 = vpop.f32.mrb[0].mxu0
        %v2697 = vpop.f32.mrb[0].mxu0
        %v2698 = vadd.f32 0.0, %v2697
        %v2699 = vpop.f32.mrb[0].mxu0
        %2700 = vmatprep.mubr.bf16.mxu0 0
        %2701 = vmatmul.mubr.bf16.gmra.mrb[0].mxu0 %v2606
        %v2702 = vpop.f32.mrb[0].mxu0
        %v2703 = vadd.f32 0.0, %v2702
        %v2704 = vpop.f32.mrb[0].mxu0
        %v2705 = vpop.f32.mrb[0].mxu0
        %v2706 = vadd.f32 0.0, %v2705
        %v2707 = vpop.f32.mrb[0].mxu0
        %2708 = vmatprep.mubr.bf16.mxu0 0
        %2709 = vmatmul.mubr.bf16.gmra.mrb[0].mxu0 %v2609
        %v2710 = vpop.f32.mrb[0].mxu0
        %v2711 = vadd.f32 0.0, %v2710
        %v2712 = vpop.f32.mrb[0].mxu0
        %v2713 = vpop.f32.mrb[0].mxu0
        %v2714 = vadd.f32 0.0, %v2713
        %v2715 = vpop.f32.mrb[0].mxu0
        %2716 = vmatprep.mubr.bf16.mxu0 0
        %2717 = vmatmul.mubr.bf16.gmra.mrb[0].mxu0 %v2612
        %v2718 = vpop.f32.mrb[0].mxu0
        %v2719 = vadd.f32 0.0, %v2718
        %v2720 = vpop.f32.mrb[0].mxu0
        %v2721 = vpop.f32.mrb[0].mxu0
        %v2722 = vadd.f32 0.0, %v2721
        %v2723 = vpop.f32.mrb[0].mxu0
        %2724 = vmatprep.mubr.bf16.mxu0 0
        %2725 = vmatmul.mubr.bf16.gmra.mrb[0].mxu0 %v2615
        %v2726 = vpop.f32.mrb[0].mxu0
        %v2727 = vadd.f32 0.0, %v2726
        %v2728 = vpop.f32.mrb[0].mxu0
        %v2729 = vpop.f32.mrb[0].mxu0
        %v2730 = vadd.f32 0.0, %v2729
        %v2731 = vpop.f32.mrb[0].mxu0
        %2732 = vmatprep.mubr.bf16.mxu0 0
        %2733 = vmatmul.mubr.bf16.gmra.mrb[0].mxu0 %v2618
        %v2734 = vpop.f32.mrb[0].mxu0
        %v2735 = vadd.f32 0.0, %v2734
        %v2736 = vpop.f32.mrb[0].mxu0
        %v2737 = vpop.f32.mrb[0].mxu0
        %v2738 = vadd.f32 0.0, %v2737
        %v2739 = vpop.f32.mrb[0].mxu0
        %2740 = vmatprep.mubr.bf16.mxu0 0
        %2741 = vmatmul.mubr.bf16.gmra.mrb[0].mxu0 %v2621
        %v2742 = vpop.f32.mrb[0].mxu0
        %v2743 = vadd.f32 0.0, %v2742
        %v2744 = vpop.f32.mrb[0].mxu0
        %v2745 = vpop.f32.mrb[0].mxu0
        %v2746 = vadd.f32 0.0, %v2745
        %v2747 = vpop.f32.mrb[0].mxu0
        %2748 = vmatprep.mubr.bf16.mxu0 0
        %2749 = vmatmul.mubr.bf16.gmra.mrb[0].mxu0 %v2624
        %v2750 = vpop.f32.mrb[0].mxu0
        %v2751 = vadd.f32 0.0, %v2750
        %v2752 = vpop.f32.mrb[0].mxu0
        %v2753 = vpop.f32.mrb[0].mxu0
        %v2754 = vadd.f32 0.0, %v2753
        %v2755 = vpop.f32.mrb[0].mxu0
        %2756 = vmatprep.mubr.bf16.mxu0 0
        %2757 = vmatmul.mubr.bf16.gmra.mrb[0].mxu0 %v2627
        %v2758 = vpop.f32.mrb[0].mxu0
        %v2759 = vadd.f32 0.0, %v2758
        %v2760 = vpop.f32.mrb[0].mxu0
        %v2761 = vpop.f32.mrb[0].mxu0
        %v2762 = vadd.f32 0.0, %v2761
        %v2763 = vpop.f32.mrb[0].mxu0
        %2764 = vmatprep.mubr.bf16.mxu0 0
        %2765 = vmatmul.mubr.bf16.gmra.mrb[0].mxu0 %v2630
        %v2766 = vpop.f32.mrb[0].mxu0
        %v2767 = vadd.f32 0.0, %v2766
        %v2768 = vpop.f32.mrb[0].mxu0
        %v2769 = vpop.f32.mrb[0].mxu0
        %v2770 = vadd.f32 0.0, %v2769
        %v2771 = vpop.f32.mrb[0].mxu0
        %2772 = vmatprep.mubr.bf16.mxu0 0
        %2773 = vmatmul.mubr.bf16.gmra.mrb[0].mxu0 %v2633
        %v2774 = vpop.f32.mrb[0].mxu0
        %v2775 = vadd.f32 0.0, %v2774
        %v2776 = vpop.f32.mrb[0].mxu0
        %v2777 = vpop.f32.mrb[0].mxu0
        %v2778 = vadd.f32 0.0, %v2777
        %v2779 = vpop.f32.mrb[0].mxu0
        %2780 = vmatprep.mubr.bf16.mxu0 0
        %2781 = vmatmul.mubr.bf16.gmra.mrb[0].mxu0 %v2636
        %v2782 = vpop.f32.mrb[0].mxu0
        %v2783 = vadd.f32 0.0, %v2782
        %v2784 = vpop.f32.mrb[0].mxu0
        %v2785 = vpop.f32.mrb[0].mxu0
        %v2786 = vadd.f32 0.0, %v2785
        %v2787 = vpop.f32.mrb[0].mxu0
        %2788 = vmatprep.mubr.bf16.mxu0 0
        %2789 = vmatmul.mubr.bf16.gmra.mrb[0].mxu0 %v2639
        %v2790 = vpop.f32.mrb[0].mxu0
        %v2791 = vadd.f32 0.0, %v2790
        %v2792 = vpop.f32.mrb[0].mxu0
        %v2793 = vpop.f32.mrb[0].mxu0
        %v2794 = vadd.f32 0.0, %v2793
        %v2795 = vpop.f32.mrb[0].mxu0
        %2796 = vmatprep.mubr.bf16.mxu0 0
        %2797 = vmatmul.mubr.bf16.gmra.mrb[0].mxu0 %v2642
        %v2798 = vpop.f32.mrb[0].mxu0
        %v2799 = vadd.f32 0.0, %v2798
        %v2800 = vpop.f32.mrb[0].mxu0
        %v2801 = vpop.f32.mrb[0].mxu0
        %v2802 = vadd.f32 0.0, %v2801
        %v2803 = vpop.f32.mrb[0].mxu0
        %2804 = vdwg.mxu0
        %v2805 = vadd.f32 %v2320, %v2679
        %v2806 = vadd.f32 %v2321, %v2682
        %v2807 = vadd.f32 %v2322, %v2687
        %v2808 = vadd.f32 %v2323, %v2690
        %v2809 = vadd.f32 %v2324, %v2695
        %v2810 = vadd.f32 %v2325, %v2698
        %v2811 = vadd.f32 %v2326, %v2703
        %v2812 = vadd.f32 %v2327, %v2706
        %v2813 = vadd.f32 %v2328, %v2711
        %v2814 = vadd.f32 %v2329, %v2714
        %v2815 = vadd.f32 %v2330, %v2719
        %v2816 = vadd.f32 %v2331, %v2722
        %v2817 = vadd.f32 %v2332, %v2727
        %v2818 = vadd.f32 %v2333, %v2730
        %v2819 = vadd.f32 %v2334, %v2735
        %v2820 = vadd.f32 %v2335, %v2738
        %v2821 = vadd.f32 %v2336, %v2743
        %v2822 = vadd.f32 %v2337, %v2746
        %v2823 = vadd.f32 %v2338, %v2751
        %v2824 = vadd.f32 %v2339, %v2754
        %v2825 = vadd.f32 %v2340, %v2759
        %v2826 = vadd.f32 %v2341, %v2762
        %v2827 = vadd.f32 %v2342, %v2767
        %v2828 = vadd.f32 %v2343, %v2770
        %v2829 = vadd.f32 %v2344, %v2775
        %v2830 = vadd.f32 %v2345, %v2778
        %v2831 = vadd.f32 %v2346, %v2783
        %v2832 = vadd.f32 %v2347, %v2786
        %v2833 = vadd.f32 %v2348, %v2791
        %v2834 = vadd.f32 %v2349, %v2794
        %v2835 = vadd.f32 %v2350, %v2799
        %v2836 = vadd.f32 %v2351, %v2802
        %s2837 = scalar_lea.vmem [#allocation2], 12
        %v2838 = vld [vmem:[%s2837] sm:$0xf]
        %v2839 = vld [vmem:[%s2837 + $0x4] sm:$0xf]
        %v2840 = vld [vmem:[%s2837 + $0xc] sm:$0xf]
        %v2841 = vld [vmem:[%s2837 + $0x10] sm:$0xf]
        %v2842 = vld [vmem:[%s2837 + $0x18] sm:$0xf]
        %v2843 = vld [vmem:[%s2837 + $0x1c] sm:$0xf]
        %v2844 = vld [vmem:[%s2837 + $0x24] sm:$0xf]
        %v2845 = vld [vmem:[%s2837 + $0x28] sm:$0xf]
        %v2846 = vld [vmem:[%s2837 + $0x30] sm:$0xf]
        %v2847 = vld [vmem:[%s2837 + $0x34] sm:$0xf]
        %v2848 = vld [vmem:[%s2837 + $0x3c] sm:$0xf]
        %v2849 = vld [vmem:[%s2837 + $0x40] sm:$0xf]
        %v2850 = vld [vmem:[%s2837 + $0x48] sm:$0xf]
        %v2851 = vld [vmem:[%s2837 + $0x4c] sm:$0xf]
        %v2852 = vld [vmem:[%s2837 + $0x54] sm:$0xf]
        %v2853 = vld [vmem:[%s2837 + $0x58] sm:$0xf]
        %v2854 = vld [vmem:[%s2837 + $0x60] sm:$0xf]
        %v2855 = vld [vmem:[%s2837 + $0x64] sm:$0xf]
        %v2856 = vld [vmem:[%s2837 + $0x6c] sm:$0xf]
        %v2857 = vld [vmem:[%s2837 + $0x70] sm:$0xf]
        %v2858 = vld [vmem:[%s2837 + $0x78] sm:$0xf]
        %v2859 = vld [vmem:[%s2837 + $0x7c] sm:$0xf]
        %v2860 = vld [vmem:[%s2837 + $0x84] sm:$0xf]
        %v2861 = vld [vmem:[%s2837 + $0x88] sm:$0xf]
        %v2862 = vld [vmem:[%s2837 + $0x90] sm:$0xf]
        %v2863 = vld [vmem:[%s2837 + $0x94] sm:$0xf]
        %v2864 = vld [vmem:[%s2837 + $0x9c] sm:$0xf]
        %v2865 = vld [vmem:[%s2837 + $0xa0] sm:$0xf]
        %v2866 = vld [vmem:[%s2837 + $0xa8] sm:$0xf]
        %v2867 = vld [vmem:[%s2837 + $0xac] sm:$0xf]
        %v2868 = vld [vmem:[%s2837 + $0xb4] sm:$0xf]
        %v2869 = vld [vmem:[%s2837 + $0xb8] sm:$0xf]
        %s2870 = scalar_lea.vmem %s3, 48
        %v2871 = vld [vmem:[%s2870] sm:$0xf]
        %v2872 = vld [vmem:[%s2870 + $0x4] sm:$0xf]
        %v2873 = vld [vmem:[%s2870 + $0x8] sm:$0xf]
        %v2874 = vld [vmem:[%s2870 + $0xc] sm:$0xf]
        %v2907 = vunpack.c.l.b16 %v2838
        %v2908 = vunpack.c.l.b16 %v2839
        %v2909 = vunpack.c.l.b16 %v2840
        %v2910 = vunpack.c.l.b16 %v2841
        %v2911 = vunpack.c.l.b16 %v2842
        %v2912 = vunpack.c.l.b16 %v2843
        %v2913 = vunpack.c.l.b16 %v2844
        %v2914 = vunpack.c.l.b16 %v2845
        %v2915 = vunpack.c.l.b16 %v2846
        %v2916 = vunpack.c.l.b16 %v2847
        %v2917 = vunpack.c.l.b16 %v2848
        %v2918 = vunpack.c.l.b16 %v2849
        %v2919 = vunpack.c.l.b16 %v2850
        %v2920 = vunpack.c.l.b16 %v2851
        %v2921 = vunpack.c.l.b16 %v2852
        %v2922 = vunpack.c.l.b16 %v2853
        %v2923 = vunpack.c.l.b16 %v2854
        %v2924 = vunpack.c.l.b16 %v2855
        %v2925 = vunpack.c.l.b16 %v2856
        %v2926 = vunpack.c.l.b16 %v2857
        %v2927 = vunpack.c.l.b16 %v2858
        %v2928 = vunpack.c.l.b16 %v2859
        %v2929 = vunpack.c.l.b16 %v2860
        %v2930 = vunpack.c.l.b16 %v2861
        %v2931 = vunpack.c.l.b16 %v2862
        %v2932 = vunpack.c.l.b16 %v2863
        %v2933 = vunpack.c.l.b16 %v2864
        %v2934 = vunpack.c.l.b16 %v2865
        %v2935 = vunpack.c.l.b16 %v2866
        %v2936 = vunpack.c.l.b16 %v2867
        %v2937 = vunpack.c.l.b16 %v2868
        %v2938 = vunpack.c.l.b16 %v2869
        %v2939 = vpack.c.b16 %v2908, %v2907
        %v2940 = vpack.c.b16 %v2910, %v2909
        %v2941 = vpack.c.b16 %v2912, %v2911
        %v2942 = vpack.c.b16 %v2914, %v2913
        %v2943 = vpack.c.b16 %v2916, %v2915
        %v2944 = vpack.c.b16 %v2918, %v2917
        %v2945 = vpack.c.b16 %v2920, %v2919
        %v2946 = vpack.c.b16 %v2922, %v2921
        %v2947 = vpack.c.b16 %v2924, %v2923
        %v2948 = vpack.c.b16 %v2926, %v2925
        %v2949 = vpack.c.b16 %v2928, %v2927
        %v2950 = vpack.c.b16 %v2930, %v2929
        %v2951 = vpack.c.b16 %v2932, %v2931
        %v2952 = vpack.c.b16 %v2934, %v2933
        %v2953 = vpack.c.b16 %v2936, %v2935
        %v2954 = vpack.c.b16 %v2938, %v2937
        %v2959 = vunpack.c.l.b16 %v2871
        %v2960 = vunpack.c.l.b16 %v2872
        %v2961 = vunpack.c.l.b16 %v2873
        %v2962 = vunpack.c.l.b16 %v2874
        %v2963 = vpack.c.b16 %v2960, %v2959
        %v2964 = vpack.c.b16 %v2962, %v2961
        %v2968 = vsel %vm1369, %v2939, 0
        %v2971 = vsel %vm1369, %v2940, 0
        %v2974 = vsel %vm1369, %v2941, 0
        %v2977 = vsel %vm1369, %v2942, 0
        %v2980 = vsel %vm1369, %v2943, 0
        %v2983 = vsel %vm1369, %v2944, 0
        %v2986 = vsel %vm1369, %v2945, 0
        %v2989 = vsel %vm1369, %v2946, 0
        %v2992 = vsel %vm1369, %v2947, 0
        %v2995 = vsel %vm1369, %v2948, 0
        %v2998 = vsel %vm1369, %v2949, 0
        %v3001 = vsel %vm1369, %v2950, 0
        %v3004 = vsel %vm1369, %v2951, 0
        %v3007 = vsel %vm1369, %v2952, 0
        %v3010 = vsel %vm1369, %v2953, 0
        %v3013 = vsel %vm1369, %v2954, 0
        %3015 = vmatprep.subr.bf16.mxu0 0
        %3016 = vmatpush1.bf16.msra.mxu0 %v2963
        %3017 = vmatprep.subr.bf16.mxu0 0
        %3018 = vmatpush1.bf16.msra.mxu0 %v2964
        %3019 = vmatprep.subr.bf16.mxu0 0
        %3020 = vmatpush1.bf16.msra.mxu0 0
        %3021 = vmatprep.subr.bf16.mxu0 0
        %3022 = vmatpush1.bf16.msra.mxu0 0
        %3023 = vmatprep.subr.bf16.mxu0 0
        %3024 = vmatpush1.bf16.msra.mxu0 0
        %3025 = vmatprep.subr.bf16.mxu0 0
        %3026 = vmatpush1.bf16.msra.mxu0 0
        %3027 = vmatprep.subr.bf16.mxu0 0
        %3028 = vmatpush1.bf16.msra.mxu0 0
        %3029 = vmatprep.subr.bf16.mxu0 0
        %3030 = vmatpush1.bf16.msra.mxu0 0
        %3031 = vmatprep.subr.bf16.mxu0 0
        %3032 = vmatpush1.bf16.msra.mxu0 0
        %3033 = vmatprep.subr.bf16.mxu0 0
        %3034 = vmatpush1.bf16.msra.mxu0 0
        %3035 = vmatprep.subr.bf16.mxu0 0
        %3036 = vmatpush1.bf16.msra.mxu0 0
        %3037 = vmatprep.subr.bf16.mxu0 0
        %3038 = vmatpush1.bf16.msra.mxu0 0
        %3039 = vmatprep.subr.bf16.mxu0 0
        %3040 = vmatpush1.bf16.msra.mxu0 0
        %3041 = vmatprep.subr.bf16.mxu0 0
        %3042 = vmatpush1.bf16.msra.mxu0 0
        %3043 = vmatprep.subr.bf16.mxu0 0
        %3044 = vmatpush1.bf16.msra.mxu0 0
        %3045 = vmatprep.subr.bf16.mxu0 0
        %3046 = vmatpush1.bf16.msra.mxu0 0
        %3047 = vmatprep.mubr.bf16.mxu0 0
        %3048 = vmatmul.mubr.bf16.gmra.mrb[0].mxu0 %v2968
        %v3049 = vpop.f32.mrb[0].mxu0
        %v3050 = vadd.f32 0.0, %v3049
        %v3051 = vpop.f32.mrb[0].mxu0
        %v3052 = vpop.f32.mrb[0].mxu0
        %v3053 = vadd.f32 0.0, %v3052
        %v3054 = vpop.f32.mrb[0].mxu0
        %3055 = vmatprep.mubr.bf16.mxu0 0
        %3056 = vmatmul.mubr.bf16.gmra.mrb[0].mxu0 %v2971
        %v3057 = vpop.f32.mrb[0].mxu0
        %v3058 = vadd.f32 0.0, %v3057
        %v3059 = vpop.f32.mrb[0].mxu0
        %v3060 = vpop.f32.mrb[0].mxu0
        %v3061 = vadd.f32 0.0, %v3060
        %v3062 = vpop.f32.mrb[0].mxu0
        %3063 = vmatprep.mubr.bf16.mxu0 0
        %3064 = vmatmul.mubr.bf16.gmra.mrb[0].mxu0 %v2974
        %v3065 = vpop.f32.mrb[0].mxu0
        %v3066 = vadd.f32 0.0, %v3065
        %v3067 = vpop.f32.mrb[0].mxu0
        %v3068 = vpop.f32.mrb[0].mxu0
        %v3069 = vadd.f32 0.0, %v3068
        %v3070 = vpop.f32.mrb[0].mxu0
        %3071 = vmatprep.mubr.bf16.mxu0 0
        %3072 = vmatmul.mubr.bf16.gmra.mrb[0].mxu0 %v2977
        %v3073 = vpop.f32.mrb[0].mxu0
        %v3074 = vadd.f32 0.0, %v3073
        %v3075 = vpop.f32.mrb[0].mxu0
        %v3076 = vpop.f32.mrb[0].mxu0
        %v3077 = vadd.f32 0.0, %v3076
        %v3078 = vpop.f32.mrb[0].mxu0
        %3079 = vmatprep.mubr.bf16.mxu0 0
        %3080 = vmatmul.mubr.bf16.gmra.mrb[0].mxu0 %v2980
        %v3081 = vpop.f32.mrb[0].mxu0
        %v3082 = vadd.f32 0.0, %v3081
        %v3083 = vpop.f32.mrb[0].mxu0
        %v3084 = vpop.f32.mrb[0].mxu0
        %v3085 = vadd.f32 0.0, %v3084
        %v3086 = vpop.f32.mrb[0].mxu0
        %3087 = vmatprep.mubr.bf16.mxu0 0
        %3088 = vmatmul.mubr.bf16.gmra.mrb[0].mxu0 %v2983
        %v3089 = vpop.f32.mrb[0].mxu0
        %v3090 = vadd.f32 0.0, %v3089
        %v3091 = vpop.f32.mrb[0].mxu0
        %v3092 = vpop.f32.mrb[0].mxu0
        %v3093 = vadd.f32 0.0, %v3092
        %v3094 = vpop.f32.mrb[0].mxu0
        %3095 = vmatprep.mubr.bf16.mxu0 0
        %3096 = vmatmul.mubr.bf16.gmra.mrb[0].mxu0 %v2986
        %v3097 = vpop.f32.mrb[0].mxu0
        %v3098 = vadd.f32 0.0, %v3097
        %v3099 = vpop.f32.mrb[0].mxu0
        %v3100 = vpop.f32.mrb[0].mxu0
        %v3101 = vadd.f32 0.0, %v3100
        %v3102 = vpop.f32.mrb[0].mxu0
        %3103 = vmatprep.mubr.bf16.mxu0 0
        %3104 = vmatmul.mubr.bf16.gmra.mrb[0].mxu0 %v2989
        %v3105 = vpop.f32.mrb[0].mxu0
        %v3106 = vadd.f32 0.0, %v3105
        %v3107 = vpop.f32.mrb[0].mxu0
        %v3108 = vpop.f32.mrb[0].mxu0
        %v3109 = vadd.f32 0.0, %v3108
        %v3110 = vpop.f32.mrb[0].mxu0
        %3111 = vmatprep.mubr.bf16.mxu0 0
        %3112 = vmatmul.mubr.bf16.gmra.mrb[0].mxu0 %v2992
        %v3113 = vpop.f32.mrb[0].mxu0
        %v3114 = vadd.f32 0.0, %v3113
        %v3115 = vpop.f32.mrb[0].mxu0
        %v3116 = vpop.f32.mrb[0].mxu0
        %v3117 = vadd.f32 0.0, %v3116
        %v3118 = vpop.f32.mrb[0].mxu0
        %3119 = vmatprep.mubr.bf16.mxu0 0
        %3120 = vmatmul.mubr.bf16.gmra.mrb[0].mxu0 %v2995
        %v3121 = vpop.f32.mrb[0].mxu0
        %v3122 = vadd.f32 0.0, %v3121
        %v3123 = vpop.f32.mrb[0].mxu0
        %v3124 = vpop.f32.mrb[0].mxu0
        %v3125 = vadd.f32 0.0, %v3124
        %v3126 = vpop.f32.mrb[0].mxu0
        %3127 = vmatprep.mubr.bf16.mxu0 0
        %3128 = vmatmul.mubr.bf16.gmra.mrb[0].mxu0 %v2998
        %v3129 = vpop.f32.mrb[0].mxu0
        %v3130 = vadd.f32 0.0, %v3129
        %v3131 = vpop.f32.mrb[0].mxu0
        %v3132 = vpop.f32.mrb[0].mxu0
        %v3133 = vadd.f32 0.0, %v3132
        %v3134 = vpop.f32.mrb[0].mxu0
        %3135 = vmatprep.mubr.bf16.mxu0 0
        %3136 = vmatmul.mubr.bf16.gmra.mrb[0].mxu0 %v3001
        %v3137 = vpop.f32.mrb[0].mxu0
        %v3138 = vadd.f32 0.0, %v3137
        %v3139 = vpop.f32.mrb[0].mxu0
        %v3140 = vpop.f32.mrb[0].mxu0
        %v3141 = vadd.f32 0.0, %v3140
        %v3142 = vpop.f32.mrb[0].mxu0
        %3143 = vmatprep.mubr.bf16.mxu0 0
        %3144 = vmatmul.mubr.bf16.gmra.mrb[0].mxu0 %v3004
        %v3145 = vpop.f32.mrb[0].mxu0
        %v3146 = vadd.f32 0.0, %v3145
        %v3147 = vpop.f32.mrb[0].mxu0
        %v3148 = vpop.f32.mrb[0].mxu0
        %v3149 = vadd.f32 0.0, %v3148
        %v3150 = vpop.f32.mrb[0].mxu0
        %3151 = vmatprep.mubr.bf16.mxu0 0
        %3152 = vmatmul.mubr.bf16.gmra.mrb[0].mxu0 %v3007
        %v3153 = vpop.f32.mrb[0].mxu0
        %v3154 = vadd.f32 0.0, %v3153
        %v3155 = vpop.f32.mrb[0].mxu0
        %v3156 = vpop.f32.mrb[0].mxu0
        %v3157 = vadd.f32 0.0, %v3156
        %v3158 = vpop.f32.mrb[0].mxu0
        %3159 = vmatprep.mubr.bf16.mxu0 0
        %3160 = vmatmul.mubr.bf16.gmra.mrb[0].mxu0 %v3010
        %v3161 = vpop.f32.mrb[0].mxu0
        %v3162 = vadd.f32 0.0, %v3161
        %v3163 = vpop.f32.mrb[0].mxu0
        %v3164 = vpop.f32.mrb[0].mxu0
        %v3165 = vadd.f32 0.0, %v3164
        %v3166 = vpop.f32.mrb[0].mxu0
        %3167 = vmatprep.mubr.bf16.mxu0 0
        %3168 = vmatmul.mubr.bf16.gmra.mrb[0].mxu0 %v3013
        %v3169 = vpop.f32.mrb[0].mxu0
        %v3170 = vadd.f32 0.0, %v3169
        %v3171 = vpop.f32.mrb[0].mxu0
        %v3172 = vpop.f32.mrb[0].mxu0
        %v3173 = vadd.f32 0.0, %v3172
        %v3174 = vpop.f32.mrb[0].mxu0
        %3175 = vdwg.mxu0
        %v3176 = vadd.f32 %v2805, %v3050
        %v3177 = vadd.f32 %v2806, %v3053
        %v3178 = vadd.f32 %v2807, %v3058
        %v3179 = vadd.f32 %v2808, %v3061
        %v3180 = vadd.f32 %v2809, %v3066
        %v3181 = vadd.f32 %v2810, %v3069
        %v3182 = vadd.f32 %v2811, %v3074
        %v3183 = vadd.f32 %v2812, %v3077
        %v3184 = vadd.f32 %v2813, %v3082
        %v3185 = vadd.f32 %v2814, %v3085
        %v3186 = vadd.f32 %v2815, %v3090
        %v3187 = vadd.f32 %v2816, %v3093
        %v3188 = vadd.f32 %v2817, %v3098
        %v3189 = vadd.f32 %v2818, %v3101
        %v3190 = vadd.f32 %v2819, %v3106
        %v3191 = vadd.f32 %v2820, %v3109
        %v3192 = vadd.f32 %v2821, %v3114
        %v3193 = vadd.f32 %v2822, %v3117
        %v3194 = vadd.f32 %v2823, %v3122
        %v3195 = vadd.f32 %v2824, %v3125
        %v3196 = vadd.f32 %v2825, %v3130
        %v3197 = vadd.f32 %v2826, %v3133
        %v3198 = vadd.f32 %v2827, %v3138
        %v3199 = vadd.f32 %v2828, %v3141
        %v3200 = vadd.f32 %v2829, %v3146
        %v3201 = vadd.f32 %v2830, %v3149
        %v3202 = vadd.f32 %v2831, %v3154
        %v3203 = vadd.f32 %v2832, %v3157
        %v3204 = vadd.f32 %v2833, %v3162
        %v3205 = vadd.f32 %v2834, %v3165
        %v3206 = vadd.f32 %v2835, %v3170
        %v3207 = vadd.f32 %v2836, %v3173
        %v3208 = vld [vmem:[%s2837] sm:$0xf]
        %v3209 = vld [vmem:[%s2837 + $0x4] sm:$0xf]
        %v3210 = vld [vmem:[%s2837 + $0x8] sm:$0x1]
        %v3211 = vld [vmem:[%s2837 + $0xc] sm:$0xf]
        %v3212 = vld [vmem:[%s2837 + $0x10] sm:$0xf]
        %v3213 = vld [vmem:[%s2837 + $0x14] sm:$0x1]
        %v3214 = vld [vmem:[%s2837 + $0x18] sm:$0xf]
        %v3215 = vld [vmem:[%s2837 + $0x1c] sm:$0xf]
        %v3216 = vld [vmem:[%s2837 + $0x20] sm:$0x1]
        %v3217 = vld [vmem:[%s2837 + $0x24] sm:$0xf]
        %v3218 = vld [vmem:[%s2837 + $0x28] sm:$0xf]
        %v3219 = vld [vmem:[%s2837 + $0x2c] sm:$0x1]
        %v3220 = vld [vmem:[%s2837 + $0x30] sm:$0xf]
        %v3221 = vld [vmem:[%s2837 + $0x34] sm:$0xf]
        %v3222 = vld [vmem:[%s2837 + $0x38] sm:$0x1]
        %v3223 = vld [vmem:[%s2837 + $0x3c] sm:$0xf]
        %v3224 = vld [vmem:[%s2837 + $0x40] sm:$0xf]
        %v3225 = vld [vmem:[%s2837 + $0x44] sm:$0x1]
        %v3226 = vld [vmem:[%s2837 + $0x48] sm:$0xf]
        %v3227 = vld [vmem:[%s2837 + $0x4c] sm:$0xf]
        %v3228 = vld [vmem:[%s2837 + $0x50] sm:$0x1]
        %v3229 = vld [vmem:[%s2837 + $0x54] sm:$0xf]
        %v3230 = vld [vmem:[%s2837 + $0x58] sm:$0xf]
        %v3231 = vld [vmem:[%s2837 + $0x5c] sm:$0x1]
        %v3232 = vld [vmem:[%s2837 + $0x60] sm:$0xf]
        %v3233 = vld [vmem:[%s2837 + $0x64] sm:$0xf]
        %v3234 = vld [vmem:[%s2837 + $0x68] sm:$0x1]
        %v3235 = vld [vmem:[%s2837 + $0x6c] sm:$0xf]
        %v3236 = vld [vmem:[%s2837 + $0x70] sm:$0xf]
        %v3237 = vld [vmem:[%s2837 + $0x74] sm:$0x1]
        %v3238 = vld [vmem:[%s2837 + $0x78] sm:$0xf]
        %v3239 = vld [vmem:[%s2837 + $0x7c] sm:$0xf]
        %v3240 = vld [vmem:[%s2837 + $0x80] sm:$0x1]
        %v3241 = vld [vmem:[%s2837 + $0x84] sm:$0xf]
        %v3242 = vld [vmem:[%s2837 + $0x88] sm:$0xf]
        %v3243 = vld [vmem:[%s2837 + $0x8c] sm:$0x1]
        %v3244 = vld [vmem:[%s2837 + $0x90] sm:$0xf]
        %v3245 = vld [vmem:[%s2837 + $0x94] sm:$0xf]
        %v3246 = vld [vmem:[%s2837 + $0x98] sm:$0x1]
        %v3247 = vld [vmem:[%s2837 + $0x9c] sm:$0xf]
        %v3248 = vld [vmem:[%s2837 + $0xa0] sm:$0xf]
        %v3249 = vld [vmem:[%s2837 + $0xa4] sm:$0x1]
        %v3250 = vld [vmem:[%s2837 + $0xa8] sm:$0xf]
        %v3251 = vld [vmem:[%s2837 + $0xac] sm:$0xf]
        %v3252 = vld [vmem:[%s2837 + $0xb0] sm:$0x1]
        %v3253 = vld [vmem:[%s2837 + $0xb4] sm:$0xf]
        %v3254 = vld [vmem:[%s2837 + $0xb8] sm:$0xf]
        %v3255 = vld [vmem:[%s2837 + $0xbc] sm:$0x1]
        %v3257 = vshrl.u32 %v3208, 16
        %v3259 = vrot.slane %v3257, 4
        %v3260 = vshll.u32 %v3208, 16
        %v3262 = vrot.slane %v3260, 5
        %v3263 = vor.u32 %v3259, %v3262
        %v3264 = vrot.slane %v3263, 4
        %v3266 = vshll.u32 %v3209, 16
        %v3268 = vrot.slane %v3266, 5
        %v3269 = vsel %vm1661, %v3264, %v3268
        %v3270 = vshrl.u32 %v3209, 16
        %v3272 = vrot.slane %v3270, 4
        %v3273 = vor.u32 %v3272, %v3268
        %v3274 = vrot.slane %v3273, 4
        %v3276 = vshll.u32 %v3210, 16
        %v3278 = vrot.slane %v3276, 5
        %v3279 = vsel %vm1661, %v3274, %v3278
        %v3281 = vshrl.u32 %v3211, 16
        %v3283 = vrot.slane %v3281, 4
        %v3284 = vshll.u32 %v3211, 16
        %v3286 = vrot.slane %v3284, 5
        %v3287 = vor.u32 %v3283, %v3286
        %v3288 = vrot.slane %v3287, 4
        %v3290 = vshll.u32 %v3212, 16
        %v3292 = vrot.slane %v3290, 5
        %v3293 = vsel %vm1661, %v3288, %v3292
        %v3294 = vshrl.u32 %v3212, 16
        %v3296 = vrot.slane %v3294, 4
        %v3297 = vor.u32 %v3296, %v3292
        %v3298 = vrot.slane %v3297, 4
        %v3300 = vshll.u32 %v3213, 16
        %v3302 = vrot.slane %v3300, 5
        %v3303 = vsel %vm1661, %v3298, %v3302
        %v3305 = vshrl.u32 %v3214, 16
        %v3307 = vrot.slane %v3305, 4
        %v3308 = vshll.u32 %v3214, 16
        %v3310 = vrot.slane %v3308, 5
        %v3311 = vor.u32 %v3307, %v3310
        %v3312 = vrot.slane %v3311, 4
        %v3314 = vshll.u32 %v3215, 16
        %v3316 = vrot.slane %v3314, 5
        %v3317 = vsel %vm1661, %v3312, %v3316
        %v3318 = vshrl.u32 %v3215, 16
        %v3320 = vrot.slane %v3318, 4
        %v3321 = vor.u32 %v3320, %v3316
        %v3322 = vrot.slane %v3321, 4
        %v3324 = vshll.u32 %v3216, 16
        %v3326 = vrot.slane %v3324, 5
        %v3327 = vsel %vm1661, %v3322, %v3326
        %v3329 = vshrl.u32 %v3217, 16
        %v3331 = vrot.slane %v3329, 4
        %v3332 = vshll.u32 %v3217, 16
        %v3334 = vrot.slane %v3332, 5
        %v3335 = vor.u32 %v3331, %v3334
        %v3336 = vrot.slane %v3335, 4
        %v3338 = vshll.u32 %v3218, 16
        %v3340 = vrot.slane %v3338, 5
        %v3341 = vsel %vm1661, %v3336, %v3340
        %v3342 = vshrl.u32 %v3218, 16
        %v3344 = vrot.slane %v3342, 4
        %v3345 = vor.u32 %v3344, %v3340
        %v3346 = vrot.slane %v3345, 4
        %v3348 = vshll.u32 %v3219, 16
        %v3350 = vrot.slane %v3348, 5
        %v3351 = vsel %vm1661, %v3346, %v3350
        %v3353 = vshrl.u32 %v3220, 16
        %v3355 = vrot.slane %v3353, 4
        %v3356 = vshll.u32 %v3220, 16
        %v3358 = vrot.slane %v3356, 5
        %v3359 = vor.u32 %v3355, %v3358
        %v3360 = vrot.slane %v3359, 4
        %v3362 = vshll.u32 %v3221, 16
        %v3364 = vrot.slane %v3362, 5
        %v3365 = vsel %vm1661, %v3360, %v3364
        %v3366 = vshrl.u32 %v3221, 16
        %v3368 = vrot.slane %v3366, 4
        %v3369 = vor.u32 %v3368, %v3364
        %v3370 = vrot.slane %v3369, 4
        %v3372 = vshll.u32 %v3222, 16
        %v3374 = vrot.slane %v3372, 5
        %v3375 = vsel %vm1661, %v3370, %v3374
        %v3377 = vshrl.u32 %v3223, 16
        %v3379 = vrot.slane %v3377, 4
        %v3380 = vshll.u32 %v3223, 16
        %v3382 = vrot.slane %v3380, 5
        %v3383 = vor.u32 %v3379, %v3382
        %v3384 = vrot.slane %v3383, 4
        %v3386 = vshll.u32 %v3224, 16
        %v3388 = vrot.slane %v3386, 5
        %v3389 = vsel %vm1661, %v3384, %v3388
        %v3390 = vshrl.u32 %v3224, 16
        %v3392 = vrot.slane %v3390, 4
        %v3393 = vor.u32 %v3392, %v3388
        %v3394 = vrot.slane %v3393, 4
        %v3396 = vshll.u32 %v3225, 16
        %v3398 = vrot.slane %v3396, 5
        %v3399 = vsel %vm1661, %v3394, %v3398
        %v3401 = vshrl.u32 %v3226, 16
        %v3403 = vrot.slane %v3401, 4
        %v3404 = vshll.u32 %v3226, 16
        %v3406 = vrot.slane %v3404, 5
        %v3407 = vor.u32 %v3403, %v3406
        %v3408 = vrot.slane %v3407, 4
        %v3410 = vshll.u32 %v3227, 16
        %v3412 = vrot.slane %v3410, 5
        %v3413 = vsel %vm1661, %v3408, %v3412
        %v3414 = vshrl.u32 %v3227, 16
        %v3416 = vrot.slane %v3414, 4
        %v3417 = vor.u32 %v3416, %v3412
        %v3418 = vrot.slane %v3417, 4
        %v3420 = vshll.u32 %v3228, 16
        %v3422 = vrot.slane %v3420, 5
        %v3423 = vsel %vm1661, %v3418, %v3422
        %v3425 = vshrl.u32 %v3229, 16
        %v3427 = vrot.slane %v3425, 4
        %v3428 = vshll.u32 %v3229, 16
        %v3430 = vrot.slane %v3428, 5
        %v3431 = vor.u32 %v3427, %v3430
        %v3432 = vrot.slane %v3431, 4
        %v3434 = vshll.u32 %v3230, 16
        %v3436 = vrot.slane %v3434, 5
        %v3437 = vsel %vm1661, %v3432, %v3436
        %v3438 = vshrl.u32 %v3230, 16
        %v3440 = vrot.slane %v3438, 4
        %v3441 = vor.u32 %v3440, %v3436
        %v3442 = vrot.slane %v3441, 4
        %v3444 = vshll.u32 %v3231, 16
        %v3446 = vrot.slane %v3444, 5
        %v3447 = vsel %vm1661, %v3442, %v3446
        %v3449 = vshrl.u32 %v3232, 16
        %v3451 = vrot.slane %v3449, 4
        %v3452 = vshll.u32 %v3232, 16
        %v3454 = vrot.slane %v3452, 5
        %v3455 = vor.u32 %v3451, %v3454
        %v3456 = vrot.slane %v3455, 4
        %v3458 = vshll.u32 %v3233, 16
        %v3460 = vrot.slane %v3458, 5
        %v3461 = vsel %vm1661, %v3456, %v3460
        %v3462 = vshrl.u32 %v3233, 16
        %v3464 = vrot.slane %v3462, 4
        %v3465 = vor.u32 %v3464, %v3460
        %v3466 = vrot.slane %v3465, 4
        %v3468 = vshll.u32 %v3234, 16
        %v3470 = vrot.slane %v3468, 5
        %v3471 = vsel %vm1661, %v3466, %v3470
        %v3473 = vshrl.u32 %v3235, 16
        %v3475 = vrot.slane %v3473, 4
        %v3476 = vshll.u32 %v3235, 16
        %v3478 = vrot.slane %v3476, 5
        %v3479 = vor.u32 %v3475, %v3478
        %v3480 = vrot.slane %v3479, 4
        %v3482 = vshll.u32 %v3236, 16
        %v3484 = vrot.slane %v3482, 5
        %v3485 = vsel %vm1661, %v3480, %v3484
        %v3486 = vshrl.u32 %v3236, 16
        %v3488 = vrot.slane %v3486, 4
        %v3489 = vor.u32 %v3488, %v3484
        %v3490 = vrot.slane %v3489, 4
        %v3492 = vshll.u32 %v3237, 16
        %v3494 = vrot.slane %v3492, 5
        %v3495 = vsel %vm1661, %v3490, %v3494
        %v3497 = vshrl.u32 %v3238, 16
        %v3499 = vrot.slane %v3497, 4
        %v3500 = vshll.u32 %v3238, 16
        %v3502 = vrot.slane %v3500, 5
        %v3503 = vor.u32 %v3499, %v3502
        %v3504 = vrot.slane %v3503, 4
        %v3506 = vshll.u32 %v3239, 16
        %v3508 = vrot.slane %v3506, 5
        %v3509 = vsel %vm1661, %v3504, %v3508
        %v3510 = vshrl.u32 %v3239, 16
        %v3512 = vrot.slane %v3510, 4
        %v3513 = vor.u32 %v3512, %v3508
        %v3514 = vrot.slane %v3513, 4
        %v3516 = vshll.u32 %v3240, 16
        %v3518 = vrot.slane %v3516, 5
        %v3519 = vsel %vm1661, %v3514, %v3518
        %v3521 = vshrl.u32 %v3241, 16
        %v3523 = vrot.slane %v3521, 4
        %v3524 = vshll.u32 %v3241, 16
        %v3526 = vrot.slane %v3524, 5
        %v3527 = vor.u32 %v3523, %v3526
        %v3528 = vrot.slane %v3527, 4
        %v3530 = vshll.u32 %v3242, 16
        %v3532 = vrot.slane %v3530, 5
        %v3533 = vsel %vm1661, %v3528, %v3532
        %v3534 = vshrl.u32 %v3242, 16
        %v3536 = vrot.slane %v3534, 4
        %v3537 = vor.u32 %v3536, %v3532
        %v3538 = vrot.slane %v3537, 4
        %v3540 = vshll.u32 %v3243, 16
        %v3542 = vrot.slane %v3540, 5
        %v3543 = vsel %vm1661, %v3538, %v3542
        %v3545 = vshrl.u32 %v3244, 16
        %v3547 = vrot.slane %v3545, 4
        %v3548 = vshll.u32 %v3244, 16
        %v3550 = vrot.slane %v3548, 5
        %v3551 = vor.u32 %v3547, %v3550
        %v3552 = vrot.slane %v3551, 4
        %v3554 = vshll.u32 %v3245, 16
        %v3556 = vrot.slane %v3554, 5
        %v3557 = vsel %vm1661, %v3552, %v3556
        %v3558 = vshrl.u32 %v3245, 16
        %v3560 = vrot.slane %v3558, 4
        %v3561 = vor.u32 %v3560, %v3556
        %v3562 = vrot.slane %v3561, 4
        %v3564 = vshll.u32 %v3246, 16
        %v3566 = vrot.slane %v3564, 5
        %v3567 = vsel %vm1661, %v3562, %v3566
        %v3569 = vshrl.u32 %v3247, 16
        %v3571 = vrot.slane %v3569, 4
        %v3572 = vshll.u32 %v3247, 16
        %v3574 = vrot.slane %v3572, 5
        %v3575 = vor.u32 %v3571, %v3574
        %v3576 = vrot.slane %v3575, 4
        %v3578 = vshll.u32 %v3248, 16
        %v3580 = vrot.slane %v3578, 5
        %v3581 = vsel %vm1661, %v3576, %v3580
        %v3582 = vshrl.u32 %v3248, 16
        %v3584 = vrot.slane %v3582, 4
        %v3585 = vor.u32 %v3584, %v3580
        %v3586 = vrot.slane %v3585, 4
        %v3588 = vshll.u32 %v3249, 16
        %v3590 = vrot.slane %v3588, 5
        %v3591 = vsel %vm1661, %v3586, %v3590
        %v3593 = vshrl.u32 %v3250, 16
        %v3595 = vrot.slane %v3593, 4
        %v3596 = vshll.u32 %v3250, 16
        %v3598 = vrot.slane %v3596, 5
        %v3599 = vor.u32 %v3595, %v3598
        %v3600 = vrot.slane %v3599, 4
        %v3602 = vshll.u32 %v3251, 16
        %v3604 = vrot.slane %v3602, 5
        %v3605 = vsel %vm1661, %v3600, %v3604
        %v3606 = vshrl.u32 %v3251, 16
        %v3608 = vrot.slane %v3606, 4
        %v3609 = vor.u32 %v3608, %v3604
        %v3610 = vrot.slane %v3609, 4
        %v3612 = vshll.u32 %v3252, 16
        %v3614 = vrot.slane %v3612, 5
        %v3615 = vsel %vm1661, %v3610, %v3614
        %v3617 = vshrl.u32 %v3253, 16
        %v3619 = vrot.slane %v3617, 4
        %v3620 = vshll.u32 %v3253, 16
        %v3622 = vrot.slane %v3620, 5
        %v3623 = vor.u32 %v3619, %v3622
        %v3624 = vrot.slane %v3623, 4
        %v3626 = vshll.u32 %v3254, 16
        %v3628 = vrot.slane %v3626, 5
        %v3629 = vsel %vm1661, %v3624, %v3628
        %v3630 = vshrl.u32 %v3254, 16
        %v3632 = vrot.slane %v3630, 4
        %v3633 = vor.u32 %v3632, %v3628
        %v3634 = vrot.slane %v3633, 4
        %v3636 = vshll.u32 %v3255, 16
        %v3638 = vrot.slane %v3636, 5
        %v3639 = vsel %vm1661, %v3634, %v3638
        %s3640 = scalar_lea.vmem %s3, 64
        %v3641 = vld [vmem:[%s3640] sm:$0xf]
        %v3642 = vld [vmem:[%s3640 + $0x4] sm:$0xf]
        %v3643 = vld [vmem:[%s3640 + $0x8] sm:$0xf]
        %v3644 = vld [vmem:[%s3640 + $0xc] sm:$0xf]
        %v3645 = vunpack.c.l.b16 %v3269
        %v3646 = vunpack.c.l.b16 %v3279
        %v3647 = vunpack.c.l.b16 %v3293
        %v3648 = vunpack.c.l.b16 %v3303
        %v3649 = vunpack.c.l.b16 %v3317
        %v3650 = vunpack.c.l.b16 %v3327
        %v3651 = vunpack.c.l.b16 %v3341
        %v3652 = vunpack.c.l.b16 %v3351
        %v3653 = vunpack.c.l.b16 %v3365
        %v3654 = vunpack.c.l.b16 %v3375
        %v3655 = vunpack.c.l.b16 %v3389
        %v3656 = vunpack.c.l.b16 %v3399
        %v3657 = vunpack.c.l.b16 %v3413
        %v3658 = vunpack.c.l.b16 %v3423
        %v3659 = vunpack.c.l.b16 %v3437
        %v3660 = vunpack.c.l.b16 %v3447
        %v3661 = vunpack.c.l.b16 %v3461
        %v3662 = vunpack.c.l.b16 %v3471
        %v3663 = vunpack.c.l.b16 %v3485
        %v3664 = vunpack.c.l.b16 %v3495
        %v3665 = vunpack.c.l.b16 %v3509
        %v3666 = vunpack.c.l.b16 %v3519
        %v3667 = vunpack.c.l.b16 %v3533
        %v3668 = vunpack.c.l.b16 %v3543
        %v3669 = vunpack.c.l.b16 %v3557
        %v3670 = vunpack.c.l.b16 %v3567
        %v3671 = vunpack.c.l.b16 %v3581
        %v3672 = vunpack.c.l.b16 %v3591
        %v3673 = vunpack.c.l.b16 %v3605
        %v3674 = vunpack.c.l.b16 %v3615
        %v3675 = vunpack.c.l.b16 %v3629
        %v3676 = vunpack.c.l.b16 %v3639
        %v3677 = vpack.c.b16 %v3646, %v3645
        %v3678 = vpack.c.b16 %v3648, %v3647
        %v3679 = vpack.c.b16 %v3650, %v3649
        %v3680 = vpack.c.b16 %v3652, %v3651
        %v3681 = vpack.c.b16 %v3654, %v3653
        %v3682 = vpack.c.b16 %v3656, %v3655
        %v3683 = vpack.c.b16 %v3658, %v3657
        %v3684 = vpack.c.b16 %v3660, %v3659
        %v3685 = vpack.c.b16 %v3662, %v3661
        %v3686 = vpack.c.b16 %v3664, %v3663
        %v3687 = vpack.c.b16 %v3666, %v3665
        %v3688 = vpack.c.b16 %v3668, %v3667
        %v3689 = vpack.c.b16 %v3670, %v3669
        %v3690 = vpack.c.b16 %v3672, %v3671
        %v3691 = vpack.c.b16 %v3674, %v3673
        %v3692 = vpack.c.b16 %v3676, %v3675
        %v3697 = vunpack.c.l.b16 %v3641
        %v3698 = vunpack.c.l.b16 %v3642
        %v3699 = vunpack.c.l.b16 %v3643
        %v3700 = vunpack.c.l.b16 %v3644
        %v3701 = vpack.c.b16 %v3698, %v3697
        %v3702 = vpack.c.b16 %v3700, %v3699
        %v3706 = vsel %vm1369, %v3677, 0
        %v3709 = vsel %vm1369, %v3678, 0
        %v3712 = vsel %vm1369, %v3679, 0
        %v3715 = vsel %vm1369, %v3680, 0
        %v3718 = vsel %vm1369, %v3681, 0
        %v3721 = vsel %vm1369, %v3682, 0
        %v3724 = vsel %vm1369, %v3683, 0
        %v3727 = vsel %vm1369, %v3684, 0
        %v3730 = vsel %vm1369, %v3685, 0
        %v3733 = vsel %vm1369, %v3686, 0
        %v3736 = vsel %vm1369, %v3687, 0
        %v3739 = vsel %vm1369, %v3688, 0
        %v3742 = vsel %vm1369, %v3689, 0
        %v3745 = vsel %vm1369, %v3690, 0
        %v3748 = vsel %vm1369, %v3691, 0
        %v3751 = vsel %vm1369, %v3692, 0
        %3753 = vmatprep.subr.bf16.mxu0 0
        %3754 = vmatpush1.bf16.msra.mxu0 %v3701
        %3755 = vmatprep.subr.bf16.mxu0 0
        %3756 = vmatpush1.bf16.msra.mxu0 %v3702
        %3757 = vmatprep.subr.bf16.mxu0 0
        %3758 = vmatpush1.bf16.msra.mxu0 0
        %3759 = vmatprep.subr.bf16.mxu0 0
        %3760 = vmatpush1.bf16.msra.mxu0 0
        %3761 = vmatprep.subr.bf16.mxu0 0
        %3762 = vmatpush1.bf16.msra.mxu0 0
        %3763 = vmatprep.subr.bf16.mxu0 0
        %3764 = vmatpush1.bf16.msra.mxu0 0
        %3765 = vmatprep.subr.bf16.mxu0 0
        %3766 = vmatpush1.bf16.msra.mxu0 0
        %3767 = vmatprep.subr.bf16.mxu0 0
        %3768 = vmatpush1.bf16.msra.mxu0 0
        %3769 = vmatprep.subr.bf16.mxu0 0
        %3770 = vmatpush1.bf16.msra.mxu0 0
        %3771 = vmatprep.subr.bf16.mxu0 0
        %3772 = vmatpush1.bf16.msra.mxu0 0
        %3773 = vmatprep.subr.bf16.mxu0 0
        %3774 = vmatpush1.bf16.msra.mxu0 0
        %3775 = vmatprep.subr.bf16.mxu0 0
        %3776 = vmatpush1.bf16.msra.mxu0 0
        %3777 = vmatprep.subr.bf16.mxu0 0
        %3778 = vmatpush1.bf16.msra.mxu0 0
        %3779 = vmatprep.subr.bf16.mxu0 0
        %3780 = vmatpush1.bf16.msra.mxu0 0
        %3781 = vmatprep.subr.bf16.mxu0 0
        %3782 = vmatpush1.bf16.msra.mxu0 0
        %3783 = vmatprep.subr.bf16.mxu0 0
        %3784 = vmatpush1.bf16.msra.mxu0 0
        %3785 = vmatprep.mubr.bf16.mxu0 0
        %3786 = vmatmul.mubr.bf16.gmra.mrb[0].mxu0 %v3706
        %v3787 = vpop.f32.mrb[0].mxu0
        %v3788 = vadd.f32 0.0, %v3787
        %v3789 = vpop.f32.mrb[0].mxu0
        %v3790 = vpop.f32.mrb[0].mxu0
        %v3791 = vadd.f32 0.0, %v3790
        %v3792 = vpop.f32.mrb[0].mxu0
        %3793 = vmatprep.mubr.bf16.mxu0 0
        %3794 = vmatmul.mubr.bf16.gmra.mrb[0].mxu0 %v3709
        %v3795 = vpop.f32.mrb[0].mxu0
        %v3796 = vadd.f32 0.0, %v3795
        %v3797 = vpop.f32.mrb[0].mxu0
        %v3798 = vpop.f32.mrb[0].mxu0
        %v3799 = vadd.f32 0.0, %v3798
        %v3800 = vpop.f32.mrb[0].mxu0
        %3801 = vmatprep.mubr.bf16.mxu0 0
        %3802 = vmatmul.mubr.bf16.gmra.mrb[0].mxu0 %v3712
        %v3803 = vpop.f32.mrb[0].mxu0
        %v3804 = vadd.f32 0.0, %v3803
        %v3805 = vpop.f32.mrb[0].mxu0
        %v3806 = vpop.f32.mrb[0].mxu0
        %v3807 = vadd.f32 0.0, %v3806
        %v3808 = vpop.f32.mrb[0].mxu0
        %3809 = vmatprep.mubr.bf16.mxu0 0
        %3810 = vmatmul.mubr.bf16.gmra.mrb[0].mxu0 %v3715
        %v3811 = vpop.f32.mrb[0].mxu0
        %v3812 = vadd.f32 0.0, %v3811
        %v3813 = vpop.f32.mrb[0].mxu0
        %v3814 = vpop.f32.mrb[0].mxu0
        %v3815 = vadd.f32 0.0, %v3814
        %v3816 = vpop.f32.mrb[0].mxu0
        %3817 = vmatprep.mubr.bf16.mxu0 0
        %3818 = vmatmul.mubr.bf16.gmra.mrb[0].mxu0 %v3718
        %v3819 = vpop.f32.mrb[0].mxu0
        %v3820 = vadd.f32 0.0, %v3819
        %v3821 = vpop.f32.mrb[0].mxu0
        %v3822 = vpop.f32.mrb[0].mxu0
        %v3823 = vadd.f32 0.0, %v3822
        %v3824 = vpop.f32.mrb[0].mxu0
        %3825 = vmatprep.mubr.bf16.mxu0 0
        %3826 = vmatmul.mubr.bf16.gmra.mrb[0].mxu0 %v3721
        %v3827 = vpop.f32.mrb[0].mxu0
        %v3828 = vadd.f32 0.0, %v3827
        %v3829 = vpop.f32.mrb[0].mxu0
        %v3830 = vpop.f32.mrb[0].mxu0
        %v3831 = vadd.f32 0.0, %v3830
        %v3832 = vpop.f32.mrb[0].mxu0
        %3833 = vmatprep.mubr.bf16.mxu0 0
        %3834 = vmatmul.mubr.bf16.gmra.mrb[0].mxu0 %v3724
        %v3835 = vpop.f32.mrb[0].mxu0
        %v3836 = vadd.f32 0.0, %v3835
        %v3837 = vpop.f32.mrb[0].mxu0
        %v3838 = vpop.f32.mrb[0].mxu0
        %v3839 = vadd.f32 0.0, %v3838
        %v3840 = vpop.f32.mrb[0].mxu0
        %3841 = vmatprep.mubr.bf16.mxu0 0
        %3842 = vmatmul.mubr.bf16.gmra.mrb[0].mxu0 %v3727
        %v3843 = vpop.f32.mrb[0].mxu0
        %v3844 = vadd.f32 0.0, %v3843
        %v3845 = vpop.f32.mrb[0].mxu0
        %v3846 = vpop.f32.mrb[0].mxu0
        %v3847 = vadd.f32 0.0, %v3846
        %v3848 = vpop.f32.mrb[0].mxu0
        %3849 = vmatprep.mubr.bf16.mxu0 0
        %3850 = vmatmul.mubr.bf16.gmra.mrb[0].mxu0 %v3730
        %v3851 = vpop.f32.mrb[0].mxu0
        %v3852 = vadd.f32 0.0, %v3851
        %v3853 = vpop.f32.mrb[0].mxu0
        %v3854 = vpop.f32.mrb[0].mxu0
        %v3855 = vadd.f32 0.0, %v3854
        %v3856 = vpop.f32.mrb[0].mxu0
        %3857 = vmatprep.mubr.bf16.mxu0 0
        %3858 = vmatmul.mubr.bf16.gmra.mrb[0].mxu0 %v3733
        %v3859 = vpop.f32.mrb[0].mxu0
        %v3860 = vadd.f32 0.0, %v3859
        %v3861 = vpop.f32.mrb[0].mxu0
        %v3862 = vpop.f32.mrb[0].mxu0
        %v3863 = vadd.f32 0.0, %v3862
        %v3864 = vpop.f32.mrb[0].mxu0
        %3865 = vmatprep.mubr.bf16.mxu0 0
        %3866 = vmatmul.mubr.bf16.gmra.mrb[0].mxu0 %v3736
        %v3867 = vpop.f32.mrb[0].mxu0
        %v3868 = vadd.f32 0.0, %v3867
        %v3869 = vpop.f32.mrb[0].mxu0
        %v3870 = vpop.f32.mrb[0].mxu0
        %v3871 = vadd.f32 0.0, %v3870
        %v3872 = vpop.f32.mrb[0].mxu0
        %3873 = vmatprep.mubr.bf16.mxu0 0
        %3874 = vmatmul.mubr.bf16.gmra.mrb[0].mxu0 %v3739
        %v3875 = vpop.f32.mrb[0].mxu0
        %v3876 = vadd.f32 0.0, %v3875
        %v3877 = vpop.f32.mrb[0].mxu0
        %v3878 = vpop.f32.mrb[0].mxu0
        %v3879 = vadd.f32 0.0, %v3878
        %v3880 = vpop.f32.mrb[0].mxu0
        %3881 = vmatprep.mubr.bf16.mxu0 0
        %3882 = vmatmul.mubr.bf16.gmra.mrb[0].mxu0 %v3742
        %v3883 = vpop.f32.mrb[0].mxu0
        %v3884 = vadd.f32 0.0, %v3883
        %v3885 = vpop.f32.mrb[0].mxu0
        %v3886 = vpop.f32.mrb[0].mxu0
        %v3887 = vadd.f32 0.0, %v3886
        %v3888 = vpop.f32.mrb[0].mxu0
        %3889 = vmatprep.mubr.bf16.mxu0 0
        %3890 = vmatmul.mubr.bf16.gmra.mrb[0].mxu0 %v3745
        %v3891 = vpop.f32.mrb[0].mxu0
        %v3892 = vadd.f32 0.0, %v3891
        %v3893 = vpop.f32.mrb[0].mxu0
        %v3894 = vpop.f32.mrb[0].mxu0
        %v3895 = vadd.f32 0.0, %v3894
        %v3896 = vpop.f32.mrb[0].mxu0
        %3897 = vmatprep.mubr.bf16.mxu0 0
        %3898 = vmatmul.mubr.bf16.gmra.mrb[0].mxu0 %v3748
        %v3899 = vpop.f32.mrb[0].mxu0
        %v3900 = vadd.f32 0.0, %v3899
        %v3901 = vpop.f32.mrb[0].mxu0
        %v3902 = vpop.f32.mrb[0].mxu0
        %v3903 = vadd.f32 0.0, %v3902
        %v3904 = vpop.f32.mrb[0].mxu0
        %3905 = vmatprep.mubr.bf16.mxu0 0
        %3906 = vmatmul.mubr.bf16.gmra.mrb[0].mxu0 %v3751
        %v3907 = vpop.f32.mrb[0].mxu0
        %v3908 = vadd.f32 0.0, %v3907
        %v3909 = vpop.f32.mrb[0].mxu0
        %v3910 = vpop.f32.mrb[0].mxu0
        %v3911 = vadd.f32 0.0, %v3910
        %v3912 = vpop.f32.mrb[0].mxu0
        %3913 = vdwg.mxu0
        %v3914 = vadd.f32 %v3176, %v3788
        %v3915 = vadd.f32 %v3177, %v3791
        %v3916 = vadd.f32 %v3178, %v3796
        %v3917 = vadd.f32 %v3179, %v3799
        %v3918 = vadd.f32 %v3180, %v3804
        %v3919 = vadd.f32 %v3181, %v3807
        %v3920 = vadd.f32 %v3182, %v3812
        %v3921 = vadd.f32 %v3183, %v3815
        %v3922 = vadd.f32 %v3184, %v3820
        %v3923 = vadd.f32 %v3185, %v3823
        %v3924 = vadd.f32 %v3186, %v3828
        %v3925 = vadd.f32 %v3187, %v3831
        %v3926 = vadd.f32 %v3188, %v3836
        %v3927 = vadd.f32 %v3189, %v3839
        %v3928 = vadd.f32 %v3190, %v3844
        %v3929 = vadd.f32 %v3191, %v3847
        %v3930 = vadd.f32 %v3192, %v3852
        %v3931 = vadd.f32 %v3193, %v3855
        %v3932 = vadd.f32 %v3194, %v3860
        %v3933 = vadd.f32 %v3195, %v3863
        %v3934 = vadd.f32 %v3196, %v3868
        %v3935 = vadd.f32 %v3197, %v3871
        %v3936 = vadd.f32 %v3198, %v3876
        %v3937 = vadd.f32 %v3199, %v3879
        %v3938 = vadd.f32 %v3200, %v3884
        %v3939 = vadd.f32 %v3201, %v3887
        %v3940 = vadd.f32 %v3202, %v3892
        %v3941 = vadd.f32 %v3203, %v3895
        %v3942 = vadd.f32 %v3204, %v3900
        %v3943 = vadd.f32 %v3205, %v3903
        %v3944 = vadd.f32 %v3206, %v3908
        %v3945 = vadd.f32 %v3207, %v3911
        %v3946 = vld [vmem:[%s2837] sm:$0xe]
        %v3947 = vld [vmem:[%s2837 + $0xc] sm:$0xe]
        %v3948 = vld [vmem:[%s2837 + $0x18] sm:$0xe]
        %v3949 = vld [vmem:[%s2837 + $0x24] sm:$0xe]
        %v3950 = vld [vmem:[%s2837 + $0x30] sm:$0xe]
        %v3951 = vld [vmem:[%s2837 + $0x3c] sm:$0xe]
        %v3952 = vld [vmem:[%s2837 + $0x48] sm:$0xe]
        %v3953 = vld [vmem:[%s2837 + $0x54] sm:$0xe]
        %v3954 = vld [vmem:[%s2837 + $0x60] sm:$0xe]
        %v3955 = vld [vmem:[%s2837 + $0x6c] sm:$0xe]
        %v3956 = vld [vmem:[%s2837 + $0x78] sm:$0xe]
        %v3957 = vld [vmem:[%s2837 + $0x84] sm:$0xe]
        %v3958 = vld [vmem:[%s2837 + $0x90] sm:$0xe]
        %v3959 = vld [vmem:[%s2837 + $0x9c] sm:$0xe]
        %v3960 = vld [vmem:[%s2837 + $0xa8] sm:$0xe]
        %v3961 = vld [vmem:[%s2837 + $0xb4] sm:$0xe]
        %v4010 = vrot.slane %v3946, 5
        %v4011 = vrot.slane %v4010, 4
        %v4012 = vrot.slane %v3209, 5
        %v4013 = vsel %vm2418, %v4011, %v4012
        %v4014 = vrot.slane %v4012, 4
        %v4015 = vrot.slane %v3210, 5
        %v4016 = vsel %vm2418, %v4014, %v4015
        %v4017 = vrot.slane %v3947, 5
        %v4018 = vrot.slane %v4017, 4
        %v4019 = vrot.slane %v3212, 5
        %v4020 = vsel %vm2418, %v4018, %v4019
        %v4021 = vrot.slane %v4019, 4
        %v4022 = vrot.slane %v3213, 5
        %v4023 = vsel %vm2418, %v4021, %v4022
        %v4024 = vrot.slane %v3948, 5
        %v4025 = vrot.slane %v4024, 4
        %v4026 = vrot.slane %v3215, 5
        %v4027 = vsel %vm2418, %v4025, %v4026
        %v4028 = vrot.slane %v4026, 4
        %v4029 = vrot.slane %v3216, 5
        %v4030 = vsel %vm2418, %v4028, %v4029
        %v4031 = vrot.slane %v3949, 5
        %v4032 = vrot.slane %v4031, 4
        %v4033 = vrot.slane %v3218, 5
        %v4034 = vsel %vm2418, %v4032, %v4033
        %v4035 = vrot.slane %v4033, 4
        %v4036 = vrot.slane %v3219, 5
        %v4037 = vsel %vm2418, %v4035, %v4036
        %v4038 = vrot.slane %v3950, 5
        %v4039 = vrot.slane %v4038, 4
        %v4040 = vrot.slane %v3221, 5
        %v4041 = vsel %vm2418, %v4039, %v4040
        %v4042 = vrot.slane %v4040, 4
        %v4043 = vrot.slane %v3222, 5
        %v4044 = vsel %vm2418, %v4042, %v4043
        %v4045 = vrot.slane %v3951, 5
        %v4046 = vrot.slane %v4045, 4
        %v4047 = vrot.slane %v3224, 5
        %v4048 = vsel %vm2418, %v4046, %v4047
        %v4049 = vrot.slane %v4047, 4
        %v4050 = vrot.slane %v3225, 5
        %v4051 = vsel %vm2418, %v4049, %v4050
        %v4052 = vrot.slane %v3952, 5
        %v4053 = vrot.slane %v4052, 4
        %v4054 = vrot.slane %v3227, 5
        %v4055 = vsel %vm2418, %v4053, %v4054
        %v4056 = vrot.slane %v4054, 4
        %v4057 = vrot.slane %v3228, 5
        %v4058 = vsel %vm2418, %v4056, %v4057
        %v4059 = vrot.slane %v3953, 5
        %v4060 = vrot.slane %v4059, 4
        %v4061 = vrot.slane %v3230, 5
        %v4062 = vsel %vm2418, %v4060, %v4061
        %v4063 = vrot.slane %v4061, 4
        %v4064 = vrot.slane %v3231, 5
        %v4065 = vsel %vm2418, %v4063, %v4064
        %v4066 = vrot.slane %v3954, 5
        %v4067 = vrot.slane %v4066, 4
        %v4068 = vrot.slane %v3233, 5
        %v4069 = vsel %vm2418, %v4067, %v4068
        %v4070 = vrot.slane %v4068, 4
        %v4071 = vrot.slane %v3234, 5
        %v4072 = vsel %vm2418, %v4070, %v4071
        %v4073 = vrot.slane %v3955, 5
        %v4074 = vrot.slane %v4073, 4
        %v4075 = vrot.slane %v3236, 5
        %v4076 = vsel %vm2418, %v4074, %v4075
        %v4077 = vrot.slane %v4075, 4
        %v4078 = vrot.slane %v3237, 5
        %v4079 = vsel %vm2418, %v4077, %v4078
        %v4080 = vrot.slane %v3956, 5
        %v4081 = vrot.slane %v4080, 4
        %v4082 = vrot.slane %v3239, 5
        %v4083 = vsel %vm2418, %v4081, %v4082
        %v4084 = vrot.slane %v4082, 4
        %v4085 = vrot.slane %v3240, 5
        %v4086 = vsel %vm2418, %v4084, %v4085
        %v4087 = vrot.slane %v3957, 5
        %v4088 = vrot.slane %v4087, 4
        %v4089 = vrot.slane %v3242, 5
        %v4090 = vsel %vm2418, %v4088, %v4089
        %v4091 = vrot.slane %v4089, 4
        %v4092 = vrot.slane %v3243, 5
        %v4093 = vsel %vm2418, %v4091, %v4092
        %v4094 = vrot.slane %v3958, 5
        %v4095 = vrot.slane %v4094, 4
        %v4096 = vrot.slane %v3245, 5
        %v4097 = vsel %vm2418, %v4095, %v4096
        %v4098 = vrot.slane %v4096, 4
        %v4099 = vrot.slane %v3246, 5
        %v4100 = vsel %vm2418, %v4098, %v4099
        %v4101 = vrot.slane %v3959, 5
        %v4102 = vrot.slane %v4101, 4
        %v4103 = vrot.slane %v3248, 5
        %v4104 = vsel %vm2418, %v4102, %v4103
        %v4105 = vrot.slane %v4103, 4
        %v4106 = vrot.slane %v3249, 5
        %v4107 = vsel %vm2418, %v4105, %v4106
        %v4108 = vrot.slane %v3960, 5
        %v4109 = vrot.slane %v4108, 4
        %v4110 = vrot.slane %v3251, 5
        %v4111 = vsel %vm2418, %v4109, %v4110
        %v4112 = vrot.slane %v4110, 4
        %v4113 = vrot.slane %v3252, 5
        %v4114 = vsel %vm2418, %v4112, %v4113
        %v4115 = vrot.slane %v3961, 5
        %v4116 = vrot.slane %v4115, 4
        %v4117 = vrot.slane %v3254, 5
        %v4118 = vsel %vm2418, %v4116, %v4117
        %v4119 = vrot.slane %v4117, 4
        %v4120 = vrot.slane %v3255, 5
        %v4121 = vsel %vm2418, %v4119, %v4120
        %s4122 = scalar_lea.vmem %s3, 80
        %v4123 = vld [vmem:[%s4122] sm:$0xf]
        %v4124 = vld [vmem:[%s4122 + $0x4] sm:$0xf]
        %v4125 = vld [vmem:[%s4122 + $0x8] sm:$0xf]
        %v4126 = vld [vmem:[%s4122 + $0xc] sm:$0xf]
        %v4127 = vunpack.c.l.b16 %v4013
        %v4128 = vunpack.c.l.b16 %v4016
        %v4129 = vunpack.c.l.b16 %v4020
        %v4130 = vunpack.c.l.b16 %v4023
        %v4131 = vunpack.c.l.b16 %v4027
        %v4132 = vunpack.c.l.b16 %v4030
        %v4133 = vunpack.c.l.b16 %v4034
        %v4134 = vunpack.c.l.b16 %v4037
        %v4135 = vunpack.c.l.b16 %v4041
        %v4136 = vunpack.c.l.b16 %v4044
        %v4137 = vunpack.c.l.b16 %v4048
        %v4138 = vunpack.c.l.b16 %v4051
        %v4139 = vunpack.c.l.b16 %v4055
        %v4140 = vunpack.c.l.b16 %v4058
        %v4141 = vunpack.c.l.b16 %v4062
        %v4142 = vunpack.c.l.b16 %v4065
        %v4143 = vunpack.c.l.b16 %v4069
        %v4144 = vunpack.c.l.b16 %v4072
        %v4145 = vunpack.c.l.b16 %v4076
        %v4146 = vunpack.c.l.b16 %v4079
        %v4147 = vunpack.c.l.b16 %v4083
        %v4148 = vunpack.c.l.b16 %v4086
        %v4149 = vunpack.c.l.b16 %v4090
        %v4150 = vunpack.c.l.b16 %v4093
        %v4151 = vunpack.c.l.b16 %v4097
        %v4152 = vunpack.c.l.b16 %v4100
        %v4153 = vunpack.c.l.b16 %v4104
        %v4154 = vunpack.c.l.b16 %v4107
        %v4155 = vunpack.c.l.b16 %v4111
        %v4156 = vunpack.c.l.b16 %v4114
        %v4157 = vunpack.c.l.b16 %v4118
        %v4158 = vunpack.c.l.b16 %v4121
        %v4159 = vpack.c.b16 %v4128, %v4127
        %v4160 = vpack.c.b16 %v4130, %v4129
        %v4161 = vpack.c.b16 %v4132, %v4131
        %v4162 = vpack.c.b16 %v4134, %v4133
        %v4163 = vpack.c.b16 %v4136, %v4135
        %v4164 = vpack.c.b16 %v4138, %v4137
        %v4165 = vpack.c.b16 %v4140, %v4139
        %v4166 = vpack.c.b16 %v4142, %v4141
        %v4167 = vpack.c.b16 %v4144, %v4143
        %v4168 = vpack.c.b16 %v4146, %v4145
        %v4169 = vpack.c.b16 %v4148, %v4147
        %v4170 = vpack.c.b16 %v4150, %v4149
        %v4171 = vpack.c.b16 %v4152, %v4151
        %v4172 = vpack.c.b16 %v4154, %v4153
        %v4173 = vpack.c.b16 %v4156, %v4155
        %v4174 = vpack.c.b16 %v4158, %v4157
        %v4179 = vunpack.c.l.b16 %v4123
        %v4180 = vunpack.c.l.b16 %v4124
        %v4181 = vunpack.c.l.b16 %v4125
        %v4182 = vunpack.c.l.b16 %v4126
        %v4183 = vpack.c.b16 %v4180, %v4179
        %v4184 = vpack.c.b16 %v4182, %v4181
        %v4188 = vsel %vm1369, %v4159, 0
        %v4191 = vsel %vm1369, %v4160, 0
        %v4194 = vsel %vm1369, %v4161, 0
        %v4197 = vsel %vm1369, %v4162, 0
        %v4200 = vsel %vm1369, %v4163, 0
        %v4203 = vsel %vm1369, %v4164, 0
        %v4206 = vsel %vm1369, %v4165, 0
        %v4209 = vsel %vm1369, %v4166, 0
        %v4212 = vsel %vm1369, %v4167, 0
        %v4215 = vsel %vm1369, %v4168, 0
        %v4218 = vsel %vm1369, %v4169, 0
        %v4221 = vsel %vm1369, %v4170, 0
        %v4224 = vsel %vm1369, %v4171, 0
        %v4227 = vsel %vm1369, %v4172, 0
        %v4230 = vsel %vm1369, %v4173, 0
        %v4233 = vsel %vm1369, %v4174, 0
        %4235 = vmatprep.subr.bf16.mxu0 0
        %4236 = vmatpush1.bf16.msra.mxu0 %v4183
        %4237 = vmatprep.subr.bf16.mxu0 0
        %4238 = vmatpush1.bf16.msra.mxu0 %v4184
        %4239 = vmatprep.subr.bf16.mxu0 0
        %4240 = vmatpush1.bf16.msra.mxu0 0
        %4241 = vmatprep.subr.bf16.mxu0 0
        %4242 = vmatpush1.bf16.msra.mxu0 0
        %4243 = vmatprep.subr.bf16.mxu0 0
        %4244 = vmatpush1.bf16.msra.mxu0 0
        %4245 = vmatprep.subr.bf16.mxu0 0
        %4246 = vmatpush1.bf16.msra.mxu0 0
        %4247 = vmatprep.subr.bf16.mxu0 0
        %4248 = vmatpush1.bf16.msra.mxu0 0
        %4249 = vmatprep.subr.bf16.mxu0 0
        %4250 = vmatpush1.bf16.msra.mxu0 0
        %4251 = vmatprep.subr.bf16.mxu0 0
        %4252 = vmatpush1.bf16.msra.mxu0 0
        %4253 = vmatprep.subr.bf16.mxu0 0
        %4254 = vmatpush1.bf16.msra.mxu0 0
        %4255 = vmatprep.subr.bf16.mxu0 0
        %4256 = vmatpush1.bf16.msra.mxu0 0
        %4257 = vmatprep.subr.bf16.mxu0 0
        %4258 = vmatpush1.bf16.msra.mxu0 0
        %4259 = vmatprep.subr.bf16.mxu0 0
        %4260 = vmatpush1.bf16.msra.mxu0 0
        %4261 = vmatprep.subr.bf16.mxu0 0
        %4262 = vmatpush1.bf16.msra.mxu0 0
        %4263 = vmatprep.subr.bf16.mxu0 0
        %4264 = vmatpush1.bf16.msra.mxu0 0
        %4265 = vmatprep.subr.bf16.mxu0 0
        %4266 = vmatpush1.bf16.msra.mxu0 0
        %4267 = vmatprep.mubr.bf16.mxu0 0
        %4268 = vmatmul.mubr.bf16.gmra.mrb[0].mxu0 %v4188
        %v4269 = vpop.f32.mrb[0].mxu0
        %v4270 = vadd.f32 0.0, %v4269
        %v4271 = vpop.f32.mrb[0].mxu0
        %v4272 = vpop.f32.mrb[0].mxu0
        %v4273 = vadd.f32 0.0, %v4272
        %v4274 = vpop.f32.mrb[0].mxu0
        %4275 = vmatprep.mubr.bf16.mxu0 0
        %4276 = vmatmul.mubr.bf16.gmra.mrb[0].mxu0 %v4191
        %v4277 = vpop.f32.mrb[0].mxu0
        %v4278 = vadd.f32 0.0, %v4277
        %v4279 = vpop.f32.mrb[0].mxu0
        %v4280 = vpop.f32.mrb[0].mxu0
        %v4281 = vadd.f32 0.0, %v4280
        %v4282 = vpop.f32.mrb[0].mxu0
        %4283 = vmatprep.mubr.bf16.mxu0 0
        %4284 = vmatmul.mubr.bf16.gmra.mrb[0].mxu0 %v4194
        %v4285 = vpop.f32.mrb[0].mxu0
        %v4286 = vadd.f32 0.0, %v4285
        %v4287 = vpop.f32.mrb[0].mxu0
        %v4288 = vpop.f32.mrb[0].mxu0
        %v4289 = vadd.f32 0.0, %v4288
        %v4290 = vpop.f32.mrb[0].mxu0
        %4291 = vmatprep.mubr.bf16.mxu0 0
        %4292 = vmatmul.mubr.bf16.gmra.mrb[0].mxu0 %v4197
        %v4293 = vpop.f32.mrb[0].mxu0
        %v4294 = vadd.f32 0.0, %v4293
        %v4295 = vpop.f32.mrb[0].mxu0
        %v4296 = vpop.f32.mrb[0].mxu0
        %v4297 = vadd.f32 0.0, %v4296
        %v4298 = vpop.f32.mrb[0].mxu0
        %4299 = vmatprep.mubr.bf16.mxu0 0
        %4300 = vmatmul.mubr.bf16.gmra.mrb[0].mxu0 %v4200
        %v4301 = vpop.f32.mrb[0].mxu0
        %v4302 = vadd.f32 0.0, %v4301
        %v4303 = vpop.f32.mrb[0].mxu0
        %v4304 = vpop.f32.mrb[0].mxu0
        %v4305 = vadd.f32 0.0, %v4304
        %v4306 = vpop.f32.mrb[0].mxu0
        %4307 = vmatprep.mubr.bf16.mxu0 0
        %4308 = vmatmul.mubr.bf16.gmra.mrb[0].mxu0 %v4203
        %v4309 = vpop.f32.mrb[0].mxu0
        %v4310 = vadd.f32 0.0, %v4309
        %v4311 = vpop.f32.mrb[0].mxu0
        %v4312 = vpop.f32.mrb[0].mxu0
        %v4313 = vadd.f32 0.0, %v4312
        %v4314 = vpop.f32.mrb[0].mxu0
        %4315 = vmatprep.mubr.bf16.mxu0 0
        %4316 = vmatmul.mubr.bf16.gmra.mrb[0].mxu0 %v4206
        %v4317 = vpop.f32.mrb[0].mxu0
        %v4318 = vadd.f32 0.0, %v4317
        %v4319 = vpop.f32.mrb[0].mxu0
        %v4320 = vpop.f32.mrb[0].mxu0
        %v4321 = vadd.f32 0.0, %v4320
        %v4322 = vpop.f32.mrb[0].mxu0
        %4323 = vmatprep.mubr.bf16.mxu0 0
        %4324 = vmatmul.mubr.bf16.gmra.mrb[0].mxu0 %v4209
        %v4325 = vpop.f32.mrb[0].mxu0
        %v4326 = vadd.f32 0.0, %v4325
        %v4327 = vpop.f32.mrb[0].mxu0
        %v4328 = vpop.f32.mrb[0].mxu0
        %v4329 = vadd.f32 0.0, %v4328
        %v4330 = vpop.f32.mrb[0].mxu0
        %4331 = vmatprep.mubr.bf16.mxu0 0
        %4332 = vmatmul.mubr.bf16.gmra.mrb[0].mxu0 %v4212
        %v4333 = vpop.f32.mrb[0].mxu0
        %v4334 = vadd.f32 0.0, %v4333
        %v4335 = vpop.f32.mrb[0].mxu0
        %v4336 = vpop.f32.mrb[0].mxu0
        %v4337 = vadd.f32 0.0, %v4336
        %v4338 = vpop.f32.mrb[0].mxu0
        %4339 = vmatprep.mubr.bf16.mxu0 0
        %4340 = vmatmul.mubr.bf16.gmra.mrb[0].mxu0 %v4215
        %v4341 = vpop.f32.mrb[0].mxu0
        %v4342 = vadd.f32 0.0, %v4341
        %v4343 = vpop.f32.mrb[0].mxu0
        %v4344 = vpop.f32.mrb[0].mxu0
        %v4345 = vadd.f32 0.0, %v4344
        %v4346 = vpop.f32.mrb[0].mxu0
        %4347 = vmatprep.mubr.bf16.mxu0 0
        %4348 = vmatmul.mubr.bf16.gmra.mrb[0].mxu0 %v4218
        %v4349 = vpop.f32.mrb[0].mxu0
        %v4350 = vadd.f32 0.0, %v4349
        %v4351 = vpop.f32.mrb[0].mxu0
        %v4352 = vpop.f32.mrb[0].mxu0
        %v4353 = vadd.f32 0.0, %v4352
        %v4354 = vpop.f32.mrb[0].mxu0
        %4355 = vmatprep.mubr.bf16.mxu0 0
        %4356 = vmatmul.mubr.bf16.gmra.mrb[0].mxu0 %v4221
        %v4357 = vpop.f32.mrb[0].mxu0
        %v4358 = vadd.f32 0.0, %v4357
        %v4359 = vpop.f32.mrb[0].mxu0
        %v4360 = vpop.f32.mrb[0].mxu0
        %v4361 = vadd.f32 0.0, %v4360
        %v4362 = vpop.f32.mrb[0].mxu0
        %4363 = vmatprep.mubr.bf16.mxu0 0
        %4364 = vmatmul.mubr.bf16.gmra.mrb[0].mxu0 %v4224
        %v4365 = vpop.f32.mrb[0].mxu0
        %v4366 = vadd.f32 0.0, %v4365
        %v4367 = vpop.f32.mrb[0].mxu0
        %v4368 = vpop.f32.mrb[0].mxu0
        %v4369 = vadd.f32 0.0, %v4368
        %v4370 = vpop.f32.mrb[0].mxu0
        %4371 = vmatprep.mubr.bf16.mxu0 0
        %4372 = vmatmul.mubr.bf16.gmra.mrb[0].mxu0 %v4227
        %v4373 = vpop.f32.mrb[0].mxu0
        %v4374 = vadd.f32 0.0, %v4373
        %v4375 = vpop.f32.mrb[0].mxu0
        %v4376 = vpop.f32.mrb[0].mxu0
        %v4377 = vadd.f32 0.0, %v4376
        %v4378 = vpop.f32.mrb[0].mxu0
        %4379 = vmatprep.mubr.bf16.mxu0 0
        %4380 = vmatmul.mubr.bf16.gmra.mrb[0].mxu0 %v4230
        %v4381 = vpop.f32.mrb[0].mxu0
        %v4382 = vadd.f32 0.0, %v4381
        %v4383 = vpop.f32.mrb[0].mxu0
        %v4384 = vpop.f32.mrb[0].mxu0
        %v4385 = vadd.f32 0.0, %v4384
        %v4386 = vpop.f32.mrb[0].mxu0
        %4387 = vmatprep.mubr.bf16.mxu0 0
        %4388 = vmatmul.mubr.bf16.gmra.mrb[0].mxu0 %v4233
        %v4389 = vpop.f32.mrb[0].mxu0
        %v4390 = vadd.f32 0.0, %v4389
        %v4391 = vpop.f32.mrb[0].mxu0
        %v4392 = vpop.f32.mrb[0].mxu0
        %v4393 = vadd.f32 0.0, %v4392
        %v4394 = vpop.f32.mrb[0].mxu0
        %4395 = vdwg.mxu0
        %v4396 = vadd.f32 %v3914, %v4270
        %v4397 = vadd.f32 %v3915, %v4273
        %v4398 = vadd.f32 %v3916, %v4278
        %v4399 = vadd.f32 %v3917, %v4281
        %v4400 = vadd.f32 %v3918, %v4286
        %v4401 = vadd.f32 %v3919, %v4289
        %v4402 = vadd.f32 %v3920, %v4294
        %v4403 = vadd.f32 %v3921, %v4297
        %v4404 = vadd.f32 %v3922, %v4302
        %v4405 = vadd.f32 %v3923, %v4305
        %v4406 = vadd.f32 %v3924, %v4310
        %v4407 = vadd.f32 %v3925, %v4313
        %v4408 = vadd.f32 %v3926, %v4318
        %v4409 = vadd.f32 %v3927, %v4321
        %v4410 = vadd.f32 %v3928, %v4326
        %v4411 = vadd.f32 %v3929, %v4329
        %v4412 = vadd.f32 %v3930, %v4334
        %v4413 = vadd.f32 %v3931, %v4337
        %v4414 = vadd.f32 %v3932, %v4342
        %v4415 = vadd.f32 %v3933, %v4345
        %v4416 = vadd.f32 %v3934, %v4350
        %v4417 = vadd.f32 %v3935, %v4353
        %v4418 = vadd.f32 %v3936, %v4358
        %v4419 = vadd.f32 %v3937, %v4361
        %v4420 = vadd.f32 %v3938, %v4366
        %v4421 = vadd.f32 %v3939, %v4369
        %v4422 = vadd.f32 %v3940, %v4374
        %v4423 = vadd.f32 %v3941, %v4377
        %v4424 = vadd.f32 %v3942, %v4382
        %v4425 = vadd.f32 %v3943, %v4385
        %v4426 = vadd.f32 %v3944, %v4390
        %v4427 = vadd.f32 %v3945, %v4393
        %s4428 = scalar_lea.vmem [#allocation2], 24
        %v4429 = vld [vmem:[%s4428] sm:$0xf]
        %v4430 = vld [vmem:[%s4428 + $0x4] sm:$0xf]
        %v4431 = vld [vmem:[%s4428 + $0xc] sm:$0xf]
        %v4432 = vld [vmem:[%s4428 + $0x10] sm:$0xf]
        %v4433 = vld [vmem:[%s4428 + $0x18] sm:$0xf]
        %v4434 = vld [vmem:[%s4428 + $0x1c] sm:$0xf]
        %v4435 = vld [vmem:[%s4428 + $0x24] sm:$0xf]
        %v4436 = vld [vmem:[%s4428 + $0x28] sm:$0xf]
        %v4437 = vld [vmem:[%s4428 + $0x30] sm:$0xf]
        %v4438 = vld [vmem:[%s4428 + $0x34] sm:$0xf]
        %v4439 = vld [vmem:[%s4428 + $0x3c] sm:$0xf]
        %v4440 = vld [vmem:[%s4428 + $0x40] sm:$0xf]
        %v4441 = vld [vmem:[%s4428 + $0x48] sm:$0xf]
        %v4442 = vld [vmem:[%s4428 + $0x4c] sm:$0xf]
        %v4443 = vld [vmem:[%s4428 + $0x54] sm:$0xf]
        %v4444 = vld [vmem:[%s4428 + $0x58] sm:$0xf]
        %v4445 = vld [vmem:[%s4428 + $0x60] sm:$0xf]
        %v4446 = vld [vmem:[%s4428 + $0x64] sm:$0xf]
        %v4447 = vld [vmem:[%s4428 + $0x6c] sm:$0xf]
        %v4448 = vld [vmem:[%s4428 + $0x70] sm:$0xf]
        %v4449 = vld [vmem:[%s4428 + $0x78] sm:$0xf]
        %v4450 = vld [vmem:[%s4428 + $0x7c] sm:$0xf]
        %v4451 = vld [vmem:[%s4428 + $0x84] sm:$0xf]
        %v4452 = vld [vmem:[%s4428 + $0x88] sm:$0xf]
        %v4453 = vld [vmem:[%s4428 + $0x90] sm:$0xf]
        %v4454 = vld [vmem:[%s4428 + $0x94] sm:$0xf]
        %v4455 = vld [vmem:[%s4428 + $0x9c] sm:$0xf]
        %v4456 = vld [vmem:[%s4428 + $0xa0] sm:$0xf]
        %v4457 = vld [vmem:[%s4428 + $0xa8] sm:$0xf]
        %v4458 = vld [vmem:[%s4428 + $0xac] sm:$0xf]
        %v4459 = vld [vmem:[%s4428 + $0xb4] sm:$0xf]
        %v4460 = vld [vmem:[%s4428 + $0xb8] sm:$0xf]
        %s4461 = scalar_lea.vmem %s3, 96
        %v4462 = vld [vmem:[%s4461] sm:$0xf]
        %v4463 = vld [vmem:[%s4461 + $0x4] sm:$0xf]
        %v4464 = vld [vmem:[%s4461 + $0x8] sm:$0xf]
        %v4465 = vld [vmem:[%s4461 + $0xc] sm:$0xf]
        %v4498 = vunpack.c.l.b16 %v4429
        %v4499 = vunpack.c.l.b16 %v4430
        %v4500 = vunpack.c.l.b16 %v4431
        %v4501 = vunpack.c.l.b16 %v4432
        %v4502 = vunpack.c.l.b16 %v4433
        %v4503 = vunpack.c.l.b16 %v4434
        %v4504 = vunpack.c.l.b16 %v4435
        %v4505 = vunpack.c.l.b16 %v4436
        %v4506 = vunpack.c.l.b16 %v4437
        %v4507 = vunpack.c.l.b16 %v4438
        %v4508 = vunpack.c.l.b16 %v4439
        %v4509 = vunpack.c.l.b16 %v4440
        %v4510 = vunpack.c.l.b16 %v4441
        %v4511 = vunpack.c.l.b16 %v4442
        %v4512 = vunpack.c.l.b16 %v4443
        %v4513 = vunpack.c.l.b16 %v4444
        %v4514 = vunpack.c.l.b16 %v4445
        %v4515 = vunpack.c.l.b16 %v4446
        %v4516 = vunpack.c.l.b16 %v4447
        %v4517 = vunpack.c.l.b16 %v4448
        %v4518 = vunpack.c.l.b16 %v4449
        %v4519 = vunpack.c.l.b16 %v4450
        %v4520 = vunpack.c.l.b16 %v4451
        %v4521 = vunpack.c.l.b16 %v4452
        %v4522 = vunpack.c.l.b16 %v4453
        %v4523 = vunpack.c.l.b16 %v4454
        %v4524 = vunpack.c.l.b16 %v4455
        %v4525 = vunpack.c.l.b16 %v4456
        %v4526 = vunpack.c.l.b16 %v4457
        %v4527 = vunpack.c.l.b16 %v4458
        %v4528 = vunpack.c.l.b16 %v4459
        %v4529 = vunpack.c.l.b16 %v4460
        %v4530 = vpack.c.b16 %v4499, %v4498
        %v4531 = vpack.c.b16 %v4501, %v4500
        %v4532 = vpack.c.b16 %v4503, %v4502
        %v4533 = vpack.c.b16 %v4505, %v4504
        %v4534 = vpack.c.b16 %v4507, %v4506
        %v4535 = vpack.c.b16 %v4509, %v4508
        %v4536 = vpack.c.b16 %v4511, %v4510
        %v4537 = vpack.c.b16 %v4513, %v4512
        %v4538 = vpack.c.b16 %v4515, %v4514
        %v4539 = vpack.c.b16 %v4517, %v4516
        %v4540 = vpack.c.b16 %v4519, %v4518
        %v4541 = vpack.c.b16 %v4521, %v4520
        %v4542 = vpack.c.b16 %v4523, %v4522
        %v4543 = vpack.c.b16 %v4525, %v4524
        %v4544 = vpack.c.b16 %v4527, %v4526
        %v4545 = vpack.c.b16 %v4529, %v4528
        %v4550 = vunpack.c.l.b16 %v4462
        %v4551 = vunpack.c.l.b16 %v4463
        %v4552 = vunpack.c.l.b16 %v4464
        %v4553 = vunpack.c.l.b16 %v4465
        %v4554 = vpack.c.b16 %v4551, %v4550
        %v4555 = vpack.c.b16 %v4553, %v4552
        %v4559 = vsel %vm1369, %v4530, 0
        %v4562 = vsel %vm1369, %v4531, 0
        %v4565 = vsel %vm1369, %v4532, 0
        %v4568 = vsel %vm1369, %v4533, 0
        %v4571 = vsel %vm1369, %v4534, 0
        %v4574 = vsel %vm1369, %v4535, 0
        %v4577 = vsel %vm1369, %v4536, 0
        %v4580 = vsel %vm1369, %v4537, 0
        %v4583 = vsel %vm1369, %v4538, 0
        %v4586 = vsel %vm1369, %v4539, 0
        %v4589 = vsel %vm1369, %v4540, 0
        %v4592 = vsel %vm1369, %v4541, 0
        %v4595 = vsel %vm1369, %v4542, 0
        %v4598 = vsel %vm1369, %v4543, 0
        %v4601 = vsel %vm1369, %v4544, 0
        %v4604 = vsel %vm1369, %v4545, 0
        %4606 = vmatprep.subr.bf16.mxu0 0
        %4607 = vmatpush1.bf16.msra.mxu0 %v4554
        %4608 = vmatprep.subr.bf16.mxu0 0
        %4609 = vmatpush1.bf16.msra.mxu0 %v4555
        %4610 = vmatprep.subr.bf16.mxu0 0
        %4611 = vmatpush1.bf16.msra.mxu0 0
        %4612 = vmatprep.subr.bf16.mxu0 0
        %4613 = vmatpush1.bf16.msra.mxu0 0
        %4614 = vmatprep.subr.bf16.mxu0 0
        %4615 = vmatpush1.bf16.msra.mxu0 0
        %4616 = vmatprep.subr.bf16.mxu0 0
        %4617 = vmatpush1.bf16.msra.mxu0 0
        %4618 = vmatprep.subr.bf16.mxu0 0
        %4619 = vmatpush1.bf16.msra.mxu0 0
        %4620 = vmatprep.subr.bf16.mxu0 0
        %4621 = vmatpush1.bf16.msra.mxu0 0
        %4622 = vmatprep.subr.bf16.mxu0 0
        %4623 = vmatpush1.bf16.msra.mxu0 0
        %4624 = vmatprep.subr.bf16.mxu0 0
        %4625 = vmatpush1.bf16.msra.mxu0 0
        %4626 = vmatprep.subr.bf16.mxu0 0
        %4627 = vmatpush1.bf16.msra.mxu0 0
        %4628 = vmatprep.subr.bf16.mxu0 0
        %4629 = vmatpush1.bf16.msra.mxu0 0
        %4630 = vmatprep.subr.bf16.mxu0 0
        %4631 = vmatpush1.bf16.msra.mxu0 0
        %4632 = vmatprep.subr.bf16.mxu0 0
        %4633 = vmatpush1.bf16.msra.mxu0 0
        %4634 = vmatprep.subr.bf16.mxu0 0
        %4635 = vmatpush1.bf16.msra.mxu0 0
        %4636 = vmatprep.subr.bf16.mxu0 0
        %4637 = vmatpush1.bf16.msra.mxu0 0
        %4638 = vmatprep.mubr.bf16.mxu0 0
        %4639 = vmatmul.mubr.bf16.gmra.mrb[0].mxu0 %v4559
        %v4640 = vpop.f32.mrb[0].mxu0
        %v4641 = vadd.f32 0.0, %v4640
        %v4642 = vpop.f32.mrb[0].mxu0
        %v4643 = vpop.f32.mrb[0].mxu0
        %v4644 = vadd.f32 0.0, %v4643
        %v4645 = vpop.f32.mrb[0].mxu0
        %4646 = vmatprep.mubr.bf16.mxu0 0
        %4647 = vmatmul.mubr.bf16.gmra.mrb[0].mxu0 %v4562
        %v4648 = vpop.f32.mrb[0].mxu0
        %v4649 = vadd.f32 0.0, %v4648
        %v4650 = vpop.f32.mrb[0].mxu0
        %v4651 = vpop.f32.mrb[0].mxu0
        %v4652 = vadd.f32 0.0, %v4651
        %v4653 = vpop.f32.mrb[0].mxu0
        %4654 = vmatprep.mubr.bf16.mxu0 0
        %4655 = vmatmul.mubr.bf16.gmra.mrb[0].mxu0 %v4565
        %v4656 = vpop.f32.mrb[0].mxu0
        %v4657 = vadd.f32 0.0, %v4656
        %v4658 = vpop.f32.mrb[0].mxu0
        %v4659 = vpop.f32.mrb[0].mxu0
        %v4660 = vadd.f32 0.0, %v4659
        %v4661 = vpop.f32.mrb[0].mxu0
        %4662 = vmatprep.mubr.bf16.mxu0 0
        %4663 = vmatmul.mubr.bf16.gmra.mrb[0].mxu0 %v4568
        %v4664 = vpop.f32.mrb[0].mxu0
        %v4665 = vadd.f32 0.0, %v4664
        %v4666 = vpop.f32.mrb[0].mxu0
        %v4667 = vpop.f32.mrb[0].mxu0
        %v4668 = vadd.f32 0.0, %v4667
        %v4669 = vpop.f32.mrb[0].mxu0
        %4670 = vmatprep.mubr.bf16.mxu0 0
        %4671 = vmatmul.mubr.bf16.gmra.mrb[0].mxu0 %v4571
        %v4672 = vpop.f32.mrb[0].mxu0
        %v4673 = vadd.f32 0.0, %v4672
        %v4674 = vpop.f32.mrb[0].mxu0
        %v4675 = vpop.f32.mrb[0].mxu0
        %v4676 = vadd.f32 0.0, %v4675
        %v4677 = vpop.f32.mrb[0].mxu0
        %4678 = vmatprep.mubr.bf16.mxu0 0
        %4679 = vmatmul.mubr.bf16.gmra.mrb[0].mxu0 %v4574
        %v4680 = vpop.f32.mrb[0].mxu0
        %v4681 = vadd.f32 0.0, %v4680
        %v4682 = vpop.f32.mrb[0].mxu0
        %v4683 = vpop.f32.mrb[0].mxu0
        %v4684 = vadd.f32 0.0, %v4683
        %v4685 = vpop.f32.mrb[0].mxu0
        %4686 = vmatprep.mubr.bf16.mxu0 0
        %4687 = vmatmul.mubr.bf16.gmra.mrb[0].mxu0 %v4577
        %v4688 = vpop.f32.mrb[0].mxu0
        %v4689 = vadd.f32 0.0, %v4688
        %v4690 = vpop.f32.mrb[0].mxu0
        %v4691 = vpop.f32.mrb[0].mxu0
        %v4692 = vadd.f32 0.0, %v4691
        %v4693 = vpop.f32.mrb[0].mxu0
        %4694 = vmatprep.mubr.bf16.mxu0 0
        %4695 = vmatmul.mubr.bf16.gmra.mrb[0].mxu0 %v4580
        %v4696 = vpop.f32.mrb[0].mxu0
        %v4697 = vadd.f32 0.0, %v4696
        %v4698 = vpop.f32.mrb[0].mxu0
        %v4699 = vpop.f32.mrb[0].mxu0
        %v4700 = vadd.f32 0.0, %v4699
        %v4701 = vpop.f32.mrb[0].mxu0
        %4702 = vmatprep.mubr.bf16.mxu0 0
        %4703 = vmatmul.mubr.bf16.gmra.mrb[0].mxu0 %v4583
        %v4704 = vpop.f32.mrb[0].mxu0
        %v4705 = vadd.f32 0.0, %v4704
        %v4706 = vpop.f32.mrb[0].mxu0
        %v4707 = vpop.f32.mrb[0].mxu0
        %v4708 = vadd.f32 0.0, %v4707
        %v4709 = vpop.f32.mrb[0].mxu0
        %4710 = vmatprep.mubr.bf16.mxu0 0
        %4711 = vmatmul.mubr.bf16.gmra.mrb[0].mxu0 %v4586
        %v4712 = vpop.f32.mrb[0].mxu0
        %v4713 = vadd.f32 0.0, %v4712
        %v4714 = vpop.f32.mrb[0].mxu0
        %v4715 = vpop.f32.mrb[0].mxu0
        %v4716 = vadd.f32 0.0, %v4715
        %v4717 = vpop.f32.mrb[0].mxu0
        %4718 = vmatprep.mubr.bf16.mxu0 0
        %4719 = vmatmul.mubr.bf16.gmra.mrb[0].mxu0 %v4589
        %v4720 = vpop.f32.mrb[0].mxu0
        %v4721 = vadd.f32 0.0, %v4720
        %v4722 = vpop.f32.mrb[0].mxu0
        %v4723 = vpop.f32.mrb[0].mxu0
        %v4724 = vadd.f32 0.0, %v4723
        %v4725 = vpop.f32.mrb[0].mxu0
        %4726 = vmatprep.mubr.bf16.mxu0 0
        %4727 = vmatmul.mubr.bf16.gmra.mrb[0].mxu0 %v4592
        %v4728 = vpop.f32.mrb[0].mxu0
        %v4729 = vadd.f32 0.0, %v4728
        %v4730 = vpop.f32.mrb[0].mxu0
        %v4731 = vpop.f32.mrb[0].mxu0
        %v4732 = vadd.f32 0.0, %v4731
        %v4733 = vpop.f32.mrb[0].mxu0
        %4734 = vmatprep.mubr.bf16.mxu0 0
        %4735 = vmatmul.mubr.bf16.gmra.mrb[0].mxu0 %v4595
        %v4736 = vpop.f32.mrb[0].mxu0
        %v4737 = vadd.f32 0.0, %v4736
        %v4738 = vpop.f32.mrb[0].mxu0
        %v4739 = vpop.f32.mrb[0].mxu0
        %v4740 = vadd.f32 0.0, %v4739
        %v4741 = vpop.f32.mrb[0].mxu0
        %4742 = vmatprep.mubr.bf16.mxu0 0
        %4743 = vmatmul.mubr.bf16.gmra.mrb[0].mxu0 %v4598
        %v4744 = vpop.f32.mrb[0].mxu0
        %v4745 = vadd.f32 0.0, %v4744
        %v4746 = vpop.f32.mrb[0].mxu0
        %v4747 = vpop.f32.mrb[0].mxu0
        %v4748 = vadd.f32 0.0, %v4747
        %v4749 = vpop.f32.mrb[0].mxu0
        %4750 = vmatprep.mubr.bf16.mxu0 0
        %4751 = vmatmul.mubr.bf16.gmra.mrb[0].mxu0 %v4601
        %v4752 = vpop.f32.mrb[0].mxu0
        %v4753 = vadd.f32 0.0, %v4752
        %v4754 = vpop.f32.mrb[0].mxu0
        %v4755 = vpop.f32.mrb[0].mxu0
        %v4756 = vadd.f32 0.0, %v4755
        %v4757 = vpop.f32.mrb[0].mxu0
        %4758 = vmatprep.mubr.bf16.mxu0 0
        %4759 = vmatmul.mubr.bf16.gmra.mrb[0].mxu0 %v4604
        %v4760 = vpop.f32.mrb[0].mxu0
        %v4761 = vadd.f32 0.0, %v4760
        %v4762 = vpop.f32.mrb[0].mxu0
        %v4763 = vpop.f32.mrb[0].mxu0
        %v4764 = vadd.f32 0.0, %v4763
        %v4765 = vpop.f32.mrb[0].mxu0
        %4766 = vdwg.mxu0
        %v4767 = vadd.f32 %v4396, %v4641
        %v4768 = vadd.f32 %v4397, %v4644
        %v4769 = vadd.f32 %v4398, %v4649
        %v4770 = vadd.f32 %v4399, %v4652
        %v4771 = vadd.f32 %v4400, %v4657
        %v4772 = vadd.f32 %v4401, %v4660
        %v4773 = vadd.f32 %v4402, %v4665
        %v4774 = vadd.f32 %v4403, %v4668
        %v4775 = vadd.f32 %v4404, %v4673
        %v4776 = vadd.f32 %v4405, %v4676
        %v4777 = vadd.f32 %v4406, %v4681
        %v4778 = vadd.f32 %v4407, %v4684
        %v4779 = vadd.f32 %v4408, %v4689
        %v4780 = vadd.f32 %v4409, %v4692
        %v4781 = vadd.f32 %v4410, %v4697
        %v4782 = vadd.f32 %v4411, %v4700
        %v4783 = vadd.f32 %v4412, %v4705
        %v4784 = vadd.f32 %v4413, %v4708
        %v4785 = vadd.f32 %v4414, %v4713
        %v4786 = vadd.f32 %v4415, %v4716
        %v4787 = vadd.f32 %v4416, %v4721
        %v4788 = vadd.f32 %v4417, %v4724
        %v4789 = vadd.f32 %v4418, %v4729
        %v4790 = vadd.f32 %v4419, %v4732
        %v4791 = vadd.f32 %v4420, %v4737
        %v4792 = vadd.f32 %v4421, %v4740
        %v4793 = vadd.f32 %v4422, %v4745
        %v4794 = vadd.f32 %v4423, %v4748
        %v4795 = vadd.f32 %v4424, %v4753
        %v4796 = vadd.f32 %v4425, %v4756
        %v4797 = vadd.f32 %v4426, %v4761
        %v4798 = vadd.f32 %v4427, %v4764
        %v4799 = vld [vmem:[%s4428] sm:$0xf]
        %v4800 = vld [vmem:[%s4428 + $0x4] sm:$0xf]
        %v4801 = vld [vmem:[%s4428 + $0x8] sm:$0x1]
        %v4802 = vld [vmem:[%s4428 + $0xc] sm:$0xf]
        %v4803 = vld [vmem:[%s4428 + $0x10] sm:$0xf]
        %v4804 = vld [vmem:[%s4428 + $0x14] sm:$0x1]
        %v4805 = vld [vmem:[%s4428 + $0x18] sm:$0xf]
        %v4806 = vld [vmem:[%s4428 + $0x1c] sm:$0xf]
        %v4807 = vld [vmem:[%s4428 + $0x20] sm:$0x1]
        %v4808 = vld [vmem:[%s4428 + $0x24] sm:$0xf]
        %v4809 = vld [vmem:[%s4428 + $0x28] sm:$0xf]
        %v4810 = vld [vmem:[%s4428 + $0x2c] sm:$0x1]
        %v4811 = vld [vmem:[%s4428 + $0x30] sm:$0xf]
        %v4812 = vld [vmem:[%s4428 + $0x34] sm:$0xf]
        %v4813 = vld [vmem:[%s4428 + $0x38] sm:$0x1]
        %v4814 = vld [vmem:[%s4428 + $0x3c] sm:$0xf]
        %v4815 = vld [vmem:[%s4428 + $0x40] sm:$0xf]
        %v4816 = vld [vmem:[%s4428 + $0x44] sm:$0x1]
        %v4817 = vld [vmem:[%s4428 + $0x48] sm:$0xf]
        %v4818 = vld [vmem:[%s4428 + $0x4c] sm:$0xf]
        %v4819 = vld [vmem:[%s4428 + $0x50] sm:$0x1]
        %v4820 = vld [vmem:[%s4428 + $0x54] sm:$0xf]
        %v4821 = vld [vmem:[%s4428 + $0x58] sm:$0xf]
        %v4822 = vld [vmem:[%s4428 + $0x5c] sm:$0x1]
        %v4823 = vld [vmem:[%s4428 + $0x60] sm:$0xf]
        %v4824 = vld [vmem:[%s4428 + $0x64] sm:$0xf]
        %v4825 = vld [vmem:[%s4428 + $0x68] sm:$0x1]
        %v4826 = vld [vmem:[%s4428 + $0x6c] sm:$0xf]
        %v4827 = vld [vmem:[%s4428 + $0x70] sm:$0xf]
        %v4828 = vld [vmem:[%s4428 + $0x74] sm:$0x1]
        %v4829 = vld [vmem:[%s4428 + $0x78] sm:$0xf]
        %v4830 = vld [vmem:[%s4428 + $0x7c] sm:$0xf]
        %v4831 = vld [vmem:[%s4428 + $0x80] sm:$0x1]
        %v4832 = vld [vmem:[%s4428 + $0x84] sm:$0xf]
        %v4833 = vld [vmem:[%s4428 + $0x88] sm:$0xf]
        %v4834 = vld [vmem:[%s4428 + $0x8c] sm:$0x1]
        %v4835 = vld [vmem:[%s4428 + $0x90] sm:$0xf]
        %v4836 = vld [vmem:[%s4428 + $0x94] sm:$0xf]
        %v4837 = vld [vmem:[%s4428 + $0x98] sm:$0x1]
        %v4838 = vld [vmem:[%s4428 + $0x9c] sm:$0xf]
        %v4839 = vld [vmem:[%s4428 + $0xa0] sm:$0xf]
        %v4840 = vld [vmem:[%s4428 + $0xa4] sm:$0x1]
        %v4841 = vld [vmem:[%s4428 + $0xa8] sm:$0xf]
        %v4842 = vld [vmem:[%s4428 + $0xac] sm:$0xf]
        %v4843 = vld [vmem:[%s4428 + $0xb0] sm:$0x1]
        %v4844 = vld [vmem:[%s4428 + $0xb4] sm:$0xf]
        %v4845 = vld [vmem:[%s4428 + $0xb8] sm:$0xf]
        %v4846 = vld [vmem:[%s4428 + $0xbc] sm:$0x1]
        %v4848 = vshrl.u32 %v4799, 16
        %v4850 = vrot.slane %v4848, 4
        %v4851 = vshll.u32 %v4799, 16
        %v4853 = vrot.slane %v4851, 5
        %v4854 = vor.u32 %v4850, %v4853
        %v4855 = vrot.slane %v4854, 4
        %v4857 = vshll.u32 %v4800, 16
        %v4859 = vrot.slane %v4857, 5
        %v4860 = vsel %vm1661, %v4855, %v4859
        %v4861 = vshrl.u32 %v4800, 16
        %v4863 = vrot.slane %v4861, 4
        %v4864 = vor.u32 %v4863, %v4859
        %v4865 = vrot.slane %v4864, 4
        %v4867 = vshll.u32 %v4801, 16
        %v4869 = vrot.slane %v4867, 5
        %v4870 = vsel %vm1661, %v4865, %v4869
        %v4872 = vshrl.u32 %v4802, 16
        %v4874 = vrot.slane %v4872, 4
        %v4875 = vshll.u32 %v4802, 16
        %v4877 = vrot.slane %v4875, 5
        %v4878 = vor.u32 %v4874, %v4877
        %v4879 = vrot.slane %v4878, 4
        %v4881 = vshll.u32 %v4803, 16
        %v4883 = vrot.slane %v4881, 5
        %v4884 = vsel %vm1661, %v4879, %v4883
        %v4885 = vshrl.u32 %v4803, 16
        %v4887 = vrot.slane %v4885, 4
        %v4888 = vor.u32 %v4887, %v4883
        %v4889 = vrot.slane %v4888, 4
        %v4891 = vshll.u32 %v4804, 16
        %v4893 = vrot.slane %v4891, 5
        %v4894 = vsel %vm1661, %v4889, %v4893
        %v4896 = vshrl.u32 %v4805, 16
        %v4898 = vrot.slane %v4896, 4
        %v4899 = vshll.u32 %v4805, 16
        %v4901 = vrot.slane %v4899, 5
        %v4902 = vor.u32 %v4898, %v4901
        %v4903 = vrot.slane %v4902, 4
        %v4905 = vshll.u32 %v4806, 16
        %v4907 = vrot.slane %v4905, 5
        %v4908 = vsel %vm1661, %v4903, %v4907
        %v4909 = vshrl.u32 %v4806, 16
        %v4911 = vrot.slane %v4909, 4
        %v4912 = vor.u32 %v4911, %v4907
        %v4913 = vrot.slane %v4912, 4
        %v4915 = vshll.u32 %v4807, 16
        %v4917 = vrot.slane %v4915, 5
        %v4918 = vsel %vm1661, %v4913, %v4917
        %v4920 = vshrl.u32 %v4808, 16
        %v4922 = vrot.slane %v4920, 4
        %v4923 = vshll.u32 %v4808, 16
        %v4925 = vrot.slane %v4923, 5
        %v4926 = vor.u32 %v4922, %v4925
        %v4927 = vrot.slane %v4926, 4
        %v4929 = vshll.u32 %v4809, 16
        %v4931 = vrot.slane %v4929, 5
        %v4932 = vsel %vm1661, %v4927, %v4931
        %v4933 = vshrl.u32 %v4809, 16
        %v4935 = vrot.slane %v4933, 4
        %v4936 = vor.u32 %v4935, %v4931
        %v4937 = vrot.slane %v4936, 4
        %v4939 = vshll.u32 %v4810, 16
        %v4941 = vrot.slane %v4939, 5
        %v4942 = vsel %vm1661, %v4937, %v4941
        %v4944 = vshrl.u32 %v4811, 16
        %v4946 = vrot.slane %v4944, 4
        %v4947 = vshll.u32 %v4811, 16
        %v4949 = vrot.slane %v4947, 5
        %v4950 = vor.u32 %v4946, %v4949
        %v4951 = vrot.slane %v4950, 4
        %v4953 = vshll.u32 %v4812, 16
        %v4955 = vrot.slane %v4953, 5
        %v4956 = vsel %vm1661, %v4951, %v4955
        %v4957 = vshrl.u32 %v4812, 16
        %v4959 = vrot.slane %v4957, 4
        %v4960 = vor.u32 %v4959, %v4955
        %v4961 = vrot.slane %v4960, 4
        %v4963 = vshll.u32 %v4813, 16
        %v4965 = vrot.slane %v4963, 5
        %v4966 = vsel %vm1661, %v4961, %v4965
        %v4968 = vshrl.u32 %v4814, 16
        %v4970 = vrot.slane %v4968, 4
        %v4971 = vshll.u32 %v4814, 16
        %v4973 = vrot.slane %v4971, 5
        %v4974 = vor.u32 %v4970, %v4973
        %v4975 = vrot.slane %v4974, 4
        %v4977 = vshll.u32 %v4815, 16
        %v4979 = vrot.slane %v4977, 5
        %v4980 = vsel %vm1661, %v4975, %v4979
        %v4981 = vshrl.u32 %v4815, 16
        %v4983 = vrot.slane %v4981, 4
        %v4984 = vor.u32 %v4983, %v4979
        %v4985 = vrot.slane %v4984, 4
        %v4987 = vshll.u32 %v4816, 16
        %v4989 = vrot.slane %v4987, 5
        %v4990 = vsel %vm1661, %v4985, %v4989
        %v4992 = vshrl.u32 %v4817, 16
        %v4994 = vrot.slane %v4992, 4
        %v4995 = vshll.u32 %v4817, 16
        %v4997 = vrot.slane %v4995, 5
        %v4998 = vor.u32 %v4994, %v4997
        %v4999 = vrot.slane %v4998, 4
        %v5001 = vshll.u32 %v4818, 16
        %v5003 = vrot.slane %v5001, 5
        %v5004 = vsel %vm1661, %v4999, %v5003
        %v5005 = vshrl.u32 %v4818, 16
        %v5007 = vrot.slane %v5005, 4
        %v5008 = vor.u32 %v5007, %v5003
        %v5009 = vrot.slane %v5008, 4
        %v5011 = vshll.u32 %v4819, 16
        %v5013 = vrot.slane %v5011, 5
        %v5014 = vsel %vm1661, %v5009, %v5013
        %v5016 = vshrl.u32 %v4820, 16
        %v5018 = vrot.slane %v5016, 4
        %v5019 = vshll.u32 %v4820, 16
        %v5021 = vrot.slane %v5019, 5
        %v5022 = vor.u32 %v5018, %v5021
        %v5023 = vrot.slane %v5022, 4
        %v5025 = vshll.u32 %v4821, 16
        %v5027 = vrot.slane %v5025, 5
        %v5028 = vsel %vm1661, %v5023, %v5027
        %v5029 = vshrl.u32 %v4821, 16
        %v5031 = vrot.slane %v5029, 4
        %v5032 = vor.u32 %v5031, %v5027
        %v5033 = vrot.slane %v5032, 4
        %v5035 = vshll.u32 %v4822, 16
        %v5037 = vrot.slane %v5035, 5
        %v5038 = vsel %vm1661, %v5033, %v5037
        %v5040 = vshrl.u32 %v4823, 16
        %v5042 = vrot.slane %v5040, 4
        %v5043 = vshll.u32 %v4823, 16
        %v5045 = vrot.slane %v5043, 5
        %v5046 = vor.u32 %v5042, %v5045
        %v5047 = vrot.slane %v5046, 4
        %v5049 = vshll.u32 %v4824, 16
        %v5051 = vrot.slane %v5049, 5
        %v5052 = vsel %vm1661, %v5047, %v5051
        %v5053 = vshrl.u32 %v4824, 16
        %v5055 = vrot.slane %v5053, 4
        %v5056 = vor.u32 %v5055, %v5051
        %v5057 = vrot.slane %v5056, 4
        %v5059 = vshll.u32 %v4825, 16
        %v5061 = vrot.slane %v5059, 5
        %v5062 = vsel %vm1661, %v5057, %v5061
        %v5064 = vshrl.u32 %v4826, 16
        %v5066 = vrot.slane %v5064, 4
        %v5067 = vshll.u32 %v4826, 16
        %v5069 = vrot.slane %v5067, 5
        %v5070 = vor.u32 %v5066, %v5069
        %v5071 = vrot.slane %v5070, 4
        %v5073 = vshll.u32 %v4827, 16
        %v5075 = vrot.slane %v5073, 5
        %v5076 = vsel %vm1661, %v5071, %v5075
        %v5077 = vshrl.u32 %v4827, 16
        %v5079 = vrot.slane %v5077, 4
        %v5080 = vor.u32 %v5079, %v5075
        %v5081 = vrot.slane %v5080, 4
        %v5083 = vshll.u32 %v4828, 16
        %v5085 = vrot.slane %v5083, 5
        %v5086 = vsel %vm1661, %v5081, %v5085
        %v5088 = vshrl.u32 %v4829, 16
        %v5090 = vrot.slane %v5088, 4
        %v5091 = vshll.u32 %v4829, 16
        %v5093 = vrot.slane %v5091, 5
        %v5094 = vor.u32 %v5090, %v5093
        %v5095 = vrot.slane %v5094, 4
        %v5097 = vshll.u32 %v4830, 16
        %v5099 = vrot.slane %v5097, 5
        %v5100 = vsel %vm1661, %v5095, %v5099
        %v5101 = vshrl.u32 %v4830, 16
        %v5103 = vrot.slane %v5101, 4
        %v5104 = vor.u32 %v5103, %v5099
        %v5105 = vrot.slane %v5104, 4
        %v5107 = vshll.u32 %v4831, 16
        %v5109 = vrot.slane %v5107, 5
        %v5110 = vsel %vm1661, %v5105, %v5109
        %v5112 = vshrl.u32 %v4832, 16
        %v5114 = vrot.slane %v5112, 4
        %v5115 = vshll.u32 %v4832, 16
        %v5117 = vrot.slane %v5115, 5
        %v5118 = vor.u32 %v5114, %v5117
        %v5119 = vrot.slane %v5118, 4
        %v5121 = vshll.u32 %v4833, 16
        %v5123 = vrot.slane %v5121, 5
        %v5124 = vsel %vm1661, %v5119, %v5123
        %v5125 = vshrl.u32 %v4833, 16
        %v5127 = vrot.slane %v5125, 4
        %v5128 = vor.u32 %v5127, %v5123
        %v5129 = vrot.slane %v5128, 4
        %v5131 = vshll.u32 %v4834, 16
        %v5133 = vrot.slane %v5131, 5
        %v5134 = vsel %vm1661, %v5129, %v5133
        %v5136 = vshrl.u32 %v4835, 16
        %v5138 = vrot.slane %v5136, 4
        %v5139 = vshll.u32 %v4835, 16
        %v5141 = vrot.slane %v5139, 5
        %v5142 = vor.u32 %v5138, %v5141
        %v5143 = vrot.slane %v5142, 4
        %v5145 = vshll.u32 %v4836, 16
        %v5147 = vrot.slane %v5145, 5
        %v5148 = vsel %vm1661, %v5143, %v5147
        %v5149 = vshrl.u32 %v4836, 16
        %v5151 = vrot.slane %v5149, 4
        %v5152 = vor.u32 %v5151, %v5147
        %v5153 = vrot.slane %v5152, 4
        %v5155 = vshll.u32 %v4837, 16
        %v5157 = vrot.slane %v5155, 5
        %v5158 = vsel %vm1661, %v5153, %v5157
        %v5160 = vshrl.u32 %v4838, 16
        %v5162 = vrot.slane %v5160, 4
        %v5163 = vshll.u32 %v4838, 16
        %v5165 = vrot.slane %v5163, 5
        %v5166 = vor.u32 %v5162, %v5165
        %v5167 = vrot.slane %v5166, 4
        %v5169 = vshll.u32 %v4839, 16
        %v5171 = vrot.slane %v5169, 5
        %v5172 = vsel %vm1661, %v5167, %v5171
        %v5173 = vshrl.u32 %v4839, 16
        %v5175 = vrot.slane %v5173, 4
        %v5176 = vor.u32 %v5175, %v5171
        %v5177 = vrot.slane %v5176, 4
        %v5179 = vshll.u32 %v4840, 16
        %v5181 = vrot.slane %v5179, 5
        %v5182 = vsel %vm1661, %v5177, %v5181
        %v5184 = vshrl.u32 %v4841, 16
        %v5186 = vrot.slane %v5184, 4
        %v5187 = vshll.u32 %v4841, 16
        %v5189 = vrot.slane %v5187, 5
        %v5190 = vor.u32 %v5186, %v5189
        %v5191 = vrot.slane %v5190, 4
        %v5193 = vshll.u32 %v4842, 16
        %v5195 = vrot.slane %v5193, 5
        %v5196 = vsel %vm1661, %v5191, %v5195
        %v5197 = vshrl.u32 %v4842, 16
        %v5199 = vrot.slane %v5197, 4
        %v5200 = vor.u32 %v5199, %v5195
        %v5201 = vrot.slane %v5200, 4
        %v5203 = vshll.u32 %v4843, 16
        %v5205 = vrot.slane %v5203, 5
        %v5206 = vsel %vm1661, %v5201, %v5205
        %v5208 = vshrl.u32 %v4844, 16
        %v5210 = vrot.slane %v5208, 4
        %v5211 = vshll.u32 %v4844, 16
        %v5213 = vrot.slane %v5211, 5
        %v5214 = vor.u32 %v5210, %v5213
        %v5215 = vrot.slane %v5214, 4
        %v5217 = vshll.u32 %v4845, 16
        %v5219 = vrot.slane %v5217, 5
        %v5220 = vsel %vm1661, %v5215, %v5219
        %v5221 = vshrl.u32 %v4845, 16
        %v5223 = vrot.slane %v5221, 4
        %v5224 = vor.u32 %v5223, %v5219
        %v5225 = vrot.slane %v5224, 4
        %v5227 = vshll.u32 %v4846, 16
        %v5229 = vrot.slane %v5227, 5
        %v5230 = vsel %vm1661, %v5225, %v5229
        %s5231 = scalar_lea.vmem %s3, 112
        %v5232 = vld [vmem:[%s5231] sm:$0xf]
        %v5233 = vld [vmem:[%s5231 + $0x4] sm:$0xf]
        %v5234 = vld [vmem:[%s5231 + $0x8] sm:$0xf]
        %v5235 = vld [vmem:[%s5231 + $0xc] sm:$0xf]
        %v5236 = vunpack.c.l.b16 %v4860
        %v5237 = vunpack.c.l.b16 %v4870
        %v5238 = vunpack.c.l.b16 %v4884
        %v5239 = vunpack.c.l.b16 %v4894
        %v5240 = vunpack.c.l.b16 %v4908
        %v5241 = vunpack.c.l.b16 %v4918
        %v5242 = vunpack.c.l.b16 %v4932
        %v5243 = vunpack.c.l.b16 %v4942
        %v5244 = vunpack.c.l.b16 %v4956
        %v5245 = vunpack.c.l.b16 %v4966
        %v5246 = vunpack.c.l.b16 %v4980
        %v5247 = vunpack.c.l.b16 %v4990
        %v5248 = vunpack.c.l.b16 %v5004
        %v5249 = vunpack.c.l.b16 %v5014
        %v5250 = vunpack.c.l.b16 %v5028
        %v5251 = vunpack.c.l.b16 %v5038
        %v5252 = vunpack.c.l.b16 %v5052
        %v5253 = vunpack.c.l.b16 %v5062
        %v5254 = vunpack.c.l.b16 %v5076
        %v5255 = vunpack.c.l.b16 %v5086
        %v5256 = vunpack.c.l.b16 %v5100
        %v5257 = vunpack.c.l.b16 %v5110
        %v5258 = vunpack.c.l.b16 %v5124
        %v5259 = vunpack.c.l.b16 %v5134
        %v5260 = vunpack.c.l.b16 %v5148
        %v5261 = vunpack.c.l.b16 %v5158
        %v5262 = vunpack.c.l.b16 %v5172
        %v5263 = vunpack.c.l.b16 %v5182
        %v5264 = vunpack.c.l.b16 %v5196
        %v5265 = vunpack.c.l.b16 %v5206
        %v5266 = vunpack.c.l.b16 %v5220
        %v5267 = vunpack.c.l.b16 %v5230
        %v5268 = vpack.c.b16 %v5237, %v5236
        %v5269 = vpack.c.b16 %v5239, %v5238
        %v5270 = vpack.c.b16 %v5241, %v5240
        %v5271 = vpack.c.b16 %v5243, %v5242
        %v5272 = vpack.c.b16 %v5245, %v5244
        %v5273 = vpack.c.b16 %v5247, %v5246
        %v5274 = vpack.c.b16 %v5249, %v5248
        %v5275 = vpack.c.b16 %v5251, %v5250
        %v5276 = vpack.c.b16 %v5253, %v5252
        %v5277 = vpack.c.b16 %v5255, %v5254
        %v5278 = vpack.c.b16 %v5257, %v5256
        %v5279 = vpack.c.b16 %v5259, %v5258
        %v5280 = vpack.c.b16 %v5261, %v5260
        %v5281 = vpack.c.b16 %v5263, %v5262
        %v5282 = vpack.c.b16 %v5265, %v5264
        %v5283 = vpack.c.b16 %v5267, %v5266
        %v5288 = vunpack.c.l.b16 %v5232
        %v5289 = vunpack.c.l.b16 %v5233
        %v5290 = vunpack.c.l.b16 %v5234
        %v5291 = vunpack.c.l.b16 %v5235
        %v5292 = vpack.c.b16 %v5289, %v5288
        %v5293 = vpack.c.b16 %v5291, %v5290
        %v5297 = vsel %vm1369, %v5268, 0
        %v5300 = vsel %vm1369, %v5269, 0
        %v5303 = vsel %vm1369, %v5270, 0
        %v5306 = vsel %vm1369, %v5271, 0
        %v5309 = vsel %vm1369, %v5272, 0
        %v5312 = vsel %vm1369, %v5273, 0
        %v5315 = vsel %vm1369, %v5274, 0
        %v5318 = vsel %vm1369, %v5275, 0
        %v5321 = vsel %vm1369, %v5276, 0
        %v5324 = vsel %vm1369, %v5277, 0
        %v5327 = vsel %vm1369, %v5278, 0
        %v5330 = vsel %vm1369, %v5279, 0
        %v5333 = vsel %vm1369, %v5280, 0
        %v5336 = vsel %vm1369, %v5281, 0
        %v5339 = vsel %vm1369, %v5282, 0
        %v5342 = vsel %vm1369, %v5283, 0
        %5344 = vmatprep.subr.bf16.mxu0 0
        %5345 = vmatpush1.bf16.msra.mxu0 %v5292
        %5346 = vmatprep.subr.bf16.mxu0 0
        %5347 = vmatpush1.bf16.msra.mxu0 %v5293
        %5348 = vmatprep.subr.bf16.mxu0 0
        %5349 = vmatpush1.bf16.msra.mxu0 0
        %5350 = vmatprep.subr.bf16.mxu0 0
        %5351 = vmatpush1.bf16.msra.mxu0 0
        %5352 = vmatprep.subr.bf16.mxu0 0
        %5353 = vmatpush1.bf16.msra.mxu0 0
        %5354 = vmatprep.subr.bf16.mxu0 0
        %5355 = vmatpush1.bf16.msra.mxu0 0
        %5356 = vmatprep.subr.bf16.mxu0 0
        %5357 = vmatpush1.bf16.msra.mxu0 0
        %5358 = vmatprep.subr.bf16.mxu0 0
        %5359 = vmatpush1.bf16.msra.mxu0 0
        %5360 = vmatprep.subr.bf16.mxu0 0
        %5361 = vmatpush1.bf16.msra.mxu0 0
        %5362 = vmatprep.subr.bf16.mxu0 0
        %5363 = vmatpush1.bf16.msra.mxu0 0
        %5364 = vmatprep.subr.bf16.mxu0 0
        %5365 = vmatpush1.bf16.msra.mxu0 0
        %5366 = vmatprep.subr.bf16.mxu0 0
        %5367 = vmatpush1.bf16.msra.mxu0 0
        %5368 = vmatprep.subr.bf16.mxu0 0
        %5369 = vmatpush1.bf16.msra.mxu0 0
        %5370 = vmatprep.subr.bf16.mxu0 0
        %5371 = vmatpush1.bf16.msra.mxu0 0
        %5372 = vmatprep.subr.bf16.mxu0 0
        %5373 = vmatpush1.bf16.msra.mxu0 0
        %5374 = vmatprep.subr.bf16.mxu0 0
        %5375 = vmatpush1.bf16.msra.mxu0 0
        %5376 = vmatprep.mubr.bf16.mxu0 0
        %5377 = vmatmul.mubr.bf16.gmra.mrb[0].mxu0 %v5297
        %v5378 = vpop.f32.mrb[0].mxu0
        %v5379 = vadd.f32 0.0, %v5378
        %v5380 = vpop.f32.mrb[0].mxu0
        %v5381 = vpop.f32.mrb[0].mxu0
        %v5382 = vadd.f32 0.0, %v5381
        %v5383 = vpop.f32.mrb[0].mxu0
        %5384 = vmatprep.mubr.bf16.mxu0 0
        %5385 = vmatmul.mubr.bf16.gmra.mrb[0].mxu0 %v5300
        %v5386 = vpop.f32.mrb[0].mxu0
        %v5387 = vadd.f32 0.0, %v5386
        %v5388 = vpop.f32.mrb[0].mxu0
        %v5389 = vpop.f32.mrb[0].mxu0
        %v5390 = vadd.f32 0.0, %v5389
        %v5391 = vpop.f32.mrb[0].mxu0
        %5392 = vmatprep.mubr.bf16.mxu0 0
        %5393 = vmatmul.mubr.bf16.gmra.mrb[0].mxu0 %v5303
        %v5394 = vpop.f32.mrb[0].mxu0
        %v5395 = vadd.f32 0.0, %v5394
        %v5396 = vpop.f32.mrb[0].mxu0
        %v5397 = vpop.f32.mrb[0].mxu0
        %v5398 = vadd.f32 0.0, %v5397
        %v5399 = vpop.f32.mrb[0].mxu0
        %5400 = vmatprep.mubr.bf16.mxu0 0
        %5401 = vmatmul.mubr.bf16.gmra.mrb[0].mxu0 %v5306
        %v5402 = vpop.f32.mrb[0].mxu0
        %v5403 = vadd.f32 0.0, %v5402
        %v5404 = vpop.f32.mrb[0].mxu0
        %v5405 = vpop.f32.mrb[0].mxu0
        %v5406 = vadd.f32 0.0, %v5405
        %v5407 = vpop.f32.mrb[0].mxu0
        %5408 = vmatprep.mubr.bf16.mxu0 0
        %5409 = vmatmul.mubr.bf16.gmra.mrb[0].mxu0 %v5309
        %v5410 = vpop.f32.mrb[0].mxu0
        %v5411 = vadd.f32 0.0, %v5410
        %v5412 = vpop.f32.mrb[0].mxu0
        %v5413 = vpop.f32.mrb[0].mxu0
        %v5414 = vadd.f32 0.0, %v5413
        %v5415 = vpop.f32.mrb[0].mxu0
        %5416 = vmatprep.mubr.bf16.mxu0 0
        %5417 = vmatmul.mubr.bf16.gmra.mrb[0].mxu0 %v5312
        %v5418 = vpop.f32.mrb[0].mxu0
        %v5419 = vadd.f32 0.0, %v5418
        %v5420 = vpop.f32.mrb[0].mxu0
        %v5421 = vpop.f32.mrb[0].mxu0
        %v5422 = vadd.f32 0.0, %v5421
        %v5423 = vpop.f32.mrb[0].mxu0
        %5424 = vmatprep.mubr.bf16.mxu0 0
        %5425 = vmatmul.mubr.bf16.gmra.mrb[0].mxu0 %v5315
        %v5426 = vpop.f32.mrb[0].mxu0
        %v5427 = vadd.f32 0.0, %v5426
        %v5428 = vpop.f32.mrb[0].mxu0
        %v5429 = vpop.f32.mrb[0].mxu0
        %v5430 = vadd.f32 0.0, %v5429
        %v5431 = vpop.f32.mrb[0].mxu0
        %5432 = vmatprep.mubr.bf16.mxu0 0
        %5433 = vmatmul.mubr.bf16.gmra.mrb[0].mxu0 %v5318
        %v5434 = vpop.f32.mrb[0].mxu0
        %v5435 = vadd.f32 0.0, %v5434
        %v5436 = vpop.f32.mrb[0].mxu0
        %v5437 = vpop.f32.mrb[0].mxu0
        %v5438 = vadd.f32 0.0, %v5437
        %v5439 = vpop.f32.mrb[0].mxu0
        %5440 = vmatprep.mubr.bf16.mxu0 0
        %5441 = vmatmul.mubr.bf16.gmra.mrb[0].mxu0 %v5321
        %v5442 = vpop.f32.mrb[0].mxu0
        %v5443 = vadd.f32 0.0, %v5442
        %v5444 = vpop.f32.mrb[0].mxu0
        %v5445 = vpop.f32.mrb[0].mxu0
        %v5446 = vadd.f32 0.0, %v5445
        %v5447 = vpop.f32.mrb[0].mxu0
        %5448 = vmatprep.mubr.bf16.mxu0 0
        %5449 = vmatmul.mubr.bf16.gmra.mrb[0].mxu0 %v5324
        %v5450 = vpop.f32.mrb[0].mxu0
        %v5451 = vadd.f32 0.0, %v5450
        %v5452 = vpop.f32.mrb[0].mxu0
        %v5453 = vpop.f32.mrb[0].mxu0
        %v5454 = vadd.f32 0.0, %v5453
        %v5455 = vpop.f32.mrb[0].mxu0
        %5456 = vmatprep.mubr.bf16.mxu0 0
        %5457 = vmatmul.mubr.bf16.gmra.mrb[0].mxu0 %v5327
        %v5458 = vpop.f32.mrb[0].mxu0
        %v5459 = vadd.f32 0.0, %v5458
        %v5460 = vpop.f32.mrb[0].mxu0
        %v5461 = vpop.f32.mrb[0].mxu0
        %v5462 = vadd.f32 0.0, %v5461
        %v5463 = vpop.f32.mrb[0].mxu0
        %5464 = vmatprep.mubr.bf16.mxu0 0
        %5465 = vmatmul.mubr.bf16.gmra.mrb[0].mxu0 %v5330
        %v5466 = vpop.f32.mrb[0].mxu0
        %v5467 = vadd.f32 0.0, %v5466
        %v5468 = vpop.f32.mrb[0].mxu0
        %v5469 = vpop.f32.mrb[0].mxu0
        %v5470 = vadd.f32 0.0, %v5469
        %v5471 = vpop.f32.mrb[0].mxu0
        %5472 = vmatprep.mubr.bf16.mxu0 0
        %5473 = vmatmul.mubr.bf16.gmra.mrb[0].mxu0 %v5333
        %v5474 = vpop.f32.mrb[0].mxu0
        %v5475 = vadd.f32 0.0, %v5474
        %v5476 = vpop.f32.mrb[0].mxu0
        %v5477 = vpop.f32.mrb[0].mxu0
        %v5478 = vadd.f32 0.0, %v5477
        %v5479 = vpop.f32.mrb[0].mxu0
        %5480 = vmatprep.mubr.bf16.mxu0 0
        %5481 = vmatmul.mubr.bf16.gmra.mrb[0].mxu0 %v5336
        %v5482 = vpop.f32.mrb[0].mxu0
        %v5483 = vadd.f32 0.0, %v5482
        %v5484 = vpop.f32.mrb[0].mxu0
        %v5485 = vpop.f32.mrb[0].mxu0
        %v5486 = vadd.f32 0.0, %v5485
        %v5487 = vpop.f32.mrb[0].mxu0
        %5488 = vmatprep.mubr.bf16.mxu0 0
        %5489 = vmatmul.mubr.bf16.gmra.mrb[0].mxu0 %v5339
        %v5490 = vpop.f32.mrb[0].mxu0
        %v5491 = vadd.f32 0.0, %v5490
        %v5492 = vpop.f32.mrb[0].mxu0
        %v5493 = vpop.f32.mrb[0].mxu0
        %v5494 = vadd.f32 0.0, %v5493
        %v5495 = vpop.f32.mrb[0].mxu0
        %5496 = vmatprep.mubr.bf16.mxu0 0
        %5497 = vmatmul.mubr.bf16.gmra.mrb[0].mxu0 %v5342
        %v5498 = vpop.f32.mrb[0].mxu0
        %v5499 = vadd.f32 0.0, %v5498
        %v5500 = vpop.f32.mrb[0].mxu0
        %v5501 = vpop.f32.mrb[0].mxu0
        %v5502 = vadd.f32 0.0, %v5501
        %v5503 = vpop.f32.mrb[0].mxu0
        %5504 = vdwg.mxu0
        %v5505 = vadd.f32 %v4767, %v5379
        %v5506 = vadd.f32 %v4768, %v5382
        %v5507 = vadd.f32 %v4769, %v5387
        %v5508 = vadd.f32 %v4770, %v5390
        %v5509 = vadd.f32 %v4771, %v5395
        %v5510 = vadd.f32 %v4772, %v5398
        %v5511 = vadd.f32 %v4773, %v5403
        %v5512 = vadd.f32 %v4774, %v5406
        %v5513 = vadd.f32 %v4775, %v5411
        %v5514 = vadd.f32 %v4776, %v5414
        %v5515 = vadd.f32 %v4777, %v5419
        %v5516 = vadd.f32 %v4778, %v5422
        %v5517 = vadd.f32 %v4779, %v5427
        %v5518 = vadd.f32 %v4780, %v5430
        %v5519 = vadd.f32 %v4781, %v5435
        %v5520 = vadd.f32 %v4782, %v5438
        %v5521 = vadd.f32 %v4783, %v5443
        %v5522 = vadd.f32 %v4784, %v5446
        %v5523 = vadd.f32 %v4785, %v5451
        %v5524 = vadd.f32 %v4786, %v5454
        %v5525 = vadd.f32 %v4787, %v5459
        %v5526 = vadd.f32 %v4788, %v5462
        %v5527 = vadd.f32 %v4789, %v5467
        %v5528 = vadd.f32 %v4790, %v5470
        %v5529 = vadd.f32 %v4791, %v5475
        %v5530 = vadd.f32 %v4792, %v5478
        %v5531 = vadd.f32 %v4793, %v5483
        %v5532 = vadd.f32 %v4794, %v5486
        %v5533 = vadd.f32 %v4795, %v5491
        %v5534 = vadd.f32 %v4796, %v5494
        %v5535 = vadd.f32 %v4797, %v5499
        %v5536 = vadd.f32 %v4798, %v5502
        %v5537 = vld [vmem:[%s4428] sm:$0xe]
        %v5538 = vld [vmem:[%s4428 + $0xc] sm:$0xe]
        %v5539 = vld [vmem:[%s4428 + $0x18] sm:$0xe]
        %v5540 = vld [vmem:[%s4428 + $0x24] sm:$0xe]
        %v5541 = vld [vmem:[%s4428 + $0x30] sm:$0xe]
        %v5542 = vld [vmem:[%s4428 + $0x3c] sm:$0xe]
        %v5543 = vld [vmem:[%s4428 + $0x48] sm:$0xe]
        %v5544 = vld [vmem:[%s4428 + $0x54] sm:$0xe]
        %v5545 = vld [vmem:[%s4428 + $0x60] sm:$0xe]
        %v5546 = vld [vmem:[%s4428 + $0x6c] sm:$0xe]
        %v5547 = vld [vmem:[%s4428 + $0x78] sm:$0xe]
        %v5548 = vld [vmem:[%s4428 + $0x84] sm:$0xe]
        %v5549 = vld [vmem:[%s4428 + $0x90] sm:$0xe]
        %v5550 = vld [vmem:[%s4428 + $0x9c] sm:$0xe]
        %v5551 = vld [vmem:[%s4428 + $0xa8] sm:$0xe]
        %v5552 = vld [vmem:[%s4428 + $0xb4] sm:$0xe]
        %v5601 = vrot.slane %v5537, 5
        %v5602 = vrot.slane %v5601, 4
        %v5603 = vrot.slane %v4800, 5
        %v5604 = vsel %vm2418, %v5602, %v5603
        %v5605 = vrot.slane %v5603, 4
        %v5606 = vrot.slane %v4801, 5
        %v5607 = vsel %vm2418, %v5605, %v5606
        %v5608 = vrot.slane %v5538, 5
        %v5609 = vrot.slane %v5608, 4
        %v5610 = vrot.slane %v4803, 5
        %v5611 = vsel %vm2418, %v5609, %v5610
        %v5612 = vrot.slane %v5610, 4
        %v5613 = vrot.slane %v4804, 5
        %v5614 = vsel %vm2418, %v5612, %v5613
        %v5615 = vrot.slane %v5539, 5
        %v5616 = vrot.slane %v5615, 4
        %v5617 = vrot.slane %v4806, 5
        %v5618 = vsel %vm2418, %v5616, %v5617
        %v5619 = vrot.slane %v5617, 4
        %v5620 = vrot.slane %v4807, 5
        %v5621 = vsel %vm2418, %v5619, %v5620
        %v5622 = vrot.slane %v5540, 5
        %v5623 = vrot.slane %v5622, 4
        %v5624 = vrot.slane %v4809, 5
        %v5625 = vsel %vm2418, %v5623, %v5624
        %v5626 = vrot.slane %v5624, 4
        %v5627 = vrot.slane %v4810, 5
        %v5628 = vsel %vm2418, %v5626, %v5627
        %v5629 = vrot.slane %v5541, 5
        %v5630 = vrot.slane %v5629, 4
        %v5631 = vrot.slane %v4812, 5
        %v5632 = vsel %vm2418, %v5630, %v5631
        %v5633 = vrot.slane %v5631, 4
        %v5634 = vrot.slane %v4813, 5
        %v5635 = vsel %vm2418, %v5633, %v5634
        %v5636 = vrot.slane %v5542, 5
        %v5637 = vrot.slane %v5636, 4
        %v5638 = vrot.slane %v4815, 5
        %v5639 = vsel %vm2418, %v5637, %v5638
        %v5640 = vrot.slane %v5638, 4
        %v5641 = vrot.slane %v4816, 5
        %v5642 = vsel %vm2418, %v5640, %v5641
        %v5643 = vrot.slane %v5543, 5
        %v5644 = vrot.slane %v5643, 4
        %v5645 = vrot.slane %v4818, 5
        %v5646 = vsel %vm2418, %v5644, %v5645
        %v5647 = vrot.slane %v5645, 4
        %v5648 = vrot.slane %v4819, 5
        %v5649 = vsel %vm2418, %v5647, %v5648
        %v5650 = vrot.slane %v5544, 5
        %v5651 = vrot.slane %v5650, 4
        %v5652 = vrot.slane %v4821, 5
        %v5653 = vsel %vm2418, %v5651, %v5652
        %v5654 = vrot.slane %v5652, 4
        %v5655 = vrot.slane %v4822, 5
        %v5656 = vsel %vm2418, %v5654, %v5655
        %v5657 = vrot.slane %v5545, 5
        %v5658 = vrot.slane %v5657, 4
        %v5659 = vrot.slane %v4824, 5
        %v5660 = vsel %vm2418, %v5658, %v5659
        %v5661 = vrot.slane %v5659, 4
        %v5662 = vrot.slane %v4825, 5
        %v5663 = vsel %vm2418, %v5661, %v5662
        %v5664 = vrot.slane %v5546, 5
        %v5665 = vrot.slane %v5664, 4
        %v5666 = vrot.slane %v4827, 5
        %v5667 = vsel %vm2418, %v5665, %v5666
        %v5668 = vrot.slane %v5666, 4
        %v5669 = vrot.slane %v4828, 5
        %v5670 = vsel %vm2418, %v5668, %v5669
        %v5671 = vrot.slane %v5547, 5
        %v5672 = vrot.slane %v5671, 4
        %v5673 = vrot.slane %v4830, 5
        %v5674 = vsel %vm2418, %v5672, %v5673
        %v5675 = vrot.slane %v5673, 4
        %v5676 = vrot.slane %v4831, 5
        %v5677 = vsel %vm2418, %v5675, %v5676
        %v5678 = vrot.slane %v5548, 5
        %v5679 = vrot.slane %v5678, 4
        %v5680 = vrot.slane %v4833, 5
        %v5681 = vsel %vm2418, %v5679, %v5680
        %v5682 = vrot.slane %v5680, 4
        %v5683 = vrot.slane %v4834, 5
        %v5684 = vsel %vm2418, %v5682, %v5683
        %v5685 = vrot.slane %v5549, 5
        %v5686 = vrot.slane %v5685, 4
        %v5687 = vrot.slane %v4836, 5
        %v5688 = vsel %vm2418, %v5686, %v5687
        %v5689 = vrot.slane %v5687, 4
        %v5690 = vrot.slane %v4837, 5
        %v5691 = vsel %vm2418, %v5689, %v5690
        %v5692 = vrot.slane %v5550, 5
        %v5693 = vrot.slane %v5692, 4
        %v5694 = vrot.slane %v4839, 5
        %v5695 = vsel %vm2418, %v5693, %v5694
        %v5696 = vrot.slane %v5694, 4
        %v5697 = vrot.slane %v4840, 5
        %v5698 = vsel %vm2418, %v5696, %v5697
        %v5699 = vrot.slane %v5551, 5
        %v5700 = vrot.slane %v5699, 4
        %v5701 = vrot.slane %v4842, 5
        %v5702 = vsel %vm2418, %v5700, %v5701
        %v5703 = vrot.slane %v5701, 4
        %v5704 = vrot.slane %v4843, 5
        %v5705 = vsel %vm2418, %v5703, %v5704
        %v5706 = vrot.slane %v5552, 5
        %v5707 = vrot.slane %v5706, 4
        %v5708 = vrot.slane %v4845, 5
        %v5709 = vsel %vm2418, %v5707, %v5708
        %v5710 = vrot.slane %v5708, 4
        %v5711 = vrot.slane %v4846, 5
        %v5712 = vsel %vm2418, %v5710, %v5711
        %s5713 = scalar_lea.vmem %s3, 128
        %v5714 = vld [vmem:[%s5713] sm:$0xf]
        %v5715 = vld [vmem:[%s5713 + $0x4] sm:$0xf]
        %v5716 = vld [vmem:[%s5713 + $0x8] sm:$0xf]
        %v5717 = vld [vmem:[%s5713 + $0xc] sm:$0xf]
        %v5718 = vunpack.c.l.b16 %v5604
        %v5719 = vunpack.c.l.b16 %v5607
        %v5720 = vunpack.c.l.b16 %v5611
        %v5721 = vunpack.c.l.b16 %v5614
        %v5722 = vunpack.c.l.b16 %v5618
        %v5723 = vunpack.c.l.b16 %v5621
        %v5724 = vunpack.c.l.b16 %v5625
        %v5725 = vunpack.c.l.b16 %v5628
        %v5726 = vunpack.c.l.b16 %v5632
        %v5727 = vunpack.c.l.b16 %v5635
        %v5728 = vunpack.c.l.b16 %v5639
        %v5729 = vunpack.c.l.b16 %v5642
        %v5730 = vunpack.c.l.b16 %v5646
        %v5731 = vunpack.c.l.b16 %v5649
        %v5732 = vunpack.c.l.b16 %v5653
        %v5733 = vunpack.c.l.b16 %v5656
        %v5734 = vunpack.c.l.b16 %v5660
        %v5735 = vunpack.c.l.b16 %v5663
        %v5736 = vunpack.c.l.b16 %v5667
        %v5737 = vunpack.c.l.b16 %v5670
        %v5738 = vunpack.c.l.b16 %v5674
        %v5739 = vunpack.c.l.b16 %v5677
        %v5740 = vunpack.c.l.b16 %v5681
        %v5741 = vunpack.c.l.b16 %v5684
        %v5742 = vunpack.c.l.b16 %v5688
        %v5743 = vunpack.c.l.b16 %v5691
        %v5744 = vunpack.c.l.b16 %v5695
        %v5745 = vunpack.c.l.b16 %v5698
        %v5746 = vunpack.c.l.b16 %v5702
        %v5747 = vunpack.c.l.b16 %v5705
        %v5748 = vunpack.c.l.b16 %v5709
        %v5749 = vunpack.c.l.b16 %v5712
        %v5750 = vpack.c.b16 %v5719, %v5718
        %v5751 = vpack.c.b16 %v5721, %v5720
        %v5752 = vpack.c.b16 %v5723, %v5722
        %v5753 = vpack.c.b16 %v5725, %v5724
        %v5754 = vpack.c.b16 %v5727, %v5726
        %v5755 = vpack.c.b16 %v5729, %v5728
        %v5756 = vpack.c.b16 %v5731, %v5730
        %v5757 = vpack.c.b16 %v5733, %v5732
        %v5758 = vpack.c.b16 %v5735, %v5734
        %v5759 = vpack.c.b16 %v5737, %v5736
        %v5760 = vpack.c.b16 %v5739, %v5738
        %v5761 = vpack.c.b16 %v5741, %v5740
        %v5762 = vpack.c.b16 %v5743, %v5742
        %v5763 = vpack.c.b16 %v5745, %v5744
        %v5764 = vpack.c.b16 %v5747, %v5746
        %v5765 = vpack.c.b16 %v5749, %v5748
        %v5770 = vunpack.c.l.b16 %v5714
        %v5771 = vunpack.c.l.b16 %v5715
        %v5772 = vunpack.c.l.b16 %v5716
        %v5773 = vunpack.c.l.b16 %v5717
        %v5774 = vpack.c.b16 %v5771, %v5770
        %v5775 = vpack.c.b16 %v5773, %v5772
        %v5779 = vsel %vm1369, %v5750, 0
        %v5782 = vsel %vm1369, %v5751, 0
        %v5785 = vsel %vm1369, %v5752, 0
        %v5788 = vsel %vm1369, %v5753, 0
        %v5791 = vsel %vm1369, %v5754, 0
        %v5794 = vsel %vm1369, %v5755, 0
        %v5797 = vsel %vm1369, %v5756, 0
        %v5800 = vsel %vm1369, %v5757, 0
        %v5803 = vsel %vm1369, %v5758, 0
        %v5806 = vsel %vm1369, %v5759, 0
        %v5809 = vsel %vm1369, %v5760, 0
        %v5812 = vsel %vm1369, %v5761, 0
        %v5815 = vsel %vm1369, %v5762, 0
        %v5818 = vsel %vm1369, %v5763, 0
        %v5821 = vsel %vm1369, %v5764, 0
        %v5824 = vsel %vm1369, %v5765, 0
        %5826 = vmatprep.subr.bf16.mxu0 0
        %5827 = vmatpush1.bf16.msra.mxu0 %v5774
        %5828 = vmatprep.subr.bf16.mxu0 0
        %5829 = vmatpush1.bf16.msra.mxu0 %v5775
        %5830 = vmatprep.subr.bf16.mxu0 0
        %5831 = vmatpush1.bf16.msra.mxu0 0
        %5832 = vmatprep.subr.bf16.mxu0 0
        %5833 = vmatpush1.bf16.msra.mxu0 0
        %5834 = vmatprep.subr.bf16.mxu0 0
        %5835 = vmatpush1.bf16.msra.mxu0 0
        %5836 = vmatprep.subr.bf16.mxu0 0
        %5837 = vmatpush1.bf16.msra.mxu0 0
        %5838 = vmatprep.subr.bf16.mxu0 0
        %5839 = vmatpush1.bf16.msra.mxu0 0
        %5840 = vmatprep.subr.bf16.mxu0 0
        %5841 = vmatpush1.bf16.msra.mxu0 0
        %5842 = vmatprep.subr.bf16.mxu0 0
        %5843 = vmatpush1.bf16.msra.mxu0 0
        %5844 = vmatprep.subr.bf16.mxu0 0
        %5845 = vmatpush1.bf16.msra.mxu0 0
        %5846 = vmatprep.subr.bf16.mxu0 0
        %5847 = vmatpush1.bf16.msra.mxu0 0
        %5848 = vmatprep.subr.bf16.mxu0 0
        %5849 = vmatpush1.bf16.msra.mxu0 0
        %5850 = vmatprep.subr.bf16.mxu0 0
        %5851 = vmatpush1.bf16.msra.mxu0 0
        %5852 = vmatprep.subr.bf16.mxu0 0
        %5853 = vmatpush1.bf16.msra.mxu0 0
        %5854 = vmatprep.subr.bf16.mxu0 0
        %5855 = vmatpush1.bf16.msra.mxu0 0
        %5856 = vmatprep.subr.bf16.mxu0 0
        %5857 = vmatpush1.bf16.msra.mxu0 0
        %5858 = vmatprep.mubr.bf16.mxu0 0
        %5859 = vmatmul.mubr.bf16.gmra.mrb[0].mxu0 %v5779
        %v5860 = vpop.f32.mrb[0].mxu0
        %v5861 = vadd.f32 0.0, %v5860
        %v5862 = vpop.f32.mrb[0].mxu0
        %v5863 = vpop.f32.mrb[0].mxu0
        %v5864 = vadd.f32 0.0, %v5863
        %v5865 = vpop.f32.mrb[0].mxu0
        %5866 = vmatprep.mubr.bf16.mxu0 0
        %5867 = vmatmul.mubr.bf16.gmra.mrb[0].mxu0 %v5782
        %v5868 = vpop.f32.mrb[0].mxu0
        %v5869 = vadd.f32 0.0, %v5868
        %v5870 = vpop.f32.mrb[0].mxu0
        %v5871 = vpop.f32.mrb[0].mxu0
        %v5872 = vadd.f32 0.0, %v5871
        %v5873 = vpop.f32.mrb[0].mxu0
        %5874 = vmatprep.mubr.bf16.mxu0 0
        %5875 = vmatmul.mubr.bf16.gmra.mrb[0].mxu0 %v5785
        %v5876 = vpop.f32.mrb[0].mxu0
        %v5877 = vadd.f32 0.0, %v5876
        %v5878 = vpop.f32.mrb[0].mxu0
        %v5879 = vpop.f32.mrb[0].mxu0
        %v5880 = vadd.f32 0.0, %v5879
        %v5881 = vpop.f32.mrb[0].mxu0
        %5882 = vmatprep.mubr.bf16.mxu0 0
        %5883 = vmatmul.mubr.bf16.gmra.mrb[0].mxu0 %v5788
        %v5884 = vpop.f32.mrb[0].mxu0
        %v5885 = vadd.f32 0.0, %v5884
        %v5886 = vpop.f32.mrb[0].mxu0
        %v5887 = vpop.f32.mrb[0].mxu0
        %v5888 = vadd.f32 0.0, %v5887
        %v5889 = vpop.f32.mrb[0].mxu0
        %5890 = vmatprep.mubr.bf16.mxu0 0
        %5891 = vmatmul.mubr.bf16.gmra.mrb[0].mxu0 %v5791
        %v5892 = vpop.f32.mrb[0].mxu0
        %v5893 = vadd.f32 0.0, %v5892
        %v5894 = vpop.f32.mrb[0].mxu0
        %v5895 = vpop.f32.mrb[0].mxu0
        %v5896 = vadd.f32 0.0, %v5895
        %v5897 = vpop.f32.mrb[0].mxu0
        %5898 = vmatprep.mubr.bf16.mxu0 0
        %5899 = vmatmul.mubr.bf16.gmra.mrb[0].mxu0 %v5794
        %v5900 = vpop.f32.mrb[0].mxu0
        %v5901 = vadd.f32 0.0, %v5900
        %v5902 = vpop.f32.mrb[0].mxu0
        %v5903 = vpop.f32.mrb[0].mxu0
        %v5904 = vadd.f32 0.0, %v5903
        %v5905 = vpop.f32.mrb[0].mxu0
        %5906 = vmatprep.mubr.bf16.mxu0 0
        %5907 = vmatmul.mubr.bf16.gmra.mrb[0].mxu0 %v5797
        %v5908 = vpop.f32.mrb[0].mxu0
        %v5909 = vadd.f32 0.0, %v5908
        %v5910 = vpop.f32.mrb[0].mxu0
        %v5911 = vpop.f32.mrb[0].mxu0
        %v5912 = vadd.f32 0.0, %v5911
        %v5913 = vpop.f32.mrb[0].mxu0
        %5914 = vmatprep.mubr.bf16.mxu0 0
        %5915 = vmatmul.mubr.bf16.gmra.mrb[0].mxu0 %v5800
        %v5916 = vpop.f32.mrb[0].mxu0
        %v5917 = vadd.f32 0.0, %v5916
        %v5918 = vpop.f32.mrb[0].mxu0
        %v5919 = vpop.f32.mrb[0].mxu0
        %v5920 = vadd.f32 0.0, %v5919
        %v5921 = vpop.f32.mrb[0].mxu0
        %5922 = vmatprep.mubr.bf16.mxu0 0
        %5923 = vmatmul.mubr.bf16.gmra.mrb[0].mxu0 %v5803
        %v5924 = vpop.f32.mrb[0].mxu0
        %v5925 = vadd.f32 0.0, %v5924
        %v5926 = vpop.f32.mrb[0].mxu0
        %v5927 = vpop.f32.mrb[0].mxu0
        %v5928 = vadd.f32 0.0, %v5927
        %v5929 = vpop.f32.mrb[0].mxu0
        %5930 = vmatprep.mubr.bf16.mxu0 0
        %5931 = vmatmul.mubr.bf16.gmra.mrb[0].mxu0 %v5806
        %v5932 = vpop.f32.mrb[0].mxu0
        %v5933 = vadd.f32 0.0, %v5932
        %v5934 = vpop.f32.mrb[0].mxu0
        %v5935 = vpop.f32.mrb[0].mxu0
        %v5936 = vadd.f32 0.0, %v5935
        %v5937 = vpop.f32.mrb[0].mxu0
        %5938 = vmatprep.mubr.bf16.mxu0 0
        %5939 = vmatmul.mubr.bf16.gmra.mrb[0].mxu0 %v5809
        %v5940 = vpop.f32.mrb[0].mxu0
        %v5941 = vadd.f32 0.0, %v5940
        %v5942 = vpop.f32.mrb[0].mxu0
        %v5943 = vpop.f32.mrb[0].mxu0
        %v5944 = vadd.f32 0.0, %v5943
        %v5945 = vpop.f32.mrb[0].mxu0
        %5946 = vmatprep.mubr.bf16.mxu0 0
        %5947 = vmatmul.mubr.bf16.gmra.mrb[0].mxu0 %v5812
        %v5948 = vpop.f32.mrb[0].mxu0
        %v5949 = vadd.f32 0.0, %v5948
        %v5950 = vpop.f32.mrb[0].mxu0
        %v5951 = vpop.f32.mrb[0].mxu0
        %v5952 = vadd.f32 0.0, %v5951
        %v5953 = vpop.f32.mrb[0].mxu0
        %5954 = vmatprep.mubr.bf16.mxu0 0
        %5955 = vmatmul.mubr.bf16.gmra.mrb[0].mxu0 %v5815
        %v5956 = vpop.f32.mrb[0].mxu0
        %v5957 = vadd.f32 0.0, %v5956
        %v5958 = vpop.f32.mrb[0].mxu0
        %v5959 = vpop.f32.mrb[0].mxu0
        %v5960 = vadd.f32 0.0, %v5959
        %v5961 = vpop.f32.mrb[0].mxu0
        %5962 = vmatprep.mubr.bf16.mxu0 0
        %5963 = vmatmul.mubr.bf16.gmra.mrb[0].mxu0 %v5818
        %v5964 = vpop.f32.mrb[0].mxu0
        %v5965 = vadd.f32 0.0, %v5964
        %v5966 = vpop.f32.mrb[0].mxu0
        %v5967 = vpop.f32.mrb[0].mxu0
        %v5968 = vadd.f32 0.0, %v5967
        %v5969 = vpop.f32.mrb[0].mxu0
        %5970 = vmatprep.mubr.bf16.mxu0 0
        %5971 = vmatmul.mubr.bf16.gmra.mrb[0].mxu0 %v5821
        %v5972 = vpop.f32.mrb[0].mxu0
        %v5973 = vadd.f32 0.0, %v5972
        %v5974 = vpop.f32.mrb[0].mxu0
        %v5975 = vpop.f32.mrb[0].mxu0
        %v5976 = vadd.f32 0.0, %v5975
        %v5977 = vpop.f32.mrb[0].mxu0
        %5978 = vmatprep.mubr.bf16.mxu0 0
        %5979 = vmatmul.mubr.bf16.gmra.mrb[0].mxu0 %v5824
        %v5980 = vpop.f32.mrb[0].mxu0
        %v5981 = vadd.f32 0.0, %v5980
        %v5982 = vpop.f32.mrb[0].mxu0
        %v5983 = vpop.f32.mrb[0].mxu0
        %v5984 = vadd.f32 0.0, %v5983
        %v5985 = vpop.f32.mrb[0].mxu0
        %5986 = vdwg.mxu0
        %v5987 = vadd.f32 %v5505, %v5861
        %v5988 = vadd.f32 %v5506, %v5864
        %v5989 = vadd.f32 %v5507, %v5869
        %v5990 = vadd.f32 %v5508, %v5872
        %v5991 = vadd.f32 %v5509, %v5877
        %v5992 = vadd.f32 %v5510, %v5880
        %v5993 = vadd.f32 %v5511, %v5885
        %v5994 = vadd.f32 %v5512, %v5888
        %v5995 = vadd.f32 %v5513, %v5893
        %v5996 = vadd.f32 %v5514, %v5896
        %v5997 = vadd.f32 %v5515, %v5901
        %v5998 = vadd.f32 %v5516, %v5904
        %v5999 = vadd.f32 %v5517, %v5909
        %v6000 = vadd.f32 %v5518, %v5912
        %v6001 = vadd.f32 %v5519, %v5917
        %v6002 = vadd.f32 %v5520, %v5920
        %v6003 = vadd.f32 %v5521, %v5925
        %v6004 = vadd.f32 %v5522, %v5928
        %v6005 = vadd.f32 %v5523, %v5933
        %v6006 = vadd.f32 %v5524, %v5936
        %v6007 = vadd.f32 %v5525, %v5941
        %v6008 = vadd.f32 %v5526, %v5944
        %v6009 = vadd.f32 %v5527, %v5949
        %v6010 = vadd.f32 %v5528, %v5952
        %v6011 = vadd.f32 %v5529, %v5957
        %v6012 = vadd.f32 %v5530, %v5960
        %v6013 = vadd.f32 %v5531, %v5965
        %v6014 = vadd.f32 %v5532, %v5968
        %v6015 = vadd.f32 %v5533, %v5973
        %v6016 = vadd.f32 %v5534, %v5976
        %v6017 = vadd.f32 %v5535, %v5981
        %v6018 = vadd.f32 %v5536, %v5984
        %s6019 = scalar_lea.vmem %s222, 12
        %v6020 = vld [vmem:[%s6019] sm:$0xf]
        %v6021 = vld [vmem:[%s6019 + $0x4] sm:$0xf]
        %v6022 = vld [vmem:[%s6019 + $0x8] sm:$0x1]
        %v6023 = vld [vmem:[%s6019 + $0xc] sm:$0xf]
        %v6024 = vld [vmem:[%s6019 + $0x10] sm:$0xf]
        %v6025 = vld [vmem:[%s6019 + $0x14] sm:$0x1]
        %v6026 = vld [vmem:[%s6019 + $0x18] sm:$0xf]
        %v6027 = vld [vmem:[%s6019 + $0x1c] sm:$0xf]
        %v6028 = vld [vmem:[%s6019 + $0x20] sm:$0x1]
        %v6029 = vld [vmem:[%s6019 + $0x24] sm:$0xf]
        %v6030 = vld [vmem:[%s6019 + $0x28] sm:$0xf]
        %v6031 = vld [vmem:[%s6019 + $0x2c] sm:$0x1]
        %v6032 = vld [vmem:[%s6019 + $0x30] sm:$0xf]
        %v6033 = vld [vmem:[%s6019 + $0x34] sm:$0xf]
        %v6034 = vld [vmem:[%s6019 + $0x38] sm:$0x1]
        %v6035 = vld [vmem:[%s6019 + $0x3c] sm:$0xf]
        %v6036 = vld [vmem:[%s6019 + $0x40] sm:$0xf]
        %v6037 = vld [vmem:[%s6019 + $0x44] sm:$0x1]
        %v6038 = vld [vmem:[%s6019 + $0x48] sm:$0xf]
        %v6039 = vld [vmem:[%s6019 + $0x4c] sm:$0xf]
        %v6040 = vld [vmem:[%s6019 + $0x50] sm:$0x1]
        %v6041 = vld [vmem:[%s6019 + $0x54] sm:$0xf]
        %v6042 = vld [vmem:[%s6019 + $0x58] sm:$0xf]
        %v6043 = vld [vmem:[%s6019 + $0x5c] sm:$0x1]
        %v6044 = vld [vmem:[%s6019 + $0x60] sm:$0xf]
        %v6045 = vld [vmem:[%s6019 + $0x64] sm:$0xf]
        %v6046 = vld [vmem:[%s6019 + $0x68] sm:$0x1]
        %v6047 = vld [vmem:[%s6019 + $0x6c] sm:$0xf]
        %v6048 = vld [vmem:[%s6019 + $0x70] sm:$0xf]
        %v6049 = vld [vmem:[%s6019 + $0x74] sm:$0x1]
        %v6050 = vld [vmem:[%s6019 + $0x78] sm:$0xf]
        %v6051 = vld [vmem:[%s6019 + $0x7c] sm:$0xf]
        %v6052 = vld [vmem:[%s6019 + $0x80] sm:$0x1]
        %v6053 = vld [vmem:[%s6019 + $0x84] sm:$0xf]
        %v6054 = vld [vmem:[%s6019 + $0x88] sm:$0xf]
        %v6055 = vld [vmem:[%s6019 + $0x8c] sm:$0x1]
        %v6056 = vld [vmem:[%s6019 + $0x90] sm:$0xf]
        %v6057 = vld [vmem:[%s6019 + $0x94] sm:$0xf]
        %v6058 = vld [vmem:[%s6019 + $0x98] sm:$0x1]
        %v6059 = vld [vmem:[%s6019 + $0x9c] sm:$0xf]
        %v6060 = vld [vmem:[%s6019 + $0xa0] sm:$0xf]
        %v6061 = vld [vmem:[%s6019 + $0xa4] sm:$0x1]
        %v6062 = vld [vmem:[%s6019 + $0xa8] sm:$0xf]
        %v6063 = vld [vmem:[%s6019 + $0xac] sm:$0xf]
        %v6064 = vld [vmem:[%s6019 + $0xb0] sm:$0x1]
        %v6065 = vld [vmem:[%s6019 + $0xb4] sm:$0xf]
        %v6066 = vld [vmem:[%s6019 + $0xb8] sm:$0xf]
        %v6067 = vld [vmem:[%s6019 + $0xbc] sm:$0x1]
        %v6069 = vshrl.u32 %v6020, 16
        %v6071 = vrot.slane %v6069, 4
        %v6072 = vshll.u32 %v6020, 16
        %v6074 = vrot.slane %v6072, 5
        %v6075 = vor.u32 %v6071, %v6074
        %v6076 = vrot.slane %v6075, 4
        %v6078 = vshll.u32 %v6021, 16
        %v6080 = vrot.slane %v6078, 5
        %v6081 = vsel %vm1661, %v6076, %v6080
        %v6082 = vshrl.u32 %v6021, 16
        %v6084 = vrot.slane %v6082, 4
        %v6085 = vor.u32 %v6084, %v6080
        %v6086 = vrot.slane %v6085, 4
        %v6088 = vshll.u32 %v6022, 16
        %v6090 = vrot.slane %v6088, 5
        %v6091 = vsel %vm1661, %v6086, %v6090
        %v6093 = vshrl.u32 %v6023, 16
        %v6095 = vrot.slane %v6093, 4
        %v6096 = vshll.u32 %v6023, 16
        %v6098 = vrot.slane %v6096, 5
        %v6099 = vor.u32 %v6095, %v6098
        %v6100 = vrot.slane %v6099, 4
        %v6102 = vshll.u32 %v6024, 16
        %v6104 = vrot.slane %v6102, 5
        %v6105 = vsel %vm1661, %v6100, %v6104
        %v6106 = vshrl.u32 %v6024, 16
        %v6108 = vrot.slane %v6106, 4
        %v6109 = vor.u32 %v6108, %v6104
        %v6110 = vrot.slane %v6109, 4
        %v6112 = vshll.u32 %v6025, 16
        %v6114 = vrot.slane %v6112, 5
        %v6115 = vsel %vm1661, %v6110, %v6114
        %v6117 = vshrl.u32 %v6026, 16
        %v6119 = vrot.slane %v6117, 4
        %v6120 = vshll.u32 %v6026, 16
        %v6122 = vrot.slane %v6120, 5
        %v6123 = vor.u32 %v6119, %v6122
        %v6124 = vrot.slane %v6123, 4
        %v6126 = vshll.u32 %v6027, 16
        %v6128 = vrot.slane %v6126, 5
        %v6129 = vsel %vm1661, %v6124, %v6128
        %v6130 = vshrl.u32 %v6027, 16
        %v6132 = vrot.slane %v6130, 4
        %v6133 = vor.u32 %v6132, %v6128
        %v6134 = vrot.slane %v6133, 4
        %v6136 = vshll.u32 %v6028, 16
        %v6138 = vrot.slane %v6136, 5
        %v6139 = vsel %vm1661, %v6134, %v6138
        %v6141 = vshrl.u32 %v6029, 16
        %v6143 = vrot.slane %v6141, 4
        %v6144 = vshll.u32 %v6029, 16
        %v6146 = vrot.slane %v6144, 5
        %v6147 = vor.u32 %v6143, %v6146
        %v6148 = vrot.slane %v6147, 4
        %v6150 = vshll.u32 %v6030, 16
        %v6152 = vrot.slane %v6150, 5
        %v6153 = vsel %vm1661, %v6148, %v6152
        %v6154 = vshrl.u32 %v6030, 16
        %v6156 = vrot.slane %v6154, 4
        %v6157 = vor.u32 %v6156, %v6152
        %v6158 = vrot.slane %v6157, 4
        %v6160 = vshll.u32 %v6031, 16
        %v6162 = vrot.slane %v6160, 5
        %v6163 = vsel %vm1661, %v6158, %v6162
        %v6165 = vshrl.u32 %v6032, 16
        %v6167 = vrot.slane %v6165, 4
        %v6168 = vshll.u32 %v6032, 16
        %v6170 = vrot.slane %v6168, 5
        %v6171 = vor.u32 %v6167, %v6170
        %v6172 = vrot.slane %v6171, 4
        %v6174 = vshll.u32 %v6033, 16
        %v6176 = vrot.slane %v6174, 5
        %v6177 = vsel %vm1661, %v6172, %v6176
        %v6178 = vshrl.u32 %v6033, 16
        %v6180 = vrot.slane %v6178, 4
        %v6181 = vor.u32 %v6180, %v6176
        %v6182 = vrot.slane %v6181, 4
        %v6184 = vshll.u32 %v6034, 16
        %v6186 = vrot.slane %v6184, 5
        %v6187 = vsel %vm1661, %v6182, %v6186
        %v6189 = vshrl.u32 %v6035, 16
        %v6191 = vrot.slane %v6189, 4
        %v6192 = vshll.u32 %v6035, 16
        %v6194 = vrot.slane %v6192, 5
        %v6195 = vor.u32 %v6191, %v6194
        %v6196 = vrot.slane %v6195, 4
        %v6198 = vshll.u32 %v6036, 16
        %v6200 = vrot.slane %v6198, 5
        %v6201 = vsel %vm1661, %v6196, %v6200
        %v6202 = vshrl.u32 %v6036, 16
        %v6204 = vrot.slane %v6202, 4
        %v6205 = vor.u32 %v6204, %v6200
        %v6206 = vrot.slane %v6205, 4
        %v6208 = vshll.u32 %v6037, 16
        %v6210 = vrot.slane %v6208, 5
        %v6211 = vsel %vm1661, %v6206, %v6210
        %v6213 = vshrl.u32 %v6038, 16
        %v6215 = vrot.slane %v6213, 4
        %v6216 = vshll.u32 %v6038, 16
        %v6218 = vrot.slane %v6216, 5
        %v6219 = vor.u32 %v6215, %v6218
        %v6220 = vrot.slane %v6219, 4
        %v6222 = vshll.u32 %v6039, 16
        %v6224 = vrot.slane %v6222, 5
        %v6225 = vsel %vm1661, %v6220, %v6224
        %v6226 = vshrl.u32 %v6039, 16
        %v6228 = vrot.slane %v6226, 4
        %v6229 = vor.u32 %v6228, %v6224
        %v6230 = vrot.slane %v6229, 4
        %v6232 = vshll.u32 %v6040, 16
        %v6234 = vrot.slane %v6232, 5
        %v6235 = vsel %vm1661, %v6230, %v6234
        %v6237 = vshrl.u32 %v6041, 16
        %v6239 = vrot.slane %v6237, 4
        %v6240 = vshll.u32 %v6041, 16
        %v6242 = vrot.slane %v6240, 5
        %v6243 = vor.u32 %v6239, %v6242
        %v6244 = vrot.slane %v6243, 4
        %v6246 = vshll.u32 %v6042, 16
        %v6248 = vrot.slane %v6246, 5
        %v6249 = vsel %vm1661, %v6244, %v6248
        %v6250 = vshrl.u32 %v6042, 16
        %v6252 = vrot.slane %v6250, 4
        %v6253 = vor.u32 %v6252, %v6248
        %v6254 = vrot.slane %v6253, 4
        %v6256 = vshll.u32 %v6043, 16
        %v6258 = vrot.slane %v6256, 5
        %v6259 = vsel %vm1661, %v6254, %v6258
        %v6261 = vshrl.u32 %v6044, 16
        %v6263 = vrot.slane %v6261, 4
        %v6264 = vshll.u32 %v6044, 16
        %v6266 = vrot.slane %v6264, 5
        %v6267 = vor.u32 %v6263, %v6266
        %v6268 = vrot.slane %v6267, 4
        %v6270 = vshll.u32 %v6045, 16
        %v6272 = vrot.slane %v6270, 5
        %v6273 = vsel %vm1661, %v6268, %v6272
        %v6274 = vshrl.u32 %v6045, 16
        %v6276 = vrot.slane %v6274, 4
        %v6277 = vor.u32 %v6276, %v6272
        %v6278 = vrot.slane %v6277, 4
        %v6280 = vshll.u32 %v6046, 16
        %v6282 = vrot.slane %v6280, 5
        %v6283 = vsel %vm1661, %v6278, %v6282
        %v6285 = vshrl.u32 %v6047, 16
        %v6287 = vrot.slane %v6285, 4
        %v6288 = vshll.u32 %v6047, 16
        %v6290 = vrot.slane %v6288, 5
        %v6291 = vor.u32 %v6287, %v6290
        %v6292 = vrot.slane %v6291, 4
        %v6294 = vshll.u32 %v6048, 16
        %v6296 = vrot.slane %v6294, 5
        %v6297 = vsel %vm1661, %v6292, %v6296
        %v6298 = vshrl.u32 %v6048, 16
        %v6300 = vrot.slane %v6298, 4
        %v6301 = vor.u32 %v6300, %v6296
        %v6302 = vrot.slane %v6301, 4
        %v6304 = vshll.u32 %v6049, 16
        %v6306 = vrot.slane %v6304, 5
        %v6307 = vsel %vm1661, %v6302, %v6306
        %v6309 = vshrl.u32 %v6050, 16
        %v6311 = vrot.slane %v6309, 4
        %v6312 = vshll.u32 %v6050, 16
        %v6314 = vrot.slane %v6312, 5
        %v6315 = vor.u32 %v6311, %v6314
        %v6316 = vrot.slane %v6315, 4
        %v6318 = vshll.u32 %v6051, 16
        %v6320 = vrot.slane %v6318, 5
        %v6321 = vsel %vm1661, %v6316, %v6320
        %v6322 = vshrl.u32 %v6051, 16
        %v6324 = vrot.slane %v6322, 4
        %v6325 = vor.u32 %v6324, %v6320
        %v6326 = vrot.slane %v6325, 4
        %v6328 = vshll.u32 %v6052, 16
        %v6330 = vrot.slane %v6328, 5
        %v6331 = vsel %vm1661, %v6326, %v6330
        %v6333 = vshrl.u32 %v6053, 16
        %v6335 = vrot.slane %v6333, 4
        %v6336 = vshll.u32 %v6053, 16
        %v6338 = vrot.slane %v6336, 5
        %v6339 = vor.u32 %v6335, %v6338
        %v6340 = vrot.slane %v6339, 4
        %v6342 = vshll.u32 %v6054, 16
        %v6344 = vrot.slane %v6342, 5
        %v6345 = vsel %vm1661, %v6340, %v6344
        %v6346 = vshrl.u32 %v6054, 16
        %v6348 = vrot.slane %v6346, 4
        %v6349 = vor.u32 %v6348, %v6344
        %v6350 = vrot.slane %v6349, 4
        %v6352 = vshll.u32 %v6055, 16
        %v6354 = vrot.slane %v6352, 5
        %v6355 = vsel %vm1661, %v6350, %v6354
        %v6357 = vshrl.u32 %v6056, 16
        %v6359 = vrot.slane %v6357, 4
        %v6360 = vshll.u32 %v6056, 16
        %v6362 = vrot.slane %v6360, 5
        %v6363 = vor.u32 %v6359, %v6362
        %v6364 = vrot.slane %v6363, 4
        %v6366 = vshll.u32 %v6057, 16
        %v6368 = vrot.slane %v6366, 5
        %v6369 = vsel %vm1661, %v6364, %v6368
        %v6370 = vshrl.u32 %v6057, 16
        %v6372 = vrot.slane %v6370, 4
        %v6373 = vor.u32 %v6372, %v6368
        %v6374 = vrot.slane %v6373, 4
        %v6376 = vshll.u32 %v6058, 16
        %v6378 = vrot.slane %v6376, 5
        %v6379 = vsel %vm1661, %v6374, %v6378
        %v6381 = vshrl.u32 %v6059, 16
        %v6383 = vrot.slane %v6381, 4
        %v6384 = vshll.u32 %v6059, 16
        %v6386 = vrot.slane %v6384, 5
        %v6387 = vor.u32 %v6383, %v6386
        %v6388 = vrot.slane %v6387, 4
        %v6390 = vshll.u32 %v6060, 16
        %v6392 = vrot.slane %v6390, 5
        %v6393 = vsel %vm1661, %v6388, %v6392
        %v6394 = vshrl.u32 %v6060, 16
        %v6396 = vrot.slane %v6394, 4
        %v6397 = vor.u32 %v6396, %v6392
        %v6398 = vrot.slane %v6397, 4
        %v6400 = vshll.u32 %v6061, 16
        %v6402 = vrot.slane %v6400, 5
        %v6403 = vsel %vm1661, %v6398, %v6402
        %v6405 = vshrl.u32 %v6062, 16
        %v6407 = vrot.slane %v6405, 4
        %v6408 = vshll.u32 %v6062, 16
        %v6410 = vrot.slane %v6408, 5
        %v6411 = vor.u32 %v6407, %v6410
        %v6412 = vrot.slane %v6411, 4
        %v6414 = vshll.u32 %v6063, 16
        %v6416 = vrot.slane %v6414, 5
        %v6417 = vsel %vm1661, %v6412, %v6416
        %v6418 = vshrl.u32 %v6063, 16
        %v6420 = vrot.slane %v6418, 4
        %v6421 = vor.u32 %v6420, %v6416
        %v6422 = vrot.slane %v6421, 4
        %v6424 = vshll.u32 %v6064, 16
        %v6426 = vrot.slane %v6424, 5
        %v6427 = vsel %vm1661, %v6422, %v6426
        %v6429 = vshrl.u32 %v6065, 16
        %v6431 = vrot.slane %v6429, 4
        %v6432 = vshll.u32 %v6065, 16
        %v6434 = vrot.slane %v6432, 5
        %v6435 = vor.u32 %v6431, %v6434
        %v6436 = vrot.slane %v6435, 4
        %v6438 = vshll.u32 %v6066, 16
        %v6440 = vrot.slane %v6438, 5
        %v6441 = vsel %vm1661, %v6436, %v6440
        %v6442 = vshrl.u32 %v6066, 16
        %v6444 = vrot.slane %v6442, 4
        %v6445 = vor.u32 %v6444, %v6440
        %v6446 = vrot.slane %v6445, 4
        %v6448 = vshll.u32 %v6067, 16
        %v6450 = vrot.slane %v6448, 5
        %v6451 = vsel %vm1661, %v6446, %v6450
        %v6484 = vunpack.c.l.bf16 %v6081
        %v6485 = vunpack.c.l.bf16 %v6091
        %v6486 = vunpack.c.l.bf16 %v6105
        %v6487 = vunpack.c.l.bf16 %v6115
        %v6488 = vunpack.c.l.bf16 %v6129
        %v6489 = vunpack.c.l.bf16 %v6139
        %v6490 = vunpack.c.l.bf16 %v6153
        %v6491 = vunpack.c.l.bf16 %v6163
        %v6492 = vunpack.c.l.bf16 %v6177
        %v6493 = vunpack.c.l.bf16 %v6187
        %v6494 = vunpack.c.l.bf16 %v6201
        %v6495 = vunpack.c.l.bf16 %v6211
        %v6496 = vunpack.c.l.bf16 %v6225
        %v6497 = vunpack.c.l.bf16 %v6235
        %v6498 = vunpack.c.l.bf16 %v6249
        %v6499 = vunpack.c.l.bf16 %v6259
        %v6500 = vunpack.c.l.bf16 %v6273
        %v6501 = vunpack.c.l.bf16 %v6283
        %v6502 = vunpack.c.l.bf16 %v6297
        %v6503 = vunpack.c.l.bf16 %v6307
        %v6504 = vunpack.c.l.bf16 %v6321
        %v6505 = vunpack.c.l.bf16 %v6331
        %v6506 = vunpack.c.l.bf16 %v6345
        %v6507 = vunpack.c.l.bf16 %v6355
        %v6508 = vunpack.c.l.bf16 %v6369
        %v6509 = vunpack.c.l.bf16 %v6379
        %v6510 = vunpack.c.l.bf16 %v6393
        %v6511 = vunpack.c.l.bf16 %v6403
        %v6512 = vunpack.c.l.bf16 %v6417
        %v6513 = vunpack.c.l.bf16 %v6427
        %v6514 = vunpack.c.l.bf16 %v6441
        %v6515 = vunpack.c.l.bf16 %v6451
        %v6516 = vadd.f32 %v5987, %v6484
        %v6517 = vadd.f32 %v5988, %v6485
        %v6518 = vadd.f32 %v5989, %v6486
        %v6519 = vadd.f32 %v5990, %v6487
        %v6520 = vadd.f32 %v5991, %v6488
        %v6521 = vadd.f32 %v5992, %v6489
        %v6522 = vadd.f32 %v5993, %v6490
        %v6523 = vadd.f32 %v5994, %v6491
        %v6524 = vadd.f32 %v5995, %v6492
        %v6525 = vadd.f32 %v5996, %v6493
        %v6526 = vadd.f32 %v5997, %v6494
        %v6527 = vadd.f32 %v5998, %v6495
        %v6528 = vadd.f32 %v5999, %v6496
        %v6529 = vadd.f32 %v6000, %v6497
        %v6530 = vadd.f32 %v6001, %v6498
        %v6531 = vadd.f32 %v6002, %v6499
        %v6532 = vadd.f32 %v6003, %v6500
        %v6533 = vadd.f32 %v6004, %v6501
        %v6534 = vadd.f32 %v6005, %v6502
        %v6535 = vadd.f32 %v6006, %v6503
        %v6536 = vadd.f32 %v6007, %v6504
        %v6537 = vadd.f32 %v6008, %v6505
        %v6538 = vadd.f32 %v6009, %v6506
        %v6539 = vadd.f32 %v6010, %v6507
        %v6540 = vadd.f32 %v6011, %v6508
        %v6541 = vadd.f32 %v6012, %v6509
        %v6542 = vadd.f32 %v6013, %v6510
        %v6543 = vadd.f32 %v6014, %v6511
        %v6544 = vadd.f32 %v6015, %v6512
        %v6545 = vadd.f32 %v6016, %v6513
        %v6546 = vadd.f32 %v6017, %v6514
        %v6547 = vadd.f32 %v6018, %v6515
        %vm6548 = vcmp.ge.f32.partialorder %v6516, 0.0
        %vm6549 = vcmp.ge.f32.partialorder %v6517, 0.0
        %vm6550 = vcmp.ge.f32.partialorder %v6518, 0.0
        %vm6551 = vcmp.ge.f32.partialorder %v6519, 0.0
        %vm6552 = vcmp.ge.f32.partialorder %v6520, 0.0
        %vm6553 = vcmp.ge.f32.partialorder %v6521, 0.0
        %vm6554 = vcmp.ge.f32.partialorder %v6522, 0.0
        %vm6555 = vcmp.ge.f32.partialorder %v6523, 0.0
        %vm6556 = vcmp.ge.f32.partialorder %v6524, 0.0
        %vm6557 = vcmp.ge.f32.partialorder %v6525, 0.0
        %vm6558 = vcmp.ge.f32.partialorder %v6526, 0.0
        %vm6559 = vcmp.ge.f32.partialorder %v6527, 0.0
        %vm6560 = vcmp.ge.f32.partialorder %v6528, 0.0
        %vm6561 = vcmp.ge.f32.partialorder %v6529, 0.0
        %vm6562 = vcmp.ge.f32.partialorder %v6530, 0.0
        %vm6563 = vcmp.ge.f32.partialorder %v6531, 0.0
        %vm6564 = vcmp.ge.f32.partialorder %v6532, 0.0
        %vm6565 = vcmp.ge.f32.partialorder %v6533, 0.0
        %vm6566 = vcmp.ge.f32.partialorder %v6534, 0.0
        %vm6567 = vcmp.ge.f32.partialorder %v6535, 0.0
        %vm6568 = vcmp.ge.f32.partialorder %v6536, 0.0
        %vm6569 = vcmp.ge.f32.partialorder %v6537, 0.0
        %vm6570 = vcmp.ge.f32.partialorder %v6538, 0.0
        %vm6571 = vcmp.ge.f32.partialorder %v6539, 0.0
        %vm6572 = vcmp.ge.f32.partialorder %v6540, 0.0
        %vm6573 = vcmp.ge.f32.partialorder %v6541, 0.0
        %vm6574 = vcmp.ge.f32.partialorder %v6542, 0.0
        %vm6575 = vcmp.ge.f32.partialorder %v6543, 0.0
        %vm6576 = vcmp.ge.f32.partialorder %v6544, 0.0
        %vm6577 = vcmp.ge.f32.partialorder %v6545, 0.0
        %vm6578 = vcmp.ge.f32.partialorder %v6546, 0.0
        %vm6579 = vcmp.ge.f32.partialorder %v6547, 0.0
        %v6580 = vmul.f32 %v6516, 0.01
        %v6581 = vmul.f32 %v6517, 0.01
        %v6582 = vmul.f32 %v6518, 0.01
        %v6583 = vmul.f32 %v6519, 0.01
        %v6584 = vmul.f32 %v6520, 0.01
        %v6585 = vmul.f32 %v6521, 0.01
        %v6586 = vmul.f32 %v6522, 0.01
        %v6587 = vmul.f32 %v6523, 0.01
        %v6588 = vmul.f32 %v6524, 0.01
        %v6589 = vmul.f32 %v6525, 0.01
        %v6590 = vmul.f32 %v6526, 0.01
        %v6591 = vmul.f32 %v6527, 0.01
        %v6592 = vmul.f32 %v6528, 0.01
        %v6593 = vmul.f32 %v6529, 0.01
        %v6594 = vmul.f32 %v6530, 0.01
        %v6595 = vmul.f32 %v6531, 0.01
        %v6596 = vmul.f32 %v6532, 0.01
        %v6597 = vmul.f32 %v6533, 0.01
        %v6598 = vmul.f32 %v6534, 0.01
        %v6599 = vmul.f32 %v6535, 0.01
        %v6600 = vmul.f32 %v6536, 0.01
        %v6601 = vmul.f32 %v6537, 0.01
        %v6602 = vmul.f32 %v6538, 0.01
        %v6603 = vmul.f32 %v6539, 0.01
        %v6604 = vmul.f32 %v6540, 0.01
        %v6605 = vmul.f32 %v6541, 0.01
        %v6606 = vmul.f32 %v6542, 0.01
        %v6607 = vmul.f32 %v6543, 0.01
        %v6608 = vmul.f32 %v6544, 0.01
        %v6609 = vmul.f32 %v6545, 0.01
        %v6610 = vmul.f32 %v6546, 0.01
        %v6611 = vmul.f32 %v6547, 0.01
        %v6612 = vsel %vm6548, %v6516, %v6580
        %v6613 = vsel %vm6549, %v6517, %v6581
        %v6614 = vsel %vm6550, %v6518, %v6582
        %v6615 = vsel %vm6551, %v6519, %v6583
        %v6616 = vsel %vm6552, %v6520, %v6584
        %v6617 = vsel %vm6553, %v6521, %v6585
        %v6618 = vsel %vm6554, %v6522, %v6586
        %v6619 = vsel %vm6555, %v6523, %v6587
        %v6620 = vsel %vm6556, %v6524, %v6588
        %v6621 = vsel %vm6557, %v6525, %v6589
        %v6622 = vsel %vm6558, %v6526, %v6590
        %v6623 = vsel %vm6559, %v6527, %v6591
        %v6624 = vsel %vm6560, %v6528, %v6592
        %v6625 = vsel %vm6561, %v6529, %v6593
        %v6626 = vsel %vm6562, %v6530, %v6594
        %v6627 = vsel %vm6563, %v6531, %v6595
        %v6628 = vsel %vm6564, %v6532, %v6596
        %v6629 = vsel %vm6565, %v6533, %v6597
        %v6630 = vsel %vm6566, %v6534, %v6598
        %v6631 = vsel %vm6567, %v6535, %v6599
        %v6632 = vsel %vm6568, %v6536, %v6600
        %v6633 = vsel %vm6569, %v6537, %v6601
        %v6634 = vsel %vm6570, %v6538, %v6602
        %v6635 = vsel %vm6571, %v6539, %v6603
        %v6636 = vsel %vm6572, %v6540, %v6604
        %v6637 = vsel %vm6573, %v6541, %v6605
        %v6638 = vsel %vm6574, %v6542, %v6606
        %v6639 = vsel %vm6575, %v6543, %v6607
        %v6640 = vsel %vm6576, %v6544, %v6608
        %v6641 = vsel %vm6577, %v6545, %v6609
        %v6642 = vsel %vm6578, %v6546, %v6610
        %v6643 = vsel %vm6579, %v6547, %v6611
        %6644 = vst.msk [vmem:[%s217] sm:$0xff] %vm452, %v6612
        %6645 = vst.msk [vmem:[%s217 + $0x8] sm:$0xff] %vm452, %v6613
        %6646 = vst.msk [vmem:[%s217 + $0x10] sm:$0xff] %vm452, %v6614
        %6647 = vst.msk [vmem:[%s217 + $0x18] sm:$0xff] %vm452, %v6615
        %6648 = vst.msk [vmem:[%s217 + $0x20] sm:$0xff] %vm452, %v6616
        %6649 = vst.msk [vmem:[%s217 + $0x28] sm:$0xff] %vm452, %v6617
        %6650 = vst.msk [vmem:[%s217 + $0x30] sm:$0xff] %vm452, %v6618
        %6651 = vst.msk [vmem:[%s217 + $0x38] sm:$0xff] %vm452, %v6619
        %6652 = vst.msk [vmem:[%s217 + $0x40] sm:$0xff] %vm452, %v6620
        %6653 = vst.msk [vmem:[%s217 + $0x48] sm:$0xff] %vm452, %v6621
        %6654 = vst.msk [vmem:[%s217 + $0x50] sm:$0xff] %vm452, %v6622
        %6655 = vst.msk [vmem:[%s217 + $0x58] sm:$0xff] %vm452, %v6623
        %6656 = vst.msk [vmem:[%s217 + $0x60] sm:$0xff] %vm452, %v6624
        %6657 = vst.msk [vmem:[%s217 + $0x68] sm:$0xff] %vm452, %v6625
        %6658 = vst.msk [vmem:[%s217 + $0x70] sm:$0xff] %vm452, %v6626
        %6659 = vst.msk [vmem:[%s217 + $0x78] sm:$0xff] %vm452, %v6627
        %6660 = vst.msk [vmem:[%s217 + $0x80] sm:$0xff] %vm452, %v6628
        %6661 = vst.msk [vmem:[%s217 + $0x88] sm:$0xff] %vm452, %v6629
        %6662 = vst.msk [vmem:[%s217 + $0x90] sm:$0xff] %vm452, %v6630
        %6663 = vst.msk [vmem:[%s217 + $0x98] sm:$0xff] %vm452, %v6631
        %6664 = vst.msk [vmem:[%s217 + $0xa0] sm:$0xff] %vm452, %v6632
        %6665 = vst.msk [vmem:[%s217 + $0xa8] sm:$0xff] %vm452, %v6633
        %6666 = vst.msk [vmem:[%s217 + $0xb0] sm:$0xff] %vm452, %v6634
        %6667 = vst.msk [vmem:[%s217 + $0xb8] sm:$0xff] %vm452, %v6635
        %6668 = vst.msk [vmem:[%s217 + $0xc0] sm:$0xff] %vm452, %v6636
        %6669 = vst.msk [vmem:[%s217 + $0xc8] sm:$0xff] %vm452, %v6637
        %6670 = vst.msk [vmem:[%s217 + $0xd0] sm:$0xff] %vm452, %v6638
        %6671 = vst.msk [vmem:[%s217 + $0xd8] sm:$0xff] %vm452, %v6639
        %6672 = vst.msk [vmem:[%s217 + $0xe0] sm:$0xff] %vm452, %v6640
        %6673 = vst.msk [vmem:[%s217 + $0xe8] sm:$0xff] %vm452, %v6641
        %6674 = vst.msk [vmem:[%s217 + $0xf0] sm:$0xff] %vm452, %v6642
        %6675 = vst.msk [vmem:[%s217 + $0xf8] sm:$0xff] %vm452, %v6643
        %s6676 = sand.u32 %s137, 1
        %s6677 = scalar_lea.sflag [#allocation4], %s6676
        %s6678 = sand.u32 %s137, 1
        %s6679 = smul.addr %s6678, 256
        %s6680 = scalar_lea.vmem [#allocation3], %s6679
        // Predicated region
        $region41: #{residual_block_forward.1} parent=39 // pred_check
          %p6681 = pneg %p147
        $region42: #{residual_block_forward.1} parent=39 // pred_check_branch
          %6683 = sbr.rel (%p6681) target = $region44
        $region43: #{residual_block_forward.1} parent=39 // pred_region
          %s6685 = ssub.s32 4096, 4096
          %6686 = vsyncadd %s6677, %s6685
          %s6687 = smul.addr %s19, 32
          %s6688 = smul.addr %s6687, 128
          %s6689 = scalar_lea.hbm %s5, %s6688
          %s6690 = sshll.u32 %s6680, 4
          %s6691 = int_to_ptr.vmem [resolvable:$true] %s6690
          %6696 = dma.vmem_to_hbm [thread:$0]  %s6691, 4096, %s6689, %s6677, 128, 128, 8
        $region44: #{residual_block_forward.1} parent=39 // pred_fallthru
          _
      $region40: #{residual_block_forward.1} parent=5 // pred_fallthru
        _
      %p6697 = scmp.le.s32.totalorder 2, %s14
      // Predicated region
      $region45: #{residual_block_forward.1} parent=5 // pred_check
        %p6698 = pneg %p6697
      $region46: #{residual_block_forward.1} parent=5 // pred_check_branch
        %6700 = sbr.rel (%p6698) target = $region48
      $region47: #{residual_block_forward.1} parent=5 // pred_region
        %s6701 = ssub.s32 %s14, 2
        // Predicated region
        $region49: #{residual_block_forward.1} parent=47 // pred_check
          %p6702 = pneg %p153
        $region50: #{residual_block_forward.1} parent=47 // pred_check_branch
          %6704 = sbr.rel (%p6702) target = $region52
        $region51: #{residual_block_forward.1} parent=47 // pred_region
          %s6705 = sand.u32 %s138, 1
          %s6706 = scalar_lea.sflag [#allocation4], %s6705
          %s6707 = sand.u32 %s138, 1
          %s6708 = smul.addr %s6707, 256
          %s6709 = scalar_lea.vmem [#allocation3], %s6708
          %6710 = dma.done %s6706, 4096
        $region52: #{residual_block_forward.1} parent=47 // pred_fallthru
          _
      $region48: #{residual_block_forward.1} parent=5 // pred_fallthru
        _
    $region6: #{residual_block_forward.1} parent=1 // loop_footer
      %s18 = sadd.s32 1, %s14
    $region7: #{residual_block_forward.1} parent=1 // loop_footer_branch
      %13 = sbr.rel target = $region3
    $region8: #{residual_block_forward.1} parent=1 // loop_exit
      _
    %6711 = vsyncpa [#allocation4], 1
    %s6712 = scalar_lea.sflag [#allocation4], 1
    %6713 = vsyncpa %s6712, 1

</llo_original>
